<compile_context>
chip_gen: v5e
topology: v5e:2x2
jax: 0.10.0
libtpu: 0.0.40
codegen_flags: <defaults>
</compile_context>

<pallas_src>
import jax
import jax.numpy as jnp
from jax.experimental import pallas as pl
from jax.experimental.pallas import tpu as pltpu

N_COMMON = 200
N_BRANCH = 6
MAX_TILE_B = 128   # batch tile cap (MXU M tile; safe for v7x 64 MiB VMEM too)


def _learner_kernel(x_ref, w1_ref, b1_ref, w23_ref, b23_ref, w4_ref, b4_ref,
                    out_ref):
    """All 6 branches, statically unrolled, for one batch tile.

    x_ref   : (TILE_B, n_t)            f32   shared input
    w1_ref  : (n_t, 6*200)             bf16  fused layer-1 weights (zero-scattered rows)
    b1_ref  : (1, 6*200)               f32   fused layer-1 bias
    w23_ref : (2, 6, 200, 200)         bf16  [0]=layer-2, [1]=layer-3 weights per branch
    b23_ref : (2, 6, 1, 200)           f32   matching biases
    w4_ref  : (6, 200)                 bf16  riesz head rows
    b4_ref  : (6, 1)                   f32   riesz head biases
    out_ref : (TILE_B, 6)              f32
    """
    xb = x_ref[...].astype(jnp.bfloat16)                                # (B, n_t)

    # Fused layer-1 across all branches: one wide MXU pass.
    h1 = jnp.dot(xb, w1_ref[...], preferred_element_type=jnp.float32)   # (B, 6*200)
    h1 = jnp.maximum(h1 + b1_ref[...], 0.0)

    heads = []
    for j in range(N_BRANCH):                                           # static unroll
        h = h1[:, j * N_COMMON:(j + 1) * N_COMMON].astype(jnp.bfloat16)
        h = jnp.dot(h, w23_ref[0, j], preferred_element_type=jnp.float32)
        h = jnp.maximum(h + b23_ref[0, j], 0.0).astype(jnp.bfloat16)
        h = jnp.dot(h, w23_ref[1, j], preferred_element_type=jnp.float32)
        h = jnp.maximum(h + b23_ref[1, j], 0.0)
        # 200 -> 1 head: VPU multiply + XLU lane reduction (keeps MXU free).
        r = jnp.sum(h * w4_ref[j].astype(jnp.float32),
                    axis=-1, keepdims=True) + b4_ref[j]                 # (B, 1)
        heads.append(r)

    out_ref[...] = jnp.concatenate(heads, axis=1)                       # (B, 6)


def learner_forward(x, params, max_tile_b=MAX_TILE_B):
    """x: (B, n_t) f32; params: packed weights (bf16) / biases (f32)."""
    W1a, B1a, W23, B23, W4, B4 = params
    batch, n_t = x.shape

    # Batch tile: multiple of 8, capped; pad the batch so the tile divides it.
    tile_b = min(max_tile_b, ((batch + 7) // 8) * 8)
    tile_b = max(8, (tile_b // 8) * 8)
    b_pad = ((batch + tile_b - 1) // tile_b) * tile_b
    if b_pad != batch:
        x = jnp.pad(x, ((0, b_pad - batch), (0, 0)))   # zero rows: finite, safe
    n_tiles = b_pad // tile_b

    const2 = lambda i: (0, 0)
    const4 = lambda i: (0, 0, 0, 0)

    out = pl.pallas_call(
        _learner_kernel,
        out_shape=jax.ShapeDtypeStruct((b_pad, N_BRANCH), jnp.float32),
        grid_spec=pltpu.PrefetchScalarGridSpec(
            num_scalar_prefetch=0,
            grid=(n_tiles,),
            in_specs=[
                pl.BlockSpec((tile_b, n_t), lambda i: (i, 0)),              # x tile
                pl.BlockSpec((n_t, N_BRANCH * N_COMMON), const2),           # W1 fused
                pl.BlockSpec((1, N_BRANCH * N_COMMON), const2),             # b1 fused
                pl.BlockSpec((2, N_BRANCH, N_COMMON, N_COMMON), const4),    # W2|W3
                pl.BlockSpec((2, N_BRANCH, 1, N_COMMON), const4),           # b2|b3
                pl.BlockSpec((N_BRANCH, N_COMMON), const2),                 # W4 rows
                pl.BlockSpec((N_BRANCH, 1), const2),                        # b4
            ],
            out_specs=pl.BlockSpec((tile_b, N_BRANCH), lambda i: (i, 0)),
        ),
        compiler_params=pltpu.CompilerParams(
            dimension_semantics=("parallel",)),
    )(x, W1a, B1a, W23, B23, W4, B4)

    return out[:batch]


def _init_linear(key, fan_in, fan_out):
    """Deterministic PyTorch-style Linear init: U(-1/sqrt(fan_in), 1/sqrt(fan_in))."""
    kw, kb = jax.random.split(key)
    bound = 1.0 / jnp.sqrt(float(fan_in))
    w = jax.random.uniform(kw, (fan_in, fan_out), jnp.float32, -bound, bound)
    b = jax.random.uniform(kb, (fan_out,), jnp.float32, -bound, bound)
    return w, b


def build_params(key, n_t):
    """Packed params.

    Layer-1 weights are scattered into full (n_t, 200) matrices whose row order
    matches x's original columns (unused rows zero) and concatenated across the 6
    branches, so the shared x feeds one fused dot -- identical to the module's
    column-gather + per-branch matmul (assuming finite inputs).
    """
    branch_cols = [
        [0] + list(range(5, n_t)),            # common1 (x1)
        [0] + list(range(5, n_t)),            # common2 (x1)
        [0, 1, 2] + list(range(5, n_t)),      # common3 (x2)
        [0, 1, 2] + list(range(5, n_t)),      # common4 (x2)
        [0, 3, 4] + list(range(5, n_t)),      # common5 (x3)
        list(range(n_t)),                     # common6 (x)
    ]
    W1, B1, W2, B2, W3, B3, W4, B4 = [], [], [], [], [], [], [], []
    keys = jax.random.split(key, N_BRANCH)
    for br in range(N_BRANCH):
        k1, k2, k3, k4 = jax.random.split(keys[br], 4)
        cols = jnp.array(branch_cols[br], dtype=jnp.int32)
        w1, b1 = _init_linear(k1, len(branch_cols[br]), N_COMMON)
        w1_full = jnp.zeros((n_t, N_COMMON), jnp.float32).at[cols].set(w1)
        w2, b2 = _init_linear(k2, N_COMMON, N_COMMON)
        w3, b3 = _init_linear(k3, N_COMMON, N_COMMON)
        w4, b4 = _init_linear(k4, N_COMMON, 1)
        W1.append(w1_full); B1.append(b1)
        W2.append(w2);      B2.append(b2[None, :])
        W3.append(w3);      B3.append(b3[None, :])
        W4.append(w4[:, 0]); B4.append(b4)

    W1a = jnp.concatenate(W1, axis=1).astype(jnp.bfloat16)          # (n_t, 1200)
    B1a = jnp.concatenate(B1, axis=0)[None, :]                      # (1, 1200)
    W23 = jnp.stack([jnp.stack(W2, 0), jnp.stack(W3, 0)], 0).astype(jnp.bfloat16)
    B23 = jnp.stack([jnp.stack(B2, 0), jnp.stack(B3, 0)], 0)        # (2, 6, 1, 200)
    W4s = jnp.stack(W4, 0).astype(jnp.bfloat16)                     # (6, 200)
    B4s = jnp.stack(B4, 0)                                          # (6, 1)
    return (W1a, B1a, W23, B23, W4s, B4s)


def reference_forward(x, params):
    """Pure-JAX reference computing the same bf16-weight math for correctness."""
    W1a, B1a, W23, B23, W4, B4 = params
    xb = x.astype(jnp.bfloat16)
    outs = []
    for br in range(N_BRANCH):
        w1 = W1a[:, br * N_COMMON:(br + 1) * N_COMMON]
        b1 = B1a[:, br * N_COMMON:(br + 1) * N_COMMON]
        h = jnp.dot(xb, w1, preferred_element_type=jnp.float32) + b1
        h = jnp.maximum(h, 0.0)
        h = jnp.dot(h.astype(jnp.bfloat16), W23[0, br],
                    preferred_element_type=jnp.float32) + B23[0, br]
        h = jnp.maximum(h, 0.0)
        h = jnp.dot(h.astype(jnp.bfloat16), W23[1, br],
                    preferred_element_type=jnp.float32) + B23[1, br]
        h = jnp.maximum(h, 0.0)
        r = jnp.sum(h * W4[br].astype(jnp.float32), axis=-1, keepdims=True) + B4[br]
        outs.append(r)
    return jnp.concatenate(outs, axis=1)


if __name__ == "__main__":
    key = jax.random.PRNGKey(0)
    k_x, k_p = jax.random.split(key)

    BATCH, N_T = 8, 13          # n_t must be > 5 for the module's column slicing
    x = jax.random.normal(k_x, (BATCH, N_T), jnp.float32)
    params = build_params(k_p, N_T)

    out = jax.block_until_ready(learner_forward(x, params))
    ref = jax.block_until_ready(reference_forward(x, params))

    assert out.shape == (BATCH, N_BRANCH)
    assert jnp.allclose(out, ref, atol=1e-3, rtol=1e-3), (out, ref)

    print("KERNEL_OK")
</pallas_src>

<mosaic_0001>
module attributes {stable_mosaic.version = 11 : i64} {
  func.func @_learner_kernel(%arg0: i32, %arg1: memref<8x13xf32, #tpu.memory_space<vmem>>, %arg2: memref<13x1200xbf16, #tpu.memory_space<vmem>>, %arg3: memref<1x1200xf32, #tpu.memory_space<vmem>>, %arg4: memref<2x6x200x200xbf16, #tpu.memory_space<vmem>>, %arg5: memref<2x6x1x200xf32, #tpu.memory_space<vmem>>, %arg6: memref<6x200xbf16, #tpu.memory_space<vmem>>, %arg7: memref<6x1xf32, #tpu.memory_space<vmem>>, %arg8: memref<8x6xf32, #tpu.memory_space<vmem>>) attributes {dimension_semantics = [#tpu.dimension_semantics<parallel>], iteration_bounds = array<i64: 1>, scalar_prefetch = 0 : i64, scratch_operands = 0 : i64, tpu.core_type = #tpu.core_type<tc>, window_params = [{transform_indices = @transform_0, window_bounds = array<i64: 8, 13>}, {pipeline_mode = #tpu.pipeline_mode<synchronous>, transform_indices = @transform_1, window_bounds = array<i64: 13, 1200>}, {pipeline_mode = #tpu.pipeline_mode<synchronous>, transform_indices = @transform_2, window_bounds = array<i64: 1, 1200>}, {pipeline_mode = #tpu.pipeline_mode<synchronous>, transform_indices = @transform_3, window_bounds = array<i64: 2, 6, 200, 200>}, {pipeline_mode = #tpu.pipeline_mode<synchronous>, transform_indices = @transform_4, window_bounds = array<i64: 2, 6, 1, 200>}, {pipeline_mode = #tpu.pipeline_mode<synchronous>, transform_indices = @transform_5, window_bounds = array<i64: 6, 200>}, {pipeline_mode = #tpu.pipeline_mode<synchronous>, transform_indices = @transform_6, window_bounds = array<i64: 6, 1>}, {transform_indices = @transform_7, window_bounds = array<i64: 8, 6>}]} {
    %c0 = arith.constant 0 : index
    %c0_0 = arith.constant 0 : index
    %0 = vector.load %arg1[%c0, %c0_0] : memref<8x13xf32, #tpu.memory_space<vmem>>, vector<8x13xf32>
    %1 = arith.truncf %0 : vector<8x13xf32> to vector<8x13xbf16>
    %c0_1 = arith.constant 0 : index
    %c0_2 = arith.constant 0 : index
    %2 = vector.load %arg2[%c0_1, %c0_2] : memref<13x1200xbf16, #tpu.memory_space<vmem>>, vector<13x1200xbf16>
    %cst = arith.constant dense<0.000000e+00> : vector<8x1200xf32>
    %3 = tpu.matmul %1, %2, %cst {dimension_numbers = #tpu.dot_dimension_numbers<[1], [0], [0], [1], [0, 0, 1, 1], [], []>} : vector<8x13xbf16>, vector<13x1200xbf16>, vector<8x1200xf32> -> vector<8x1200xf32>
    %c0_3 = arith.constant 0 : index
    %c0_4 = arith.constant 0 : index
    %4 = vector.load %arg3[%c0_3, %c0_4] : memref<1x1200xf32, #tpu.memory_space<vmem>>, vector<1x1200xf32>
    %5 = vector.broadcast %4 : vector<1x1200xf32> to vector<8x1200xf32>
    %6 = arith.addf %3, %5 : vector<8x1200xf32>
    %cst_5 = arith.constant 0.000000e+00 : f32
    %7 = vector.broadcast %cst_5 : f32 to vector<8x1200xf32>
    %8 = arith.maximumf %6, %7 : vector<8x1200xf32>
    %9 = vector.extract_strided_slice %8 {offsets = [0, 0], sizes = [8, 200], strides = [1, 1]} : vector<8x1200xf32> to vector<8x200xf32>
    %10 = arith.truncf %9 : vector<8x200xf32> to vector<8x200xbf16>
    %c0_6 = arith.constant 0 : index
    %c0_7 = arith.constant 0 : index
    %c0_8 = arith.constant 0 : index
    %c0_9 = arith.constant 0 : index
    %11 = vector.load %arg4[%c0_6, %c0_7, %c0_8, %c0_9] : memref<2x6x200x200xbf16, #tpu.memory_space<vmem>>, vector<1x1x200x200xbf16>
    %12 = vector.shape_cast %11 : vector<1x1x200x200xbf16> to vector<200x200xbf16>
    %cst_10 = arith.constant dense<0.000000e+00> : vector<8x200xf32>
    %13 = tpu.matmul %10, %12, %cst_10 {dimension_numbers = #tpu.dot_dimension_numbers<[1], [0], [0], [1], [0, 0, 1, 1], [], []>} : vector<8x200xbf16>, vector<200x200xbf16>, vector<8x200xf32> -> vector<8x200xf32>
    %c0_11 = arith.constant 0 : index
    %c0_12 = arith.constant 0 : index
    %c0_13 = arith.constant 0 : index
    %c0_14 = arith.constant 0 : index
    %14 = vector.load %arg5[%c0_11, %c0_12, %c0_13, %c0_14] : memref<2x6x1x200xf32, #tpu.memory_space<vmem>>, vector<1x1x1x200xf32>
    %15 = vector.shape_cast %14 : vector<1x1x1x200xf32> to vector<1x200xf32>
    %16 = vector.broadcast %15 : vector<1x200xf32> to vector<8x200xf32>
    %17 = arith.addf %13, %16 : vector<8x200xf32>
    %cst_15 = arith.constant 0.000000e+00 : f32
    %18 = vector.broadcast %cst_15 : f32 to vector<8x200xf32>
    %19 = arith.maximumf %17, %18 : vector<8x200xf32>
    %20 = arith.truncf %19 : vector<8x200xf32> to vector<8x200xbf16>
    %c1 = arith.constant 1 : index
    %c0_16 = arith.constant 0 : index
    %c0_17 = arith.constant 0 : index
    %c0_18 = arith.constant 0 : index
    %21 = vector.load %arg4[%c1, %c0_16, %c0_17, %c0_18] : memref<2x6x200x200xbf16, #tpu.memory_space<vmem>>, vector<1x1x200x200xbf16>
    %22 = vector.shape_cast %21 : vector<1x1x200x200xbf16> to vector<200x200xbf16>
    %cst_19 = arith.constant dense<0.000000e+00> : vector<8x200xf32>
    %23 = tpu.matmul %20, %22, %cst_19 {dimension_numbers = #tpu.dot_dimension_numbers<[1], [0], [0], [1], [0, 0, 1, 1], [], []>} : vector<8x200xbf16>, vector<200x200xbf16>, vector<8x200xf32> -> vector<8x200xf32>
    %c1_20 = arith.constant 1 : index
    %c0_21 = arith.constant 0 : index
    %c0_22 = arith.constant 0 : index
    %c0_23 = arith.constant 0 : index
    %24 = vector.load %arg5[%c1_20, %c0_21, %c0_22, %c0_23] : memref<2x6x1x200xf32, #tpu.memory_space<vmem>>, vector<1x1x1x200xf32>
    %25 = vector.shape_cast %24 : vector<1x1x1x200xf32> to vector<1x200xf32>
    %26 = vector.broadcast %25 : vector<1x200xf32> to vector<8x200xf32>
    %27 = arith.addf %23, %26 : vector<8x200xf32>
    %cst_24 = arith.constant 0.000000e+00 : f32
    %28 = vector.broadcast %cst_24 : f32 to vector<8x200xf32>
    %29 = arith.maximumf %27, %28 : vector<8x200xf32>
    %c0_25 = arith.constant 0 : index
    %c0_26 = arith.constant 0 : index
    %30 = vector.load %arg6[%c0_25, %c0_26] : memref<6x200xbf16, #tpu.memory_space<vmem>>, vector<1x200xbf16>
    %31 = vector.shape_cast %30 : vector<1x200xbf16> to vector<200xbf16>
    %32 = arith.extf %31 : vector<200xbf16> to vector<200xf32>
    %33 = vector.shape_cast %32 : vector<200xf32> to vector<1x200xf32>
    %34 = vector.broadcast %33 : vector<1x200xf32> to vector<8x200xf32>
    %35 = arith.mulf %29, %34 : vector<8x200xf32>
    %cst_27 = arith.constant dense<0.000000e+00> : vector<8xf32>
    %36 = vector.multi_reduction <add>, %35, %cst_27 [1] : vector<8x200xf32> to vector<8xf32>
    %37 = vector.shape_cast %36 : vector<8xf32> to vector<8x1xf32>
    %c0_28 = arith.constant 0 : index
    %c0_29 = arith.constant 0 : index
    %38 = vector.load %arg7[%c0_28, %c0_29] : memref<6x1xf32, #tpu.memory_space<vmem>>, vector<1x1xf32>
    %39 = vector.shape_cast %38 : vector<1x1xf32> to vector<1xf32>
    %40 = vector.shape_cast %39 : vector<1xf32> to vector<1x1xf32>
    %41 = vector.broadcast %40 : vector<1x1xf32> to vector<8x1xf32>
    %42 = arith.addf %37, %41 : vector<8x1xf32>
    %43 = vector.extract_strided_slice %8 {offsets = [0, 200], sizes = [8, 200], strides = [1, 1]} : vector<8x1200xf32> to vector<8x200xf32>
    %44 = arith.truncf %43 : vector<8x200xf32> to vector<8x200xbf16>
    %c0_30 = arith.constant 0 : index
    %c1_31 = arith.constant 1 : index
    %c0_32 = arith.constant 0 : index
    %c0_33 = arith.constant 0 : index
    %45 = vector.load %arg4[%c0_30, %c1_31, %c0_32, %c0_33] : memref<2x6x200x200xbf16, #tpu.memory_space<vmem>>, vector<1x1x200x200xbf16>
    %46 = vector.shape_cast %45 : vector<1x1x200x200xbf16> to vector<200x200xbf16>
    %cst_34 = arith.constant dense<0.000000e+00> : vector<8x200xf32>
    %47 = tpu.matmul %44, %46, %cst_34 {dimension_numbers = #tpu.dot_dimension_numbers<[1], [0], [0], [1], [0, 0, 1, 1], [], []>} : vector<8x200xbf16>, vector<200x200xbf16>, vector<8x200xf32> -> vector<8x200xf32>
    %c0_35 = arith.constant 0 : index
    %c1_36 = arith.constant 1 : index
    %c0_37 = arith.constant 0 : index
    %c0_38 = arith.constant 0 : index
    %48 = vector.load %arg5[%c0_35, %c1_36, %c0_37, %c0_38] : memref<2x6x1x200xf32, #tpu.memory_space<vmem>>, vector<1x1x1x200xf32>
    %49 = vector.shape_cast %48 : vector<1x1x1x200xf32> to vector<1x200xf32>
    %50 = vector.broadcast %49 : vector<1x200xf32> to vector<8x200xf32>
    %51 = arith.addf %47, %50 : vector<8x200xf32>
    %cst_39 = arith.constant 0.000000e+00 : f32
    %52 = vector.broadcast %cst_39 : f32 to vector<8x200xf32>
    %53 = arith.maximumf %51, %52 : vector<8x200xf32>
    %54 = arith.truncf %53 : vector<8x200xf32> to vector<8x200xbf16>
    %c1_40 = arith.constant 1 : index
    %c1_41 = arith.constant 1 : index
    %c0_42 = arith.constant 0 : index
    %c0_43 = arith.constant 0 : index
    %55 = vector.load %arg4[%c1_40, %c1_41, %c0_42, %c0_43] : memref<2x6x200x200xbf16, #tpu.memory_space<vmem>>, vector<1x1x200x200xbf16>
    %56 = vector.shape_cast %55 : vector<1x1x200x200xbf16> to vector<200x200xbf16>
    %cst_44 = arith.constant dense<0.000000e+00> : vector<8x200xf32>
    %57 = tpu.matmul %54, %56, %cst_44 {dimension_numbers = #tpu.dot_dimension_numbers<[1], [0], [0], [1], [0, 0, 1, 1], [], []>} : vector<8x200xbf16>, vector<200x200xbf16>, vector<8x200xf32> -> vector<8x200xf32>
    %c1_45 = arith.constant 1 : index
    %c1_46 = arith.constant 1 : index
    %c0_47 = arith.constant 0 : index
    %c0_48 = arith.constant 0 : index
    %58 = vector.load %arg5[%c1_45, %c1_46, %c0_47, %c0_48] : memref<2x6x1x200xf32, #tpu.memory_space<vmem>>, vector<1x1x1x200xf32>
    %59 = vector.shape_cast %58 : vector<1x1x1x200xf32> to vector<1x200xf32>
    %60 = vector.broadcast %59 : vector<1x200xf32> to vector<8x200xf32>
    %61 = arith.addf %57, %60 : vector<8x200xf32>
    %cst_49 = arith.constant 0.000000e+00 : f32
    %62 = vector.broadcast %cst_49 : f32 to vector<8x200xf32>
    %63 = arith.maximumf %61, %62 : vector<8x200xf32>
    %c1_50 = arith.constant 1 : index
    %c0_51 = arith.constant 0 : index
    %64 = vector.load %arg6[%c1_50, %c0_51] : memref<6x200xbf16, #tpu.memory_space<vmem>>, vector<1x200xbf16>
    %65 = vector.shape_cast %64 : vector<1x200xbf16> to vector<200xbf16>
    %66 = arith.extf %65 : vector<200xbf16> to vector<200xf32>
    %67 = vector.shape_cast %66 : vector<200xf32> to vector<1x200xf32>
    %68 = vector.broadcast %67 : vector<1x200xf32> to vector<8x200xf32>
    %69 = arith.mulf %63, %68 : vector<8x200xf32>
    %cst_52 = arith.constant dense<0.000000e+00> : vector<8xf32>
    %70 = vector.multi_reduction <add>, %69, %cst_52 [1] : vector<8x200xf32> to vector<8xf32>
    %71 = vector.shape_cast %70 : vector<8xf32> to vector<8x1xf32>
    %c1_53 = arith.constant 1 : index
    %c0_54 = arith.constant 0 : index
    %72 = vector.load %arg7[%c1_53, %c0_54] : memref<6x1xf32, #tpu.memory_space<vmem>>, vector<1x1xf32>
    %73 = vector.shape_cast %72 : vector<1x1xf32> to vector<1xf32>
    %74 = vector.shape_cast %73 : vector<1xf32> to vector<1x1xf32>
    %75 = vector.broadcast %74 : vector<1x1xf32> to vector<8x1xf32>
    %76 = arith.addf %71, %75 : vector<8x1xf32>
    %77 = vector.extract_strided_slice %8 {offsets = [0, 400], sizes = [8, 200], strides = [1, 1]} : vector<8x1200xf32> to vector<8x200xf32>
    %78 = arith.truncf %77 : vector<8x200xf32> to vector<8x200xbf16>
    %c0_55 = arith.constant 0 : index
    %c2 = arith.constant 2 : index
    %c0_56 = arith.constant 0 : index
    %c0_57 = arith.constant 0 : index
    %79 = vector.load %arg4[%c0_55, %c2, %c0_56, %c0_57] : memref<2x6x200x200xbf16, #tpu.memory_space<vmem>>, vector<1x1x200x200xbf16>
    %80 = vector.shape_cast %79 : vector<1x1x200x200xbf16> to vector<200x200xbf16>
    %cst_58 = arith.constant dense<0.000000e+00> : vector<8x200xf32>
    %81 = tpu.matmul %78, %80, %cst_58 {dimension_numbers = #tpu.dot_dimension_numbers<[1], [0], [0], [1], [0, 0, 1, 1], [], []>} : vector<8x200xbf16>, vector<200x200xbf16>, vector<8x200xf32> -> vector<8x200xf32>
    %c0_59 = arith.constant 0 : index
    %c2_60 = arith.constant 2 : index
    %c0_61 = arith.constant 0 : index
    %c0_62 = arith.constant 0 : index
    %82 = vector.load %arg5[%c0_59, %c2_60, %c0_61, %c0_62] : memref<2x6x1x200xf32, #tpu.memory_space<vmem>>, vector<1x1x1x200xf32>
    %83 = vector.shape_cast %82 : vector<1x1x1x200xf32> to vector<1x200xf32>
    %84 = vector.broadcast %83 : vector<1x200xf32> to vector<8x200xf32>
    %85 = arith.addf %81, %84 : vector<8x200xf32>
    %cst_63 = arith.constant 0.000000e+00 : f32
    %86 = vector.broadcast %cst_63 : f32 to vector<8x200xf32>
    %87 = arith.maximumf %85, %86 : vector<8x200xf32>
    %88 = arith.truncf %87 : vector<8x200xf32> to vector<8x200xbf16>
    %c1_64 = arith.constant 1 : index
    %c2_65 = arith.constant 2 : index
    %c0_66 = arith.constant 0 : index
    %c0_67 = arith.constant 0 : index
    %89 = vector.load %arg4[%c1_64, %c2_65, %c0_66, %c0_67] : memref<2x6x200x200xbf16, #tpu.memory_space<vmem>>, vector<1x1x200x200xbf16>
    %90 = vector.shape_cast %89 : vector<1x1x200x200xbf16> to vector<200x200xbf16>
    %cst_68 = arith.constant dense<0.000000e+00> : vector<8x200xf32>
    %91 = tpu.matmul %88, %90, %cst_68 {dimension_numbers = #tpu.dot_dimension_numbers<[1], [0], [0], [1], [0, 0, 1, 1], [], []>} : vector<8x200xbf16>, vector<200x200xbf16>, vector<8x200xf32> -> vector<8x200xf32>
    %c1_69 = arith.constant 1 : index
    %c2_70 = arith.constant 2 : index
    %c0_71 = arith.constant 0 : index
    %c0_72 = arith.constant 0 : index
    %92 = vector.load %arg5[%c1_69, %c2_70, %c0_71, %c0_72] : memref<2x6x1x200xf32, #tpu.memory_space<vmem>>, vector<1x1x1x200xf32>
    %93 = vector.shape_cast %92 : vector<1x1x1x200xf32> to vector<1x200xf32>
    %94 = vector.broadcast %93 : vector<1x200xf32> to vector<8x200xf32>
    %95 = arith.addf %91, %94 : vector<8x200xf32>
    %cst_73 = arith.constant 0.000000e+00 : f32
    %96 = vector.broadcast %cst_73 : f32 to vector<8x200xf32>
    %97 = arith.maximumf %95, %96 : vector<8x200xf32>
    %c2_74 = arith.constant 2 : index
    %c0_75 = arith.constant 0 : index
    %98 = vector.load %arg6[%c2_74, %c0_75] : memref<6x200xbf16, #tpu.memory_space<vmem>>, vector<1x200xbf16>
    %99 = vector.shape_cast %98 : vector<1x200xbf16> to vector<200xbf16>
    %100 = arith.extf %99 : vector<200xbf16> to vector<200xf32>
    %101 = vector.shape_cast %100 : vector<200xf32> to vector<1x200xf32>
    %102 = vector.broadcast %101 : vector<1x200xf32> to vector<8x200xf32>
    %103 = arith.mulf %97, %102 : vector<8x200xf32>
    %cst_76 = arith.constant dense<0.000000e+00> : vector<8xf32>
    %104 = vector.multi_reduction <add>, %103, %cst_76 [1] : vector<8x200xf32> to vector<8xf32>
    %105 = vector.shape_cast %104 : vector<8xf32> to vector<8x1xf32>
    %c2_77 = arith.constant 2 : index
    %c0_78 = arith.constant 0 : index
    %106 = vector.load %arg7[%c2_77, %c0_78] : memref<6x1xf32, #tpu.memory_space<vmem>>, vector<1x1xf32>
    %107 = vector.shape_cast %106 : vector<1x1xf32> to vector<1xf32>
    %108 = vector.shape_cast %107 : vector<1xf32> to vector<1x1xf32>
    %109 = vector.broadcast %108 : vector<1x1xf32> to vector<8x1xf32>
    %110 = arith.addf %105, %109 : vector<8x1xf32>
    %111 = vector.extract_strided_slice %8 {offsets = [0, 600], sizes = [8, 200], strides = [1, 1]} : vector<8x1200xf32> to vector<8x200xf32>
    %112 = arith.truncf %111 : vector<8x200xf32> to vector<8x200xbf16>
    %c0_79 = arith.constant 0 : index
    %c3 = arith.constant 3 : index
    %c0_80 = arith.constant 0 : index
    %c0_81 = arith.constant 0 : index
    %113 = vector.load %arg4[%c0_79, %c3, %c0_80, %c0_81] : memref<2x6x200x200xbf16, #tpu.memory_space<vmem>>, vector<1x1x200x200xbf16>
    %114 = vector.shape_cast %113 : vector<1x1x200x200xbf16> to vector<200x200xbf16>
    %cst_82 = arith.constant dense<0.000000e+00> : vector<8x200xf32>
    %115 = tpu.matmul %112, %114, %cst_82 {dimension_numbers = #tpu.dot_dimension_numbers<[1], [0], [0], [1], [0, 0, 1, 1], [], []>} : vector<8x200xbf16>, vector<200x200xbf16>, vector<8x200xf32> -> vector<8x200xf32>
    %c0_83 = arith.constant 0 : index
    %c3_84 = arith.constant 3 : index
    %c0_85 = arith.constant 0 : index
    %c0_86 = arith.constant 0 : index
    %116 = vector.load %arg5[%c0_83, %c3_84, %c0_85, %c0_86] : memref<2x6x1x200xf32, #tpu.memory_space<vmem>>, vector<1x1x1x200xf32>
    %117 = vector.shape_cast %116 : vector<1x1x1x200xf32> to vector<1x200xf32>
    %118 = vector.broadcast %117 : vector<1x200xf32> to vector<8x200xf32>
    %119 = arith.addf %115, %118 : vector<8x200xf32>
    %cst_87 = arith.constant 0.000000e+00 : f32
    %120 = vector.broadcast %cst_87 : f32 to vector<8x200xf32>
    %121 = arith.maximumf %119, %120 : vector<8x200xf32>
    %122 = arith.truncf %121 : vector<8x200xf32> to vector<8x200xbf16>
    %c1_88 = arith.constant 1 : index
    %c3_89 = arith.constant 3 : index
    %c0_90 = arith.constant 0 : index
    %c0_91 = arith.constant 0 : index
    %123 = vector.load %arg4[%c1_88, %c3_89, %c0_90, %c0_91] : memref<2x6x200x200xbf16, #tpu.memory_space<vmem>>, vector<1x1x200x200xbf16>
    %124 = vector.shape_cast %123 : vector<1x1x200x200xbf16> to vector<200x200xbf16>
    %cst_92 = arith.constant dense<0.000000e+00> : vector<8x200xf32>
    %125 = tpu.matmul %122, %124, %cst_92 {dimension_numbers = #tpu.dot_dimension_numbers<[1], [0], [0], [1], [0, 0, 1, 1], [], []>} : vector<8x200xbf16>, vector<200x200xbf16>, vector<8x200xf32> -> vector<8x200xf32>
    %c1_93 = arith.constant 1 : index
    %c3_94 = arith.constant 3 : index
    %c0_95 = arith.constant 0 : index
    %c0_96 = arith.constant 0 : index
    %126 = vector.load %arg5[%c1_93, %c3_94, %c0_95, %c0_96] : memref<2x6x1x200xf32, #tpu.memory_space<vmem>>, vector<1x1x1x200xf32>
    %127 = vector.shape_cast %126 : vector<1x1x1x200xf32> to vector<1x200xf32>
    %128 = vector.broadcast %127 : vector<1x200xf32> to vector<8x200xf32>
    %129 = arith.addf %125, %128 : vector<8x200xf32>
    %cst_97 = arith.constant 0.000000e+00 : f32
    %130 = vector.broadcast %cst_97 : f32 to vector<8x200xf32>
    %131 = arith.maximumf %129, %130 : vector<8x200xf32>
    %c3_98 = arith.constant 3 : index
    %c0_99 = arith.constant 0 : index
    %132 = vector.load %arg6[%c3_98, %c0_99] : memref<6x200xbf16, #tpu.memory_space<vmem>>, vector<1x200xbf16>
    %133 = vector.shape_cast %132 : vector<1x200xbf16> to vector<200xbf16>
    %134 = arith.extf %133 : vector<200xbf16> to vector<200xf32>
    %135 = vector.shape_cast %134 : vector<200xf32> to vector<1x200xf32>
    %136 = vector.broadcast %135 : vector<1x200xf32> to vector<8x200xf32>
    %137 = arith.mulf %131, %136 : vector<8x200xf32>
    %cst_100 = arith.constant dense<0.000000e+00> : vector<8xf32>
    %138 = vector.multi_reduction <add>, %137, %cst_100 [1] : vector<8x200xf32> to vector<8xf32>
    %139 = vector.shape_cast %138 : vector<8xf32> to vector<8x1xf32>
    %c3_101 = arith.constant 3 : index
    %c0_102 = arith.constant 0 : index
    %140 = vector.load %arg7[%c3_101, %c0_102] : memref<6x1xf32, #tpu.memory_space<vmem>>, vector<1x1xf32>
    %141 = vector.shape_cast %140 : vector<1x1xf32> to vector<1xf32>
    %142 = vector.shape_cast %141 : vector<1xf32> to vector<1x1xf32>
    %143 = vector.broadcast %142 : vector<1x1xf32> to vector<8x1xf32>
    %144 = arith.addf %139, %143 : vector<8x1xf32>
    %145 = vector.extract_strided_slice %8 {offsets = [0, 800], sizes = [8, 200], strides = [1, 1]} : vector<8x1200xf32> to vector<8x200xf32>
    %146 = arith.truncf %145 : vector<8x200xf32> to vector<8x200xbf16>
    %c0_103 = arith.constant 0 : index
    %c4 = arith.constant 4 : index
    %c0_104 = arith.constant 0 : index
    %c0_105 = arith.constant 0 : index
    %147 = vector.load %arg4[%c0_103, %c4, %c0_104, %c0_105] : memref<2x6x200x200xbf16, #tpu.memory_space<vmem>>, vector<1x1x200x200xbf16>
    %148 = vector.shape_cast %147 : vector<1x1x200x200xbf16> to vector<200x200xbf16>
    %cst_106 = arith.constant dense<0.000000e+00> : vector<8x200xf32>
    %149 = tpu.matmul %146, %148, %cst_106 {dimension_numbers = #tpu.dot_dimension_numbers<[1], [0], [0], [1], [0, 0, 1, 1], [], []>} : vector<8x200xbf16>, vector<200x200xbf16>, vector<8x200xf32> -> vector<8x200xf32>
    %c0_107 = arith.constant 0 : index
    %c4_108 = arith.constant 4 : index
    %c0_109 = arith.constant 0 : index
    %c0_110 = arith.constant 0 : index
    %150 = vector.load %arg5[%c0_107, %c4_108, %c0_109, %c0_110] : memref<2x6x1x200xf32, #tpu.memory_space<vmem>>, vector<1x1x1x200xf32>
    %151 = vector.shape_cast %150 : vector<1x1x1x200xf32> to vector<1x200xf32>
    %152 = vector.broadcast %151 : vector<1x200xf32> to vector<8x200xf32>
    %153 = arith.addf %149, %152 : vector<8x200xf32>
    %cst_111 = arith.constant 0.000000e+00 : f32
    %154 = vector.broadcast %cst_111 : f32 to vector<8x200xf32>
    %155 = arith.maximumf %153, %154 : vector<8x200xf32>
    %156 = arith.truncf %155 : vector<8x200xf32> to vector<8x200xbf16>
    %c1_112 = arith.constant 1 : index
    %c4_113 = arith.constant 4 : index
    %c0_114 = arith.constant 0 : index
    %c0_115 = arith.constant 0 : index
    %157 = vector.load %arg4[%c1_112, %c4_113, %c0_114, %c0_115] : memref<2x6x200x200xbf16, #tpu.memory_space<vmem>>, vector<1x1x200x200xbf16>
    %158 = vector.shape_cast %157 : vector<1x1x200x200xbf16> to vector<200x200xbf16>
    %cst_116 = arith.constant dense<0.000000e+00> : vector<8x200xf32>
    %159 = tpu.matmul %156, %158, %cst_116 {dimension_numbers = #tpu.dot_dimension_numbers<[1], [0], [0], [1], [0, 0, 1, 1], [], []>} : vector<8x200xbf16>, vector<200x200xbf16>, vector<8x200xf32> -> vector<8x200xf32>
    %c1_117 = arith.constant 1 : index
    %c4_118 = arith.constant 4 : index
    %c0_119 = arith.constant 0 : index
    %c0_120 = arith.constant 0 : index
    %160 = vector.load %arg5[%c1_117, %c4_118, %c0_119, %c0_120] : memref<2x6x1x200xf32, #tpu.memory_space<vmem>>, vector<1x1x1x200xf32>
    %161 = vector.shape_cast %160 : vector<1x1x1x200xf32> to vector<1x200xf32>
    %162 = vector.broadcast %161 : vector<1x200xf32> to vector<8x200xf32>
    %163 = arith.addf %159, %162 : vector<8x200xf32>
    %cst_121 = arith.constant 0.000000e+00 : f32
    %164 = vector.broadcast %cst_121 : f32 to vector<8x200xf32>
    %165 = arith.maximumf %163, %164 : vector<8x200xf32>
    %c4_122 = arith.constant 4 : index
    %c0_123 = arith.constant 0 : index
    %166 = vector.load %arg6[%c4_122, %c0_123] : memref<6x200xbf16, #tpu.memory_space<vmem>>, vector<1x200xbf16>
    %167 = vector.shape_cast %166 : vector<1x200xbf16> to vector<200xbf16>
    %168 = arith.extf %167 : vector<200xbf16> to vector<200xf32>
    %169 = vector.shape_cast %168 : vector<200xf32> to vector<1x200xf32>
    %170 = vector.broadcast %169 : vector<1x200xf32> to vector<8x200xf32>
    %171 = arith.mulf %165, %170 : vector<8x200xf32>
    %cst_124 = arith.constant dense<0.000000e+00> : vector<8xf32>
    %172 = vector.multi_reduction <add>, %171, %cst_124 [1] : vector<8x200xf32> to vector<8xf32>
    %173 = vector.shape_cast %172 : vector<8xf32> to vector<8x1xf32>
    %c4_125 = arith.constant 4 : index
    %c0_126 = arith.constant 0 : index
    %174 = vector.load %arg7[%c4_125, %c0_126] : memref<6x1xf32, #tpu.memory_space<vmem>>, vector<1x1xf32>
    %175 = vector.shape_cast %174 : vector<1x1xf32> to vector<1xf32>
    %176 = vector.shape_cast %175 : vector<1xf32> to vector<1x1xf32>
    %177 = vector.broadcast %176 : vector<1x1xf32> to vector<8x1xf32>
    %178 = arith.addf %173, %177 : vector<8x1xf32>
    %179 = vector.extract_strided_slice %8 {offsets = [0, 1000], sizes = [8, 200], strides = [1, 1]} : vector<8x1200xf32> to vector<8x200xf32>
    %180 = arith.truncf %179 : vector<8x200xf32> to vector<8x200xbf16>
    %c0_127 = arith.constant 0 : index
    %c5 = arith.constant 5 : index
    %c0_128 = arith.constant 0 : index
    %c0_129 = arith.constant 0 : index
    %181 = vector.load %arg4[%c0_127, %c5, %c0_128, %c0_129] : memref<2x6x200x200xbf16, #tpu.memory_space<vmem>>, vector<1x1x200x200xbf16>
    %182 = vector.shape_cast %181 : vector<1x1x200x200xbf16> to vector<200x200xbf16>
    %cst_130 = arith.constant dense<0.000000e+00> : vector<8x200xf32>
    %183 = tpu.matmul %180, %182, %cst_130 {dimension_numbers = #tpu.dot_dimension_numbers<[1], [0], [0], [1], [0, 0, 1, 1], [], []>} : vector<8x200xbf16>, vector<200x200xbf16>, vector<8x200xf32> -> vector<8x200xf32>
    %c0_131 = arith.constant 0 : index
    %c5_132 = arith.constant 5 : index
    %c0_133 = arith.constant 0 : index
    %c0_134 = arith.constant 0 : index
    %184 = vector.load %arg5[%c0_131, %c5_132, %c0_133, %c0_134] : memref<2x6x1x200xf32, #tpu.memory_space<vmem>>, vector<1x1x1x200xf32>
    %185 = vector.shape_cast %184 : vector<1x1x1x200xf32> to vector<1x200xf32>
    %186 = vector.broadcast %185 : vector<1x200xf32> to vector<8x200xf32>
    %187 = arith.addf %183, %186 : vector<8x200xf32>
    %cst_135 = arith.constant 0.000000e+00 : f32
    %188 = vector.broadcast %cst_135 : f32 to vector<8x200xf32>
    %189 = arith.maximumf %187, %188 : vector<8x200xf32>
    %190 = arith.truncf %189 : vector<8x200xf32> to vector<8x200xbf16>
    %c1_136 = arith.constant 1 : index
    %c5_137 = arith.constant 5 : index
    %c0_138 = arith.constant 0 : index
    %c0_139 = arith.constant 0 : index
    %191 = vector.load %arg4[%c1_136, %c5_137, %c0_138, %c0_139] : memref<2x6x200x200xbf16, #tpu.memory_space<vmem>>, vector<1x1x200x200xbf16>
    %192 = vector.shape_cast %191 : vector<1x1x200x200xbf16> to vector<200x200xbf16>
    %cst_140 = arith.constant dense<0.000000e+00> : vector<8x200xf32>
    %193 = tpu.matmul %190, %192, %cst_140 {dimension_numbers = #tpu.dot_dimension_numbers<[1], [0], [0], [1], [0, 0, 1, 1], [], []>} : vector<8x200xbf16>, vector<200x200xbf16>, vector<8x200xf32> -> vector<8x200xf32>
    %c1_141 = arith.constant 1 : index
    %c5_142 = arith.constant 5 : index
    %c0_143 = arith.constant 0 : index
    %c0_144 = arith.constant 0 : index
    %194 = vector.load %arg5[%c1_141, %c5_142, %c0_143, %c0_144] : memref<2x6x1x200xf32, #tpu.memory_space<vmem>>, vector<1x1x1x200xf32>
    %195 = vector.shape_cast %194 : vector<1x1x1x200xf32> to vector<1x200xf32>
    %196 = vector.broadcast %195 : vector<1x200xf32> to vector<8x200xf32>
    %197 = arith.addf %193, %196 : vector<8x200xf32>
    %cst_145 = arith.constant 0.000000e+00 : f32
    %198 = vector.broadcast %cst_145 : f32 to vector<8x200xf32>
    %199 = arith.maximumf %197, %198 : vector<8x200xf32>
    %c5_146 = arith.constant 5 : index
    %c0_147 = arith.constant 0 : index
    %200 = vector.load %arg6[%c5_146, %c0_147] : memref<6x200xbf16, #tpu.memory_space<vmem>>, vector<1x200xbf16>
    %201 = vector.shape_cast %200 : vector<1x200xbf16> to vector<200xbf16>
    %202 = arith.extf %201 : vector<200xbf16> to vector<200xf32>
    %203 = vector.shape_cast %202 : vector<200xf32> to vector<1x200xf32>
    %204 = vector.broadcast %203 : vector<1x200xf32> to vector<8x200xf32>
    %205 = arith.mulf %199, %204 : vector<8x200xf32>
    %cst_148 = arith.constant dense<0.000000e+00> : vector<8xf32>
    %206 = vector.multi_reduction <add>, %205, %cst_148 [1] : vector<8x200xf32> to vector<8xf32>
    %207 = vector.shape_cast %206 : vector<8xf32> to vector<8x1xf32>
    %c5_149 = arith.constant 5 : index
    %c0_150 = arith.constant 0 : index
    %208 = vector.load %arg7[%c5_149, %c0_150] : memref<6x1xf32, #tpu.memory_space<vmem>>, vector<1x1xf32>
    %209 = vector.shape_cast %208 : vector<1x1xf32> to vector<1xf32>
    %210 = vector.shape_cast %209 : vector<1xf32> to vector<1x1xf32>
    %211 = vector.broadcast %210 : vector<1x1xf32> to vector<8x1xf32>
    %212 = arith.addf %207, %211 : vector<8x1xf32>
    %213 = tpu.concatenate %42, %76, %110, %144, %178, %212 in 1 : vector<8x1xf32>, vector<8x1xf32>, vector<8x1xf32>, vector<8x1xf32>, vector<8x1xf32>, vector<8x1xf32> -> vector<8x6xf32>
    %c0_151 = arith.constant 0 : index
    %c0_152 = arith.constant 0 : index
    %214 = vector.load %arg8[%c0_151, %c0_152] : memref<8x6xf32, #tpu.memory_space<vmem>>, vector<8x6xf32>
    tpu.vector_store %arg8[%c0_151, %c0_152], %213 {strides = array<i32>} : memref<8x6xf32, #tpu.memory_space<vmem>>, vector<8x6xf32>,
    return
  }
  func.func @transform_0(%arg0: i32) -> (i32, i32) {
    %c0_i32 = arith.constant 0 : i32
    %c0_i32_0 = arith.constant 0 : i32
    return %arg0, %c0_i32 : i32, i32
  }
  func.func @transform_1(%arg0: i32) -> (i32, i32) {
    %c0_i32 = arith.constant 0 : i32
    %c0_i32_0 = arith.constant 0 : i32
    %c0_i32_1 = arith.constant 0 : i32
    return %c0_i32, %c0_i32_0 : i32, i32
  }
  func.func @transform_2(%arg0: i32) -> (i32, i32) {
    %c0_i32 = arith.constant 0 : i32
    %c0_i32_0 = arith.constant 0 : i32
    %c0_i32_1 = arith.constant 0 : i32
    return %c0_i32, %c0_i32_0 : i32, i32
  }
  func.func @transform_3(%arg0: i32) -> (i32, i32, i32, i32) {
    %c0_i32 = arith.constant 0 : i32
    %c0_i32_0 = arith.constant 0 : i32
    %c0_i32_1 = arith.constant 0 : i32
    %c0_i32_2 = arith.constant 0 : i32
    %c0_i32_3 = arith.constant 0 : i32
    return %c0_i32, %c0_i32_0, %c0_i32_1, %c0_i32_2 : i32, i32, i32, i32
  }
  func.func @transform_4(%arg0: i32) -> (i32, i32, i32, i32) {
    %c0_i32 = arith.constant 0 : i32
    %c0_i32_0 = arith.constant 0 : i32
    %c0_i32_1 = arith.constant 0 : i32
    %c0_i32_2 = arith.constant 0 : i32
    %c0_i32_3 = arith.constant 0 : i32
    return %c0_i32, %c0_i32_0, %c0_i32_1, %c0_i32_2 : i32, i32, i32, i32
  }
  func.func @transform_5(%arg0: i32) -> (i32, i32) {
    %c0_i32 = arith.constant 0 : i32
    %c0_i32_0 = arith.constant 0 : i32
    %c0_i32_1 = arith.constant 0 : i32
    return %c0_i32, %c0_i32_0 : i32, i32
  }
  func.func @transform_6(%arg0: i32) -> (i32, i32) {
    %c0_i32 = arith.constant 0 : i32
    %c0_i32_0 = arith.constant 0 : i32
    %c0_i32_1 = arith.constant 0 : i32
    return %c0_i32, %c0_i32_0 : i32, i32
  }
  func.func @transform_7(%arg0: i32) -> (i32, i32) {
    %c0_i32 = arith.constant 0 : i32
    %c0_i32_0 = arith.constant 0 : i32
    return %arg0, %c0_i32 : i32, i32
  }
}

</mosaic_0001>

<llo_original>
// kernel: tpu_custom_call.1
$region0: #{tpu_custom_call.1}
  #allocation0 [shape = 'u32[]', space=smem, size = 0x4, offset = 0x4, fixed_abs, tag = 'smem constant byte address 0x4 - core index']
  #allocation1 [shape = 'u32[72,128]{1,0:T(1,128)}', space=vmem, size = 0x9000, scoped, tag = 'internal scratch']
  %s0 = inlined_call_operand.hbm [shape: f32[8,13], index: 0, kind: input, shape index: {}]
  %s1 = inlined_call_operand.hbm [shape: bf16[13,1200], index: 1, kind: input, shape index: {}]
  %s2 = inlined_call_operand.hbm [shape: f32[1,1200], index: 2, kind: input, shape index: {}]
  %s3 = inlined_call_operand.hbm [shape: bf16[2,6,200,200], index: 3, kind: input, shape index: {}]
  %s4 = inlined_call_operand.hbm [shape: f32[2,6,1,200], index: 4, kind: input, shape index: {}]
  %s5 = inlined_call_operand.hbm [shape: bf16[6,200], index: 5, kind: input, shape index: {}]
  %s6 = inlined_call_operand.vmem [shape: f32[6,1], index: 6, kind: input, shape index: {}]
  %s7 = inlined_call_operand.hbm [shape: f32[8,6], index: 7, kind: output, shape index: {}]
  %s8 = sld [smem:[#allocation0]]
  $region62: #{tpu_custom_call.1} parent=0
    _
  %s10 = ssub.s32 1, %s8
  %s11 = scalar_select 0, %s10, %s8
  $region1: #{tpu_custom_call.1} parent=0
    #allocation2 [shape = 'u8[4096]{0}', space=vmem, size = 0x1000, scoped, tag = 'input window, operand 0, single buffered']
    #allocation3 [shape = 's32[1]{0}', space=sflag, size = 0x4, scoped, tag = 'scoped memory for tpu_custom_call.1']
    #allocation4 [shape = 's32[1]{0}', space=sflag, size = 0x4, scoped, tag = 'scoped memory for tpu_custom_call.1']
    #allocation5 [shape = 'u8[40960]{0}', space=vmem, size = 0xa000, scoped, tag = 'input window, operand 1, single buffered']
    #allocation6 [shape = 's32[1]{0}', space=sflag, size = 0x4, scoped, tag = 'scoped memory for tpu_custom_call.1']
    #allocation7 [shape = 'u8[5120]{0}', space=vmem, size = 0x1400, scoped, tag = 'input window, operand 2, single buffered']
    #allocation8 [shape = 'u8[1228800]{0}', space=vmem, size = 0x12c000, scoped, tag = 'input window, operand 3, single buffered']
    #allocation9 [shape = 's32[1]{0}', space=sflag, size = 0x4, scoped, tag = 'scoped memory for tpu_custom_call.1']
    #allocation10 [shape = 'u8[12288]{0}', space=vmem, size = 0x3000, scoped, tag = 'input window, operand 4, single buffered']
    #allocation11 [shape = 'u8[4096]{0}', space=vmem, size = 0x1000, scoped, tag = 'input window, operand 5, single buffered']
    #allocation12 [shape = 's32[1]{0}', space=sflag, size = 0x4, scoped, tag = 'scoped memory for tpu_custom_call.1']
    #allocation13 [shape = 'u8[4096]{0}', space=vmem, size = 0x1000, scoped, tag = 'output window, operand 0, single buffered']
    %12 = vsyncpa [#allocation3], 0
    %13 = vsyncpa [#allocation6], 0
    %14 = vsyncpa [#allocation9], 0
    %15 = vsyncpa [#allocation12], 0
    %16 = vsyncpa [#allocation4], 0
    // Predicated region
    $region2: #{tpu_custom_call.1} parent=1 // pred_check
      _
    $region3: #{tpu_custom_call.1} parent=1 // pred_check_branch
      %18 = sbr.rel (0) target = $region5
    $region4: #{tpu_custom_call.1} parent=1 // pred_region
      %20 = vsyncadd [#allocation3], 0
      %s22 = sshll.u32 %s0, 4
      %s23 = int_to_ptr.hbm [resolvable:$true] %s22
      %s24 = sshll.u32 [#allocation2], 4
      %s25 = int_to_ptr.vmem [resolvable:$true] %s24
      %27 = dma.hbm_to_vmem [thread:$0]  %s23, 128, %s25, [#allocation3]
    $region5: #{tpu_custom_call.1} parent=1 // pred_fallthru
      _
    // Predicated region
    $region6: #{tpu_custom_call.1} parent=1 // pred_check
      _
    $region7: #{tpu_custom_call.1} parent=1 // pred_check_branch
      %29 = sbr.rel (0) target = $region9
    $region8: #{tpu_custom_call.1} parent=1 // pred_region
      %31 = vsyncadd [#allocation6], 0
      %s32 = sshll.u32 %s1, 4
      %s33 = int_to_ptr.hbm [resolvable:$true] %s32
      %s34 = sshll.u32 [#allocation5], 4
      %s35 = int_to_ptr.vmem [resolvable:$true] %s34
      %40 = dma.hbm_to_vmem [thread:$0]  %s33, 1280, %s35, [#allocation6], 640, 640, 40
    $region9: #{tpu_custom_call.1} parent=1 // pred_fallthru
      _
    // Predicated region
    $region10: #{tpu_custom_call.1} parent=1 // pred_check
      _
    $region11: #{tpu_custom_call.1} parent=1 // pred_check_branch
      %42 = sbr.rel (0) target = $region13
    $region12: #{tpu_custom_call.1} parent=1 // pred_region
      %44 = vsyncadd [#allocation6], 0
      %s46 = sshll.u32 %s2, 4
      %s47 = int_to_ptr.hbm [resolvable:$true] %s46
      %s48 = sshll.u32 [#allocation7], 4
      %s49 = int_to_ptr.vmem [resolvable:$true] %s48
      %51 = dma.hbm_to_vmem [thread:$0]  %s47, 160, %s49, [#allocation6]
    $region13: #{tpu_custom_call.1} parent=1 // pred_fallthru
      _
    // Predicated region
    $region14: #{tpu_custom_call.1} parent=1 // pred_check
      _
    $region15: #{tpu_custom_call.1} parent=1 // pred_check_branch
      %53 = sbr.rel (0) target = $region17
    $region16: #{tpu_custom_call.1} parent=1 // pred_region
      %55 = vsyncadd [#allocation9], 0
      %s56 = sshll.u32 %s3, 4
      %s57 = int_to_ptr.hbm [resolvable:$true] %s56
      %s58 = sshll.u32 [#allocation8], 4
      %s59 = int_to_ptr.vmem [resolvable:$true] %s58
      %64 = dma.hbm_to_vmem [thread:$0]  %s57, 38400, %s59, [#allocation9], 128, 128, 8
    $region17: #{tpu_custom_call.1} parent=1 // pred_fallthru
      _
    // Predicated region
    $region18: #{tpu_custom_call.1} parent=1 // pred_check
      _
    $region19: #{tpu_custom_call.1} parent=1 // pred_check_branch
      %66 = sbr.rel (0) target = $region21
    $region20: #{tpu_custom_call.1} parent=1 // pred_region
      %68 = vsyncadd [#allocation9], 0
      %s69 = sshll.u32 %s4, 4
      %s70 = int_to_ptr.hbm [resolvable:$true] %s69
      %s71 = sshll.u32 [#allocation10], 4
      %s72 = int_to_ptr.vmem [resolvable:$true] %s71
      %77 = dma.hbm_to_vmem [thread:$0]  %s70, 384, %s72, [#allocation9], 32, 32, 2
    $region21: #{tpu_custom_call.1} parent=1 // pred_fallthru
      _
    // Predicated region
    $region22: #{tpu_custom_call.1} parent=1 // pred_check
      _
    $region23: #{tpu_custom_call.1} parent=1 // pred_check_branch
      %79 = sbr.rel (0) target = $region25
    $region24: #{tpu_custom_call.1} parent=1 // pred_region
      %81 = vsyncadd [#allocation12], 0
      %s83 = sshll.u32 %s5, 4
      %s84 = int_to_ptr.hbm [resolvable:$true] %s83
      %s85 = sshll.u32 [#allocation11], 4
      %s86 = int_to_ptr.vmem [resolvable:$true] %s85
      %88 = dma.hbm_to_vmem [thread:$0]  %s84, 128, %s86, [#allocation12]
    $region25: #{tpu_custom_call.1} parent=1 // pred_fallthru
      _
    // Predicated region
    $region26: #{tpu_custom_call.1} parent=1 // pred_check
      _
    $region27: #{tpu_custom_call.1} parent=1 // pred_check_branch
      %90 = sbr.rel (0) target = $region29
    $region28: #{tpu_custom_call.1} parent=1 // pred_region
      _
    $region29: #{tpu_custom_call.1} parent=1 // pred_fallthru
      _
    // Predicated region
    $region30: #{tpu_custom_call.1} parent=1 // pred_check
      _
    $region31: #{tpu_custom_call.1} parent=1 // pred_check_branch
      %92 = sbr.rel (0) target = $region33
    $region32: #{tpu_custom_call.1} parent=1 // pred_region
      %94 = dma.done [#allocation3], 128
    $region33: #{tpu_custom_call.1} parent=1 // pred_fallthru
      _
    // Predicated region
    $region34: #{tpu_custom_call.1} parent=1 // pred_check
      _
    $region35: #{tpu_custom_call.1} parent=1 // pred_check_branch
      %96 = sbr.rel (0) target = $region37
    $region36: #{tpu_custom_call.1} parent=1 // pred_region
      %98 = dma.done [#allocation6], 1280
    $region37: #{tpu_custom_call.1} parent=1 // pred_fallthru
      _
    // Predicated region
    $region38: #{tpu_custom_call.1} parent=1 // pred_check
      _
    $region39: #{tpu_custom_call.1} parent=1 // pred_check_branch
      %100 = sbr.rel (0) target = $region41
    $region40: #{tpu_custom_call.1} parent=1 // pred_region
      %102 = dma.done [#allocation6], 160
    $region41: #{tpu_custom_call.1} parent=1 // pred_fallthru
      _
    // Predicated region
    $region42: #{tpu_custom_call.1} parent=1 // pred_check
      _
    $region43: #{tpu_custom_call.1} parent=1 // pred_check_branch
      %104 = sbr.rel (0) target = $region45
    $region44: #{tpu_custom_call.1} parent=1 // pred_region
      %106 = dma.done [#allocation9], 38400
    $region45: #{tpu_custom_call.1} parent=1 // pred_fallthru
      _
    // Predicated region
    $region46: #{tpu_custom_call.1} parent=1 // pred_check
      _
    $region47: #{tpu_custom_call.1} parent=1 // pred_check_branch
      %108 = sbr.rel (0) target = $region49
    $region48: #{tpu_custom_call.1} parent=1 // pred_region
      %110 = dma.done [#allocation9], 384
    $region49: #{tpu_custom_call.1} parent=1 // pred_fallthru
      _
    // Predicated region
    $region50: #{tpu_custom_call.1} parent=1 // pred_check
      _
    $region51: #{tpu_custom_call.1} parent=1 // pred_check_branch
      %112 = sbr.rel (0) target = $region53
    $region52: #{tpu_custom_call.1} parent=1 // pred_region
      %114 = dma.done [#allocation12], 128
    $region53: #{tpu_custom_call.1} parent=1 // pred_fallthru
      _
    %v116 = vld [vmem:[#allocation2] sm:$0xff]
    %v117 = vpack.c.bf16 %v116, %v116
    %v118 = vld [vmem:[#allocation5] sm:$0xff]
    %v119 = vld [vmem:[#allocation5 + $0x8] sm:$0xff]
    %v120 = vld [vmem:[#allocation5 + $0x10] sm:$0xff]
    %v121 = vld [vmem:[#allocation5 + $0x18] sm:$0xff]
    %v122 = vld [vmem:[#allocation5 + $0x20] sm:$0xff]
    %v123 = vld [vmem:[#allocation5 + $0x28] sm:$0x77]
    %v124 = vld [vmem:[#allocation5 + $0x30] sm:$0x77]
    %v125 = vld [vmem:[#allocation5 + $0x38] sm:$0x77]
    %v126 = vld [vmem:[#allocation5 + $0x40] sm:$0x77]
    %v127 = vld [vmem:[#allocation5 + $0x48] sm:$0x77]
    %v128 = vld [vmem:[#allocation7] sm:$0xff]
    %v129 = vld [vmem:[#allocation7 + $0x8] sm:$0x3]
    %v132 = vperm.slane %v128, 0
    %v133 = vperm.slane %v128, 1
    %v134 = vperm.slane %v128, 2
    %v135 = vperm.slane %v128, 3
    %v136 = vperm.slane %v128, 4
    %v137 = vperm.slane %v128, 5
    %v138 = vperm.slane %v128, 6
    %v139 = vperm.slane %v128, 7
    %v140 = vperm.slane %v129, 0
    %v141 = vperm.slane %v129, 1
    %v162 = vunpack.c.l.b16 %v118
    %v163 = vunpack.c.h.b16 %v118
    %v164 = vunpack.c.l.b16 %v119
    %v165 = vunpack.c.h.b16 %v119
    %v166 = vunpack.c.l.b16 %v120
    %v167 = vunpack.c.h.b16 %v120
    %v168 = vunpack.c.l.b16 %v121
    %v169 = vunpack.c.h.b16 %v121
    %v170 = vunpack.c.l.b16 %v122
    %v171 = vunpack.c.h.b16 %v122
    %v172 = vunpack.c.l.b16 %v123
    %v173 = vunpack.c.h.b16 %v123
    %v174 = vunpack.c.l.b16 %v124
    %v175 = vunpack.c.h.b16 %v124
    %v176 = vunpack.c.l.b16 %v125
    %v177 = vunpack.c.h.b16 %v125
    %v178 = vunpack.c.l.b16 %v126
    %v179 = vunpack.c.h.b16 %v126
    %v180 = vunpack.c.l.b16 %v127
    %v181 = vunpack.c.h.b16 %v127
    %v182 = vpack.c.b16 %v172, %v162
    %v183 = vpack.c.b16 %v173, %v163
    %v184 = vpack.c.b16 %v174, %v164
    %v185 = vpack.c.b16 %v175, %v165
    %v186 = vpack.c.b16 %v176, %v166
    %v187 = vpack.c.b16 %v177, %v167
    %v188 = vpack.c.b16 %v178, %v168
    %v189 = vpack.c.b16 %v179, %v169
    %v190 = vpack.c.b16 %v180, %v170
    %v191 = vpack.c.b16 %v181, %v171
    %vm192 = vcmask 105472
    %v194 = vsel %vm192, %v117, 0
    %vm196 = vcmask 1045504
    %vm197 = vcmask 1046528
    %v198 = vsel %vm196, 4294967295, 65535
    %v199 = vsel %vm197, %v198, 0
    %v201 = vand.u32 %v182, %v199
    %v204 = vand.u32 %v183, %v199
    %v207 = vand.u32 %v184, %v199
    %v210 = vand.u32 %v185, %v199
    %v213 = vand.u32 %v186, %v199
    %v216 = vand.u32 %v187, %v199
    %v219 = vand.u32 %v188, %v199
    %v222 = vand.u32 %v189, %v199
    %v225 = vand.u32 %v190, %v199
    %v228 = vand.u32 %v191, %v199
    %230 = vmatpush.bf16.msra.mxu0 0
    %231 = vmatpush.bf16.msra.mxu0 0
    %232 = vmatpush.bf16.msra.mxu0 0
    %233 = vmatpush.bf16.msra.mxu0 0
    %234 = vmatpush.bf16.msra.mxu0 0
    %235 = vmatpush.bf16.msra.mxu0 0
    %236 = vmatpush.bf16.msra.mxu0 0
    %237 = vmatpush.bf16.msra.mxu0 %v201
    %238 = vmatmul.bf16.gmra.mxu0 %v194
    %v239 = vpop.f32.mrf.mxu0
    %v240 = vadd.f32 %v132, %v239
    %v241 = vpop.f32.mrf.mxu0
    %242 = vdwg.mxu0
    %243 = vmatpush.bf16.msra.mxu0 0
    %244 = vmatpush.bf16.msra.mxu0 0
    %245 = vmatpush.bf16.msra.mxu0 0
    %246 = vmatpush.bf16.msra.mxu0 0
    %247 = vmatpush.bf16.msra.mxu0 0
    %248 = vmatpush.bf16.msra.mxu0 0
    %249 = vmatpush.bf16.msra.mxu0 0
    %250 = vmatpush.bf16.msra.mxu0 %v204
    %251 = vmatmul.bf16.gmra.mxu0 %v194
    %v252 = vpop.f32.mrf.mxu0
    %v253 = vadd.f32 %v133, %v252
    %v254 = vpop.f32.mrf.mxu0
    %255 = vdwg.mxu0
    %256 = vmatpush.bf16.msra.mxu0 0
    %257 = vmatpush.bf16.msra.mxu0 0
    %258 = vmatpush.bf16.msra.mxu0 0
    %259 = vmatpush.bf16.msra.mxu0 0
    %260 = vmatpush.bf16.msra.mxu0 0
    %261 = vmatpush.bf16.msra.mxu0 0
    %262 = vmatpush.bf16.msra.mxu0 0
    %263 = vmatpush.bf16.msra.mxu0 %v207
    %264 = vmatmul.bf16.gmra.mxu0 %v194
    %v265 = vpop.f32.mrf.mxu0
    %v266 = vadd.f32 %v134, %v265
    %v267 = vpop.f32.mrf.mxu0
    %268 = vdwg.mxu0
    %269 = vmatpush.bf16.msra.mxu0 0
    %270 = vmatpush.bf16.msra.mxu0 0
    %271 = vmatpush.bf16.msra.mxu0 0
    %272 = vmatpush.bf16.msra.mxu0 0
    %273 = vmatpush.bf16.msra.mxu0 0
    %274 = vmatpush.bf16.msra.mxu0 0
    %275 = vmatpush.bf16.msra.mxu0 0
    %276 = vmatpush.bf16.msra.mxu0 %v210
    %277 = vmatmul.bf16.gmra.mxu0 %v194
    %v278 = vpop.f32.mrf.mxu0
    %v279 = vadd.f32 %v135, %v278
    %v280 = vpop.f32.mrf.mxu0
    %281 = vdwg.mxu0
    %282 = vmatpush.bf16.msra.mxu0 0
    %283 = vmatpush.bf16.msra.mxu0 0
    %284 = vmatpush.bf16.msra.mxu0 0
    %285 = vmatpush.bf16.msra.mxu0 0
    %286 = vmatpush.bf16.msra.mxu0 0
    %287 = vmatpush.bf16.msra.mxu0 0
    %288 = vmatpush.bf16.msra.mxu0 0
    %289 = vmatpush.bf16.msra.mxu0 %v213
    %290 = vmatmul.bf16.gmra.mxu0 %v194
    %v291 = vpop.f32.mrf.mxu0
    %v292 = vadd.f32 %v136, %v291
    %v293 = vpop.f32.mrf.mxu0
    %294 = vdwg.mxu0
    %295 = vmatpush.bf16.msra.mxu0 0
    %296 = vmatpush.bf16.msra.mxu0 0
    %297 = vmatpush.bf16.msra.mxu0 0
    %298 = vmatpush.bf16.msra.mxu0 0
    %299 = vmatpush.bf16.msra.mxu0 0
    %300 = vmatpush.bf16.msra.mxu0 0
    %301 = vmatpush.bf16.msra.mxu0 0
    %302 = vmatpush.bf16.msra.mxu0 %v216
    %303 = vmatmul.bf16.gmra.mxu0 %v194
    %v304 = vpop.f32.mrf.mxu0
    %v305 = vadd.f32 %v137, %v304
    %v306 = vpop.f32.mrf.mxu0
    %307 = vdwg.mxu0
    %308 = vmatpush.bf16.msra.mxu0 0
    %309 = vmatpush.bf16.msra.mxu0 0
    %310 = vmatpush.bf16.msra.mxu0 0
    %311 = vmatpush.bf16.msra.mxu0 0
    %312 = vmatpush.bf16.msra.mxu0 0
    %313 = vmatpush.bf16.msra.mxu0 0
    %314 = vmatpush.bf16.msra.mxu0 0
    %315 = vmatpush.bf16.msra.mxu0 %v219
    %316 = vmatmul.bf16.gmra.mxu0 %v194
    %v317 = vpop.f32.mrf.mxu0
    %v318 = vadd.f32 %v138, %v317
    %v319 = vpop.f32.mrf.mxu0
    %320 = vdwg.mxu0
    %321 = vmatpush.bf16.msra.mxu0 0
    %322 = vmatpush.bf16.msra.mxu0 0
    %323 = vmatpush.bf16.msra.mxu0 0
    %324 = vmatpush.bf16.msra.mxu0 0
    %325 = vmatpush.bf16.msra.mxu0 0
    %326 = vmatpush.bf16.msra.mxu0 0
    %327 = vmatpush.bf16.msra.mxu0 0
    %328 = vmatpush.bf16.msra.mxu0 %v222
    %329 = vmatmul.bf16.gmra.mxu0 %v194
    %v330 = vpop.f32.mrf.mxu0
    %v331 = vadd.f32 %v139, %v330
    %v332 = vpop.f32.mrf.mxu0
    %333 = vdwg.mxu0
    %334 = vmatpush.bf16.msra.mxu0 0
    %335 = vmatpush.bf16.msra.mxu0 0
    %336 = vmatpush.bf16.msra.mxu0 0
    %337 = vmatpush.bf16.msra.mxu0 0
    %338 = vmatpush.bf16.msra.mxu0 0
    %339 = vmatpush.bf16.msra.mxu0 0
    %340 = vmatpush.bf16.msra.mxu0 0
    %341 = vmatpush.bf16.msra.mxu0 %v225
    %342 = vmatmul.bf16.gmra.mxu0 %v194
    %v343 = vpop.f32.mrf.mxu0
    %v344 = vadd.f32 %v140, %v343
    %v345 = vpop.f32.mrf.mxu0
    %346 = vdwg.mxu0
    %347 = vmatpush.bf16.msra.mxu0 0
    %348 = vmatpush.bf16.msra.mxu0 0
    %349 = vmatpush.bf16.msra.mxu0 0
    %350 = vmatpush.bf16.msra.mxu0 0
    %351 = vmatpush.bf16.msra.mxu0 0
    %352 = vmatpush.bf16.msra.mxu0 0
    %353 = vmatpush.bf16.msra.mxu0 0
    %354 = vmatpush.bf16.msra.mxu0 %v228
    %355 = vmatmul.bf16.gmra.mxu0 %v194
    %v356 = vpop.f32.mrf.mxu0
    %v357 = vadd.f32 %v141, %v356
    %v358 = vpop.f32.mrf.mxu0
    %359 = vdwg.mxu0
    %v360 = vmax.f32 %v240, 0.0
    %v361 = vmax.f32 %v253, 0.0
    %v362 = vmax.f32 %v266, 0.0
    %v363 = vmax.f32 %v279, 0.0
    %v364 = vmax.f32 %v292, 0.0
    %v365 = vmax.f32 %v305, 0.0
    %v366 = vmax.f32 %v318, 0.0
    %v367 = vmax.f32 %v331, 0.0
    %v368 = vmax.f32 %v344, 0.0
    %v369 = vmax.f32 %v357, 0.0
    %v370 = vpack.c.bf16 %v360, %v360
    %v371 = vpack.c.bf16 %v361, %v361
    %v372 = vld [vmem:[#allocation8] sm:$0xff]
    %v373 = vld [vmem:[#allocation8 + $0x8] sm:$0xff]
    %v374 = vld [vmem:[#allocation8 + $0x10] sm:$0xff]
    %v375 = vld [vmem:[#allocation8 + $0x18] sm:$0xff]
    %v376 = vld [vmem:[#allocation8 + $0x20] sm:$0xff]
    %v377 = vld [vmem:[#allocation8 + $0x28] sm:$0xff]
    %v378 = vld [vmem:[#allocation8 + $0x30] sm:$0xff]
    %v379 = vld [vmem:[#allocation8 + $0x38] sm:$0xff]
    %v380 = vld [vmem:[#allocation8 + $0x40] sm:$0xff]
    %v381 = vld [vmem:[#allocation8 + $0x48] sm:$0xff]
    %v382 = vld [vmem:[#allocation8 + $0x50] sm:$0xff]
    %v383 = vld [vmem:[#allocation8 + $0x58] sm:$0xff]
    %v384 = vld [vmem:[#allocation8 + $0x60] sm:$0xff]
    %v385 = vld [vmem:[#allocation8 + $0x68] sm:$0xff]
    %v386 = vld [vmem:[#allocation8 + $0x70] sm:$0xff]
    %v387 = vld [vmem:[#allocation8 + $0x78] sm:$0xff]
    %v388 = vld [vmem:[#allocation8 + $0x80] sm:$0xff]
    %v389 = vld [vmem:[#allocation8 + $0x88] sm:$0xff]
    %v390 = vld [vmem:[#allocation8 + $0x90] sm:$0xff]
    %v391 = vld [vmem:[#allocation8 + $0x98] sm:$0xff]
    %v392 = vld [vmem:[#allocation8 + $0xa0] sm:$0xff]
    %v393 = vld [vmem:[#allocation8 + $0xa8] sm:$0xff]
    %v394 = vld [vmem:[#allocation8 + $0xb0] sm:$0xff]
    %v395 = vld [vmem:[#allocation8 + $0xb8] sm:$0xff]
    %v396 = vld [vmem:[#allocation8 + $0xc0] sm:$0xff]
    %v397 = vld [vmem:[#allocation10] sm:$0x3]
    %v399 = vperm.slane %v397, 0
    %v400 = vperm.slane %v397, 1
    %v428 = vunpack.c.l.b16 %v372
    %v429 = vunpack.c.h.b16 %v372
    %v430 = vunpack.c.l.b16 %v373
    %v431 = vunpack.c.h.b16 %v373
    %v432 = vunpack.c.l.b16 %v374
    %v433 = vunpack.c.h.b16 %v374
    %v434 = vunpack.c.l.b16 %v375
    %v435 = vunpack.c.h.b16 %v375
    %v436 = vunpack.c.l.b16 %v376
    %v437 = vunpack.c.h.b16 %v376
    %v438 = vunpack.c.l.b16 %v377
    %v439 = vunpack.c.h.b16 %v377
    %v440 = vunpack.c.l.b16 %v378
    %v441 = vunpack.c.h.b16 %v378
    %v442 = vunpack.c.l.b16 %v379
    %v443 = vunpack.c.h.b16 %v379
    %v444 = vunpack.c.l.b16 %v380
    %v445 = vunpack.c.h.b16 %v380
    %v446 = vunpack.c.l.b16 %v381
    %v447 = vunpack.c.h.b16 %v381
    %v448 = vunpack.c.l.b16 %v382
    %v449 = vunpack.c.h.b16 %v382
    %v450 = vunpack.c.l.b16 %v383
    %v451 = vunpack.c.h.b16 %v383
    %v452 = vunpack.c.l.b16 %v384
    %v453 = vunpack.c.h.b16 %v384
    %v454 = vunpack.c.l.b16 %v385
    %v455 = vunpack.c.h.b16 %v385
    %v456 = vunpack.c.l.b16 %v386
    %v457 = vunpack.c.h.b16 %v386
    %v458 = vunpack.c.l.b16 %v387
    %v459 = vunpack.c.h.b16 %v387
    %v460 = vunpack.c.l.b16 %v388
    %v461 = vunpack.c.h.b16 %v388
    %v462 = vunpack.c.l.b16 %v389
    %v463 = vunpack.c.h.b16 %v389
    %v464 = vunpack.c.l.b16 %v390
    %v465 = vunpack.c.h.b16 %v390
    %v466 = vunpack.c.l.b16 %v391
    %v467 = vunpack.c.h.b16 %v391
    %v468 = vunpack.c.l.b16 %v392
    %v469 = vunpack.c.h.b16 %v392
    %v470 = vunpack.c.l.b16 %v393
    %v471 = vunpack.c.h.b16 %v393
    %v472 = vunpack.c.l.b16 %v394
    %v473 = vunpack.c.h.b16 %v394
    %v474 = vunpack.c.l.b16 %v395
    %v475 = vunpack.c.h.b16 %v395
    %v476 = vunpack.c.l.b16 %v396
    %v477 = vunpack.c.h.b16 %v396
    %v478 = vpack.c.b16 %v430, %v428
    %v479 = vpack.c.b16 %v431, %v429
    %v480 = vpack.c.b16 %v434, %v432
    %v481 = vpack.c.b16 %v435, %v433
    %v482 = vpack.c.b16 %v438, %v436
    %v483 = vpack.c.b16 %v439, %v437
    %v484 = vpack.c.b16 %v442, %v440
    %v485 = vpack.c.b16 %v443, %v441
    %v486 = vpack.c.b16 %v446, %v444
    %v487 = vpack.c.b16 %v447, %v445
    %v488 = vpack.c.b16 %v450, %v448
    %v489 = vpack.c.b16 %v451, %v449
    %v490 = vpack.c.b16 %v454, %v452
    %v491 = vpack.c.b16 %v455, %v453
    %v492 = vpack.c.b16 %v458, %v456
    %v493 = vpack.c.b16 %v459, %v457
    %v494 = vpack.c.b16 %v462, %v460
    %v495 = vpack.c.b16 %v463, %v461
    %v496 = vpack.c.b16 %v466, %v464
    %v497 = vpack.c.b16 %v467, %v465
    %v498 = vpack.c.b16 %v470, %v468
    %v499 = vpack.c.b16 %v471, %v469
    %v500 = vpack.c.b16 %v474, %v472
    %v501 = vpack.c.b16 %v475, %v473
    %v502 = vpack.c.b16 %v476, %v476
    %v503 = vpack.c.b16 %v477, %v477
    %vm528 = vcmask 588800
    %v530 = vsel %vm528, %v371, 0
    %vm532 = vcmask 1043456
    %v534 = vsel %vm532, %v502, 0
    %v537 = vsel %vm532, %v503, 0
    %539 = vmatpush.bf16.msra.mxu0 %v492
    %540 = vmatpush.bf16.msra.mxu0 %v490
    %541 = vmatpush.bf16.msra.mxu0 %v488
    %542 = vmatpush.bf16.msra.mxu0 %v486
    %543 = vmatpush.bf16.msra.mxu0 %v484
    %544 = vmatpush.bf16.msra.mxu0 %v482
    %545 = vmatpush.bf16.msra.mxu0 %v480
    %546 = vmatpush.bf16.msra.mxu0 %v478
    %547 = vmatmul.bf16.gmra.mxu0 %v370
    %v548 = vpop.f32.mrf.mxu0
    %v549 = vadd.f32 %v399, %v548
    %v550 = vpop.f32.mrf.mxu0
    %551 = vdwg.mxu0
    %552 = vmatpush.bf16.msra.mxu0 0
    %553 = vmatpush.bf16.msra.mxu0 0
    %554 = vmatpush.bf16.msra.mxu0 0
    %555 = vmatpush.bf16.msra.mxu0 %v534
    %556 = vmatpush.bf16.msra.mxu0 %v500
    %557 = vmatpush.bf16.msra.mxu0 %v498
    %558 = vmatpush.bf16.msra.mxu0 %v496
    %559 = vmatpush.bf16.msra.mxu0 %v494
    %560 = vmatmul.bf16.gmra.mxu0 %v530
    %v561 = vpop.f32.mrf.mxu0
    %v562 = vadd.f32 %v549, %v561
    %v563 = vpop.f32.mrf.mxu0
    %564 = vdwg.mxu0
    %565 = vmatpush.bf16.msra.mxu0 %v493
    %566 = vmatpush.bf16.msra.mxu0 %v491
    %567 = vmatpush.bf16.msra.mxu0 %v489
    %568 = vmatpush.bf16.msra.mxu0 %v487
    %569 = vmatpush.bf16.msra.mxu0 %v485
    %570 = vmatpush.bf16.msra.mxu0 %v483
    %571 = vmatpush.bf16.msra.mxu0 %v481
    %572 = vmatpush.bf16.msra.mxu0 %v479
    %573 = vmatmul.bf16.gmra.mxu0 %v370
    %v574 = vpop.f32.mrf.mxu0
    %v575 = vadd.f32 %v400, %v574
    %v576 = vpop.f32.mrf.mxu0
    %577 = vdwg.mxu0
    %578 = vmatpush.bf16.msra.mxu0 0
    %579 = vmatpush.bf16.msra.mxu0 0
    %580 = vmatpush.bf16.msra.mxu0 0
    %581 = vmatpush.bf16.msra.mxu0 %v537
    %582 = vmatpush.bf16.msra.mxu0 %v501
    %583 = vmatpush.bf16.msra.mxu0 %v499
    %584 = vmatpush.bf16.msra.mxu0 %v497
    %585 = vmatpush.bf16.msra.mxu0 %v495
    %586 = vmatmul.bf16.gmra.mxu0 %v530
    %v587 = vpop.f32.mrf.mxu0
    %v588 = vadd.f32 %v575, %v587
    %v589 = vpop.f32.mrf.mxu0
    %590 = vdwg.mxu0
    %v591 = vmax.f32 %v562, 0.0
    %v592 = vmax.f32 %v588, 0.0
    %v593 = vpack.c.bf16 %v591, %v591
    %v594 = vpack.c.bf16 %v592, %v592
    %s595 = scalar_lea.vmem [#allocation8], 1200
    %v596 = vld [vmem:[%s595] sm:$0xff]
    %v597 = vld [vmem:[%s595 + $0x8] sm:$0xff]
    %v598 = vld [vmem:[%s595 + $0x10] sm:$0xff]
    %v599 = vld [vmem:[%s595 + $0x18] sm:$0xff]
    %v600 = vld [vmem:[%s595 + $0x20] sm:$0xff]
    %v601 = vld [vmem:[%s595 + $0x28] sm:$0xff]
    %v602 = vld [vmem:[%s595 + $0x30] sm:$0xff]
    %v603 = vld [vmem:[%s595 + $0x38] sm:$0xff]
    %v604 = vld [vmem:[%s595 + $0x40] sm:$0xff]
    %v605 = vld [vmem:[%s595 + $0x48] sm:$0xff]
    %v606 = vld [vmem:[%s595 + $0x50] sm:$0xff]
    %v607 = vld [vmem:[%s595 + $0x58] sm:$0xff]
    %v608 = vld [vmem:[%s595 + $0x60] sm:$0xff]
    %v609 = vld [vmem:[%s595 + $0x68] sm:$0xff]
    %v610 = vld [vmem:[%s595 + $0x70] sm:$0xff]
    %v611 = vld [vmem:[%s595 + $0x78] sm:$0xff]
    %v612 = vld [vmem:[%s595 + $0x80] sm:$0xff]
    %v613 = vld [vmem:[%s595 + $0x88] sm:$0xff]
    %v614 = vld [vmem:[%s595 + $0x90] sm:$0xff]
    %v615 = vld [vmem:[%s595 + $0x98] sm:$0xff]
    %v616 = vld [vmem:[%s595 + $0xa0] sm:$0xff]
    %v617 = vld [vmem:[%s595 + $0xa8] sm:$0xff]
    %v618 = vld [vmem:[%s595 + $0xb0] sm:$0xff]
    %v619 = vld [vmem:[%s595 + $0xb8] sm:$0xff]
    %v620 = vld [vmem:[%s595 + $0xc0] sm:$0xff]
    %s621 = scalar_lea.vmem [#allocation10], 12
    %v622 = vld [vmem:[%s621] sm:$0x3]
    %v624 = vperm.slane %v622, 0
    %v625 = vperm.slane %v622, 1
    %v653 = vunpack.c.l.b16 %v596
    %v654 = vunpack.c.h.b16 %v596
    %v655 = vunpack.c.l.b16 %v597
    %v656 = vunpack.c.h.b16 %v597
    %v657 = vunpack.c.l.b16 %v598
    %v658 = vunpack.c.h.b16 %v598
    %v659 = vunpack.c.l.b16 %v599
    %v660 = vunpack.c.h.b16 %v599
    %v661 = vunpack.c.l.b16 %v600
    %v662 = vunpack.c.h.b16 %v600
    %v663 = vunpack.c.l.b16 %v601
    %v664 = vunpack.c.h.b16 %v601
    %v665 = vunpack.c.l.b16 %v602
    %v666 = vunpack.c.h.b16 %v602
    %v667 = vunpack.c.l.b16 %v603
    %v668 = vunpack.c.h.b16 %v603
    %v669 = vunpack.c.l.b16 %v604
    %v670 = vunpack.c.h.b16 %v604
    %v671 = vunpack.c.l.b16 %v605
    %v672 = vunpack.c.h.b16 %v605
    %v673 = vunpack.c.l.b16 %v606
    %v674 = vunpack.c.h.b16 %v606
    %v675 = vunpack.c.l.b16 %v607
    %v676 = vunpack.c.h.b16 %v607
    %v677 = vunpack.c.l.b16 %v608
    %v678 = vunpack.c.h.b16 %v608
    %v679 = vunpack.c.l.b16 %v609
    %v680 = vunpack.c.h.b16 %v609
    %v681 = vunpack.c.l.b16 %v610
    %v682 = vunpack.c.h.b16 %v610
    %v683 = vunpack.c.l.b16 %v611
    %v684 = vunpack.c.h.b16 %v611
    %v685 = vunpack.c.l.b16 %v612
    %v686 = vunpack.c.h.b16 %v612
    %v687 = vunpack.c.l.b16 %v613
    %v688 = vunpack.c.h.b16 %v613
    %v689 = vunpack.c.l.b16 %v614
    %v690 = vunpack.c.h.b16 %v614
    %v691 = vunpack.c.l.b16 %v615
    %v692 = vunpack.c.h.b16 %v615
    %v693 = vunpack.c.l.b16 %v616
    %v694 = vunpack.c.h.b16 %v616
    %v695 = vunpack.c.l.b16 %v617
    %v696 = vunpack.c.h.b16 %v617
    %v697 = vunpack.c.l.b16 %v618
    %v698 = vunpack.c.h.b16 %v618
    %v699 = vunpack.c.l.b16 %v619
    %v700 = vunpack.c.h.b16 %v619
    %v701 = vunpack.c.l.b16 %v620
    %v702 = vunpack.c.h.b16 %v620
    %v703 = vpack.c.b16 %v655, %v653
    %v704 = vpack.c.b16 %v656, %v654
    %v705 = vpack.c.b16 %v659, %v657
    %v706 = vpack.c.b16 %v660, %v658
    %v707 = vpack.c.b16 %v663, %v661
    %v708 = vpack.c.b16 %v664, %v662
    %v709 = vpack.c.b16 %v667, %v665
    %v710 = vpack.c.b16 %v668, %v666
    %v711 = vpack.c.b16 %v671, %v669
    %v712 = vpack.c.b16 %v672, %v670
    %v713 = vpack.c.b16 %v675, %v673
    %v714 = vpack.c.b16 %v676, %v674
    %v715 = vpack.c.b16 %v679, %v677
    %v716 = vpack.c.b16 %v680, %v678
    %v717 = vpack.c.b16 %v683, %v681
    %v718 = vpack.c.b16 %v684, %v682
    %v719 = vpack.c.b16 %v687, %v685
    %v720 = vpack.c.b16 %v688, %v686
    %v721 = vpack.c.b16 %v691, %v689
    %v722 = vpack.c.b16 %v692, %v690
    %v723 = vpack.c.b16 %v695, %v693
    %v724 = vpack.c.b16 %v696, %v694
    %v725 = vpack.c.b16 %v699, %v697
    %v726 = vpack.c.b16 %v700, %v698
    %v727 = vpack.c.b16 %v701, %v701
    %v728 = vpack.c.b16 %v702, %v702
    %v754 = vsel %vm528, %v594, 0
    %v757 = vsel %vm532, %v727, 0
    %v760 = vsel %vm532, %v728, 0
    %762 = vmatpush.bf16.msra.mxu0 %v717
    %763 = vmatpush.bf16.msra.mxu0 %v715
    %764 = vmatpush.bf16.msra.mxu0 %v713
    %765 = vmatpush.bf16.msra.mxu0 %v711
    %766 = vmatpush.bf16.msra.mxu0 %v709
    %767 = vmatpush.bf16.msra.mxu0 %v707
    %768 = vmatpush.bf16.msra.mxu0 %v705
    %769 = vmatpush.bf16.msra.mxu0 %v703
    %770 = vmatmul.bf16.gmra.mxu0 %v593
    %v771 = vpop.f32.mrf.mxu0
    %v772 = vadd.f32 %v624, %v771
    %v773 = vpop.f32.mrf.mxu0
    %774 = vdwg.mxu0
    %775 = vmatpush.bf16.msra.mxu0 0
    %776 = vmatpush.bf16.msra.mxu0 0
    %777 = vmatpush.bf16.msra.mxu0 0
    %778 = vmatpush.bf16.msra.mxu0 %v757
    %779 = vmatpush.bf16.msra.mxu0 %v725
    %780 = vmatpush.bf16.msra.mxu0 %v723
    %781 = vmatpush.bf16.msra.mxu0 %v721
    %782 = vmatpush.bf16.msra.mxu0 %v719
    %783 = vmatmul.bf16.gmra.mxu0 %v754
    %v784 = vpop.f32.mrf.mxu0
    %v785 = vadd.f32 %v772, %v784
    %v786 = vpop.f32.mrf.mxu0
    %787 = vdwg.mxu0
    %788 = vmatpush.bf16.msra.mxu0 %v718
    %789 = vmatpush.bf16.msra.mxu0 %v716
    %790 = vmatpush.bf16.msra.mxu0 %v714
    %791 = vmatpush.bf16.msra.mxu0 %v712
    %792 = vmatpush.bf16.msra.mxu0 %v710
    %793 = vmatpush.bf16.msra.mxu0 %v708
    %794 = vmatpush.bf16.msra.mxu0 %v706
    %795 = vmatpush.bf16.msra.mxu0 %v704
    %796 = vmatmul.bf16.gmra.mxu0 %v593
    %v797 = vpop.f32.mrf.mxu0
    %v798 = vadd.f32 %v625, %v797
    %v799 = vpop.f32.mrf.mxu0
    %800 = vdwg.mxu0
    %801 = vmatpush.bf16.msra.mxu0 0
    %802 = vmatpush.bf16.msra.mxu0 0
    %803 = vmatpush.bf16.msra.mxu0 0
    %804 = vmatpush.bf16.msra.mxu0 %v760
    %805 = vmatpush.bf16.msra.mxu0 %v726
    %806 = vmatpush.bf16.msra.mxu0 %v724
    %807 = vmatpush.bf16.msra.mxu0 %v722
    %808 = vmatpush.bf16.msra.mxu0 %v720
    %809 = vmatmul.bf16.gmra.mxu0 %v754
    %v810 = vpop.f32.mrf.mxu0
    %v811 = vadd.f32 %v798, %v810
    %v812 = vpop.f32.mrf.mxu0
    %813 = vdwg.mxu0
    %v814 = vmax.f32 %v785, 0.0
    %v815 = vmax.f32 %v811, 0.0
    %v816 = vld [vmem:[#allocation11] sm:$0x11]
    %v817 = vunpack.c.l.bf16 %v816
    %v818 = vunpack.c.h.bf16 %v816
    %v819 = vperm.slane %v817, 0
    %v820 = vperm.slane %v818, 0
    %v821 = vmul.f32 %v814, %v819
    %v822 = vmul.f32 %v815, %v820
    %v823 = vsel %vm528, %v822, 0.0
    %v824 = vadd.f32 %v821, %v823
    %825 = vadd.xlane.f32.xlu0 %v824
    %v826 = vpop.xlane.xlu0 %825
    %v827 = vld [vmem:[%s6] sm:$0x1]
    %v828 = vperm.slane %v827, 0
    %v829 = vadd.f32 %v826, %v828
    %v830 = vpack.c.bf16 %v362, %v362
    %v831 = vpack.c.bf16 %v363, %v363
    %s832 = scalar_lea.vmem [#allocation8], 200
    %v833 = vld [vmem:[%s832] sm:$0xff]
    %v834 = vld [vmem:[%s832 + $0x8] sm:$0xff]
    %v835 = vld [vmem:[%s832 + $0x10] sm:$0xff]
    %v836 = vld [vmem:[%s832 + $0x18] sm:$0xff]
    %v837 = vld [vmem:[%s832 + $0x20] sm:$0xff]
    %v838 = vld [vmem:[%s832 + $0x28] sm:$0xff]
    %v839 = vld [vmem:[%s832 + $0x30] sm:$0xff]
    %v840 = vld [vmem:[%s832 + $0x38] sm:$0xff]
    %v841 = vld [vmem:[%s832 + $0x40] sm:$0xff]
    %v842 = vld [vmem:[%s832 + $0x48] sm:$0xff]
    %v843 = vld [vmem:[%s832 + $0x50] sm:$0xff]
    %v844 = vld [vmem:[%s832 + $0x58] sm:$0xff]
    %v845 = vld [vmem:[%s832 + $0x60] sm:$0xff]
    %v846 = vld [vmem:[%s832 + $0x68] sm:$0xff]
    %v847 = vld [vmem:[%s832 + $0x70] sm:$0xff]
    %v848 = vld [vmem:[%s832 + $0x78] sm:$0xff]
    %v849 = vld [vmem:[%s832 + $0x80] sm:$0xff]
    %v850 = vld [vmem:[%s832 + $0x88] sm:$0xff]
    %v851 = vld [vmem:[%s832 + $0x90] sm:$0xff]
    %v852 = vld [vmem:[%s832 + $0x98] sm:$0xff]
    %v853 = vld [vmem:[%s832 + $0xa0] sm:$0xff]
    %v854 = vld [vmem:[%s832 + $0xa8] sm:$0xff]
    %v855 = vld [vmem:[%s832 + $0xb0] sm:$0xff]
    %v856 = vld [vmem:[%s832 + $0xb8] sm:$0xff]
    %v857 = vld [vmem:[%s832 + $0xc0] sm:$0xff]
    %s858 = scalar_lea.vmem [#allocation10], 2
    %v859 = vld [vmem:[%s858] sm:$0x3]
    %v861 = vperm.slane %v859, 0
    %v862 = vperm.slane %v859, 1
    %868 = vrot.lane.b32.xlu0 %v371, 56
    %v869 = vpop.permute.xlu0 %868
    %870 = vrot.lane.b32.xlu0 %v830, 56
    %v871 = vpop.permute.xlu0 %870
    %872 = vrot.lane.b32.xlu0 %v831, 56
    %v873 = vpop.permute.xlu0 %872
    %vm874 = vcmask 457728
    %v875 = vsel %vm874, %v869, %v871
    %v876 = vsel %vm874, %v871, %v873
    %v903 = vunpack.c.l.b16 %v833
    %v904 = vunpack.c.h.b16 %v833
    %v905 = vunpack.c.l.b16 %v834
    %v906 = vunpack.c.h.b16 %v834
    %v907 = vunpack.c.l.b16 %v835
    %v908 = vunpack.c.h.b16 %v835
    %v909 = vunpack.c.l.b16 %v836
    %v910 = vunpack.c.h.b16 %v836
    %v911 = vunpack.c.l.b16 %v837
    %v912 = vunpack.c.h.b16 %v837
    %v913 = vunpack.c.l.b16 %v838
    %v914 = vunpack.c.h.b16 %v838
    %v915 = vunpack.c.l.b16 %v839
    %v916 = vunpack.c.h.b16 %v839
    %v917 = vunpack.c.l.b16 %v840
    %v918 = vunpack.c.h.b16 %v840
    %v919 = vunpack.c.l.b16 %v841
    %v920 = vunpack.c.h.b16 %v841
    %v921 = vunpack.c.l.b16 %v842
    %v922 = vunpack.c.h.b16 %v842
    %v923 = vunpack.c.l.b16 %v843
    %v924 = vunpack.c.h.b16 %v843
    %v925 = vunpack.c.l.b16 %v844
    %v926 = vunpack.c.h.b16 %v844
    %v927 = vunpack.c.l.b16 %v845
    %v928 = vunpack.c.h.b16 %v845
    %v929 = vunpack.c.l.b16 %v846
    %v930 = vunpack.c.h.b16 %v846
    %v931 = vunpack.c.l.b16 %v847
    %v932 = vunpack.c.h.b16 %v847
    %v933 = vunpack.c.l.b16 %v848
    %v934 = vunpack.c.h.b16 %v848
    %v935 = vunpack.c.l.b16 %v849
    %v936 = vunpack.c.h.b16 %v849
    %v937 = vunpack.c.l.b16 %v850
    %v938 = vunpack.c.h.b16 %v850
    %v939 = vunpack.c.l.b16 %v851
    %v940 = vunpack.c.h.b16 %v851
    %v941 = vunpack.c.l.b16 %v852
    %v942 = vunpack.c.h.b16 %v852
    %v943 = vunpack.c.l.b16 %v853
    %v944 = vunpack.c.h.b16 %v853
    %v945 = vunpack.c.l.b16 %v854
    %v946 = vunpack.c.h.b16 %v854
    %v947 = vunpack.c.l.b16 %v855
    %v948 = vunpack.c.h.b16 %v855
    %v949 = vunpack.c.l.b16 %v856
    %v950 = vunpack.c.h.b16 %v856
    %v951 = vunpack.c.l.b16 %v857
    %v952 = vunpack.c.h.b16 %v857
    %v953 = vpack.c.b16 %v905, %v903
    %v954 = vpack.c.b16 %v906, %v904
    %v955 = vpack.c.b16 %v909, %v907
    %v956 = vpack.c.b16 %v910, %v908
    %v957 = vpack.c.b16 %v913, %v911
    %v958 = vpack.c.b16 %v914, %v912
    %v959 = vpack.c.b16 %v917, %v915
    %v960 = vpack.c.b16 %v918, %v916
    %v961 = vpack.c.b16 %v921, %v919
    %v962 = vpack.c.b16 %v922, %v920
    %v963 = vpack.c.b16 %v925, %v923
    %v964 = vpack.c.b16 %v926, %v924
    %v965 = vpack.c.b16 %v929, %v927
    %v966 = vpack.c.b16 %v930, %v928
    %v967 = vpack.c.b16 %v933, %v931
    %v968 = vpack.c.b16 %v934, %v932
    %v969 = vpack.c.b16 %v937, %v935
    %v970 = vpack.c.b16 %v938, %v936
    %v971 = vpack.c.b16 %v941, %v939
    %v972 = vpack.c.b16 %v942, %v940
    %v973 = vpack.c.b16 %v945, %v943
    %v974 = vpack.c.b16 %v946, %v944
    %v975 = vpack.c.b16 %v949, %v947
    %v976 = vpack.c.b16 %v950, %v948
    %v977 = vpack.c.b16 %v951, %v951
    %v978 = vpack.c.b16 %v952, %v952
    %v1004 = vsel %vm528, %v876, 0
    %v1007 = vsel %vm532, %v977, 0
    %v1010 = vsel %vm532, %v978, 0
    %1012 = vmatpush.bf16.msra.mxu0 %v967
    %1013 = vmatpush.bf16.msra.mxu0 %v965
    %1014 = vmatpush.bf16.msra.mxu0 %v963
    %1015 = vmatpush.bf16.msra.mxu0 %v961
    %1016 = vmatpush.bf16.msra.mxu0 %v959
    %1017 = vmatpush.bf16.msra.mxu0 %v957
    %1018 = vmatpush.bf16.msra.mxu0 %v955
    %1019 = vmatpush.bf16.msra.mxu0 %v953
    %1020 = vmatmul.bf16.gmra.mxu0 %v875
    %v1021 = vpop.f32.mrf.mxu0
    %v1022 = vadd.f32 %v861, %v1021
    %v1023 = vpop.f32.mrf.mxu0
    %1024 = vdwg.mxu0
    %1025 = vmatpush.bf16.msra.mxu0 0
    %1026 = vmatpush.bf16.msra.mxu0 0
    %1027 = vmatpush.bf16.msra.mxu0 0
    %1028 = vmatpush.bf16.msra.mxu0 %v1007
    %1029 = vmatpush.bf16.msra.mxu0 %v975
    %1030 = vmatpush.bf16.msra.mxu0 %v973
    %1031 = vmatpush.bf16.msra.mxu0 %v971
    %1032 = vmatpush.bf16.msra.mxu0 %v969
    %1033 = vmatmul.bf16.gmra.mxu0 %v1004
    %v1034 = vpop.f32.mrf.mxu0
    %v1035 = vadd.f32 %v1022, %v1034
    %v1036 = vpop.f32.mrf.mxu0
    %1037 = vdwg.mxu0
    %1038 = vmatpush.bf16.msra.mxu0 %v968
    %1039 = vmatpush.bf16.msra.mxu0 %v966
    %1040 = vmatpush.bf16.msra.mxu0 %v964
    %1041 = vmatpush.bf16.msra.mxu0 %v962
    %1042 = vmatpush.bf16.msra.mxu0 %v960
    %1043 = vmatpush.bf16.msra.mxu0 %v958
    %1044 = vmatpush.bf16.msra.mxu0 %v956
    %1045 = vmatpush.bf16.msra.mxu0 %v954
    %1046 = vmatmul.bf16.gmra.mxu0 %v875
    %v1047 = vpop.f32.mrf.mxu0
    %v1048 = vadd.f32 %v862, %v1047
    %v1049 = vpop.f32.mrf.mxu0
    %1050 = vdwg.mxu0
    %1051 = vmatpush.bf16.msra.mxu0 0
    %1052 = vmatpush.bf16.msra.mxu0 0
    %1053 = vmatpush.bf16.msra.mxu0 0
    %1054 = vmatpush.bf16.msra.mxu0 %v1010
    %1055 = vmatpush.bf16.msra.mxu0 %v976
    %1056 = vmatpush.bf16.msra.mxu0 %v974
    %1057 = vmatpush.bf16.msra.mxu0 %v972
    %1058 = vmatpush.bf16.msra.mxu0 %v970
    %1059 = vmatmul.bf16.gmra.mxu0 %v1004
    %v1060 = vpop.f32.mrf.mxu0
    %v1061 = vadd.f32 %v1048, %v1060
    %v1062 = vpop.f32.mrf.mxu0
    %1063 = vdwg.mxu0
    %v1064 = vmax.f32 %v1035, 0.0
    %v1065 = vmax.f32 %v1061, 0.0
    %v1066 = vpack.c.bf16 %v1064, %v1064
    %v1067 = vpack.c.bf16 %v1065, %v1065
    %s1068 = scalar_lea.vmem [#allocation8], 1400
    %v1069 = vld [vmem:[%s1068] sm:$0xff]
    %v1070 = vld [vmem:[%s1068 + $0x8] sm:$0xff]
    %v1071 = vld [vmem:[%s1068 + $0x10] sm:$0xff]
    %v1072 = vld [vmem:[%s1068 + $0x18] sm:$0xff]
    %v1073 = vld [vmem:[%s1068 + $0x20] sm:$0xff]
    %v1074 = vld [vmem:[%s1068 + $0x28] sm:$0xff]
    %v1075 = vld [vmem:[%s1068 + $0x30] sm:$0xff]
    %v1076 = vld [vmem:[%s1068 + $0x38] sm:$0xff]
    %v1077 = vld [vmem:[%s1068 + $0x40] sm:$0xff]
    %v1078 = vld [vmem:[%s1068 + $0x48] sm:$0xff]
    %v1079 = vld [vmem:[%s1068 + $0x50] sm:$0xff]
    %v1080 = vld [vmem:[%s1068 + $0x58] sm:$0xff]
    %v1081 = vld [vmem:[%s1068 + $0x60] sm:$0xff]
    %v1082 = vld [vmem:[%s1068 + $0x68] sm:$0xff]
    %v1083 = vld [vmem:[%s1068 + $0x70] sm:$0xff]
    %v1084 = vld [vmem:[%s1068 + $0x78] sm:$0xff]
    %v1085 = vld [vmem:[%s1068 + $0x80] sm:$0xff]
    %v1086 = vld [vmem:[%s1068 + $0x88] sm:$0xff]
    %v1087 = vld [vmem:[%s1068 + $0x90] sm:$0xff]
    %v1088 = vld [vmem:[%s1068 + $0x98] sm:$0xff]
    %v1089 = vld [vmem:[%s1068 + $0xa0] sm:$0xff]
    %v1090 = vld [vmem:[%s1068 + $0xa8] sm:$0xff]
    %v1091 = vld [vmem:[%s1068 + $0xb0] sm:$0xff]
    %v1092 = vld [vmem:[%s1068 + $0xb8] sm:$0xff]
    %v1093 = vld [vmem:[%s1068 + $0xc0] sm:$0xff]
    %s1094 = scalar_lea.vmem [#allocation10], 14
    %v1095 = vld [vmem:[%s1094] sm:$0x3]
    %v1097 = vperm.slane %v1095, 0
    %v1098 = vperm.slane %v1095, 1
    %v1126 = vunpack.c.l.b16 %v1069
    %v1127 = vunpack.c.h.b16 %v1069
    %v1128 = vunpack.c.l.b16 %v1070
    %v1129 = vunpack.c.h.b16 %v1070
    %v1130 = vunpack.c.l.b16 %v1071
    %v1131 = vunpack.c.h.b16 %v1071
    %v1132 = vunpack.c.l.b16 %v1072
    %v1133 = vunpack.c.h.b16 %v1072
    %v1134 = vunpack.c.l.b16 %v1073
    %v1135 = vunpack.c.h.b16 %v1073
    %v1136 = vunpack.c.l.b16 %v1074
    %v1137 = vunpack.c.h.b16 %v1074
    %v1138 = vunpack.c.l.b16 %v1075
    %v1139 = vunpack.c.h.b16 %v1075
    %v1140 = vunpack.c.l.b16 %v1076
    %v1141 = vunpack.c.h.b16 %v1076
    %v1142 = vunpack.c.l.b16 %v1077
    %v1143 = vunpack.c.h.b16 %v1077
    %v1144 = vunpack.c.l.b16 %v1078
    %v1145 = vunpack.c.h.b16 %v1078
    %v1146 = vunpack.c.l.b16 %v1079
    %v1147 = vunpack.c.h.b16 %v1079
    %v1148 = vunpack.c.l.b16 %v1080
    %v1149 = vunpack.c.h.b16 %v1080
    %v1150 = vunpack.c.l.b16 %v1081
    %v1151 = vunpack.c.h.b16 %v1081
    %v1152 = vunpack.c.l.b16 %v1082
    %v1153 = vunpack.c.h.b16 %v1082
    %v1154 = vunpack.c.l.b16 %v1083
    %v1155 = vunpack.c.h.b16 %v1083
    %v1156 = vunpack.c.l.b16 %v1084
    %v1157 = vunpack.c.h.b16 %v1084
    %v1158 = vunpack.c.l.b16 %v1085
    %v1159 = vunpack.c.h.b16 %v1085
    %v1160 = vunpack.c.l.b16 %v1086
    %v1161 = vunpack.c.h.b16 %v1086
    %v1162 = vunpack.c.l.b16 %v1087
    %v1163 = vunpack.c.h.b16 %v1087
    %v1164 = vunpack.c.l.b16 %v1088
    %v1165 = vunpack.c.h.b16 %v1088
    %v1166 = vunpack.c.l.b16 %v1089
    %v1167 = vunpack.c.h.b16 %v1089
    %v1168 = vunpack.c.l.b16 %v1090
    %v1169 = vunpack.c.h.b16 %v1090
    %v1170 = vunpack.c.l.b16 %v1091
    %v1171 = vunpack.c.h.b16 %v1091
    %v1172 = vunpack.c.l.b16 %v1092
    %v1173 = vunpack.c.h.b16 %v1092
    %v1174 = vunpack.c.l.b16 %v1093
    %v1175 = vunpack.c.h.b16 %v1093
    %v1176 = vpack.c.b16 %v1128, %v1126
    %v1177 = vpack.c.b16 %v1129, %v1127
    %v1178 = vpack.c.b16 %v1132, %v1130
    %v1179 = vpack.c.b16 %v1133, %v1131
    %v1180 = vpack.c.b16 %v1136, %v1134
    %v1181 = vpack.c.b16 %v1137, %v1135
    %v1182 = vpack.c.b16 %v1140, %v1138
    %v1183 = vpack.c.b16 %v1141, %v1139
    %v1184 = vpack.c.b16 %v1144, %v1142
    %v1185 = vpack.c.b16 %v1145, %v1143
    %v1186 = vpack.c.b16 %v1148, %v1146
    %v1187 = vpack.c.b16 %v1149, %v1147
    %v1188 = vpack.c.b16 %v1152, %v1150
    %v1189 = vpack.c.b16 %v1153, %v1151
    %v1190 = vpack.c.b16 %v1156, %v1154
    %v1191 = vpack.c.b16 %v1157, %v1155
    %v1192 = vpack.c.b16 %v1160, %v1158
    %v1193 = vpack.c.b16 %v1161, %v1159
    %v1194 = vpack.c.b16 %v1164, %v1162
    %v1195 = vpack.c.b16 %v1165, %v1163
    %v1196 = vpack.c.b16 %v1168, %v1166
    %v1197 = vpack.c.b16 %v1169, %v1167
    %v1198 = vpack.c.b16 %v1172, %v1170
    %v1199 = vpack.c.b16 %v1173, %v1171
    %v1200 = vpack.c.b16 %v1174, %v1174
    %v1201 = vpack.c.b16 %v1175, %v1175
    %v1227 = vsel %vm528, %v1067, 0
    %v1230 = vsel %vm532, %v1200, 0
    %v1233 = vsel %vm532, %v1201, 0
    %1235 = vmatpush.bf16.msra.mxu0 %v1190
    %1236 = vmatpush.bf16.msra.mxu0 %v1188
    %1237 = vmatpush.bf16.msra.mxu0 %v1186
    %1238 = vmatpush.bf16.msra.mxu0 %v1184
    %1239 = vmatpush.bf16.msra.mxu0 %v1182
    %1240 = vmatpush.bf16.msra.mxu0 %v1180
    %1241 = vmatpush.bf16.msra.mxu0 %v1178
    %1242 = vmatpush.bf16.msra.mxu0 %v1176
    %1243 = vmatmul.bf16.gmra.mxu0 %v1066
    %v1244 = vpop.f32.mrf.mxu0
    %v1245 = vadd.f32 %v1097, %v1244
    %v1246 = vpop.f32.mrf.mxu0
    %1247 = vdwg.mxu0
    %1248 = vmatpush.bf16.msra.mxu0 0
    %1249 = vmatpush.bf16.msra.mxu0 0
    %1250 = vmatpush.bf16.msra.mxu0 0
    %1251 = vmatpush.bf16.msra.mxu0 %v1230
    %1252 = vmatpush.bf16.msra.mxu0 %v1198
    %1253 = vmatpush.bf16.msra.mxu0 %v1196
    %1254 = vmatpush.bf16.msra.mxu0 %v1194
    %1255 = vmatpush.bf16.msra.mxu0 %v1192
    %1256 = vmatmul.bf16.gmra.mxu0 %v1227
    %v1257 = vpop.f32.mrf.mxu0
    %v1258 = vadd.f32 %v1245, %v1257
    %v1259 = vpop.f32.mrf.mxu0
    %1260 = vdwg.mxu0
    %1261 = vmatpush.bf16.msra.mxu0 %v1191
    %1262 = vmatpush.bf16.msra.mxu0 %v1189
    %1263 = vmatpush.bf16.msra.mxu0 %v1187
    %1264 = vmatpush.bf16.msra.mxu0 %v1185
    %1265 = vmatpush.bf16.msra.mxu0 %v1183
    %1266 = vmatpush.bf16.msra.mxu0 %v1181
    %1267 = vmatpush.bf16.msra.mxu0 %v1179
    %1268 = vmatpush.bf16.msra.mxu0 %v1177
    %1269 = vmatmul.bf16.gmra.mxu0 %v1066
    %v1270 = vpop.f32.mrf.mxu0
    %v1271 = vadd.f32 %v1098, %v1270
    %v1272 = vpop.f32.mrf.mxu0
    %1273 = vdwg.mxu0
    %1274 = vmatpush.bf16.msra.mxu0 0
    %1275 = vmatpush.bf16.msra.mxu0 0
    %1276 = vmatpush.bf16.msra.mxu0 0
    %1277 = vmatpush.bf16.msra.mxu0 %v1233
    %1278 = vmatpush.bf16.msra.mxu0 %v1199
    %1279 = vmatpush.bf16.msra.mxu0 %v1197
    %1280 = vmatpush.bf16.msra.mxu0 %v1195
    %1281 = vmatpush.bf16.msra.mxu0 %v1193
    %1282 = vmatmul.bf16.gmra.mxu0 %v1227
    %v1283 = vpop.f32.mrf.mxu0
    %v1284 = vadd.f32 %v1271, %v1283
    %v1285 = vpop.f32.mrf.mxu0
    %1286 = vdwg.mxu0
    %v1287 = vmax.f32 %v1258, 0.0
    %v1288 = vmax.f32 %v1284, 0.0
    %v1289 = vperm.slane %v817, 1
    %v1290 = vperm.slane %v818, 1
    %v1291 = vmul.f32 %v1287, %v1289
    %v1292 = vmul.f32 %v1288, %v1290
    %v1293 = vsel %vm528, %v1292, 0.0
    %v1294 = vadd.f32 %v1291, %v1293
    %1295 = vadd.xlane.f32.xlu0 %v1294
    %v1296 = vpop.xlane.xlu0 %1295
    %v1297 = vld [vmem:[%s6 + $0x1] sm:$0x1]
    %v1298 = vperm.slane %v1297, 0
    %v1299 = vadd.f32 %v1296, %v1298
    %v1300 = vpack.c.bf16 %v364, %v364
    %s1301 = scalar_lea.vmem [#allocation8], 400
    %v1302 = vld [vmem:[%s1301] sm:$0xff]
    %v1303 = vld [vmem:[%s1301 + $0x8] sm:$0xff]
    %v1304 = vld [vmem:[%s1301 + $0x10] sm:$0xff]
    %v1305 = vld [vmem:[%s1301 + $0x18] sm:$0xff]
    %v1306 = vld [vmem:[%s1301 + $0x20] sm:$0xff]
    %v1307 = vld [vmem:[%s1301 + $0x28] sm:$0xff]
    %v1308 = vld [vmem:[%s1301 + $0x30] sm:$0xff]
    %v1309 = vld [vmem:[%s1301 + $0x38] sm:$0xff]
    %v1310 = vld [vmem:[%s1301 + $0x40] sm:$0xff]
    %v1311 = vld [vmem:[%s1301 + $0x48] sm:$0xff]
    %v1312 = vld [vmem:[%s1301 + $0x50] sm:$0xff]
    %v1313 = vld [vmem:[%s1301 + $0x58] sm:$0xff]
    %v1314 = vld [vmem:[%s1301 + $0x60] sm:$0xff]
    %v1315 = vld [vmem:[%s1301 + $0x68] sm:$0xff]
    %v1316 = vld [vmem:[%s1301 + $0x70] sm:$0xff]
    %v1317 = vld [vmem:[%s1301 + $0x78] sm:$0xff]
    %v1318 = vld [vmem:[%s1301 + $0x80] sm:$0xff]
    %v1319 = vld [vmem:[%s1301 + $0x88] sm:$0xff]
    %v1320 = vld [vmem:[%s1301 + $0x90] sm:$0xff]
    %v1321 = vld [vmem:[%s1301 + $0x98] sm:$0xff]
    %v1322 = vld [vmem:[%s1301 + $0xa0] sm:$0xff]
    %v1323 = vld [vmem:[%s1301 + $0xa8] sm:$0xff]
    %v1324 = vld [vmem:[%s1301 + $0xb0] sm:$0xff]
    %v1325 = vld [vmem:[%s1301 + $0xb8] sm:$0xff]
    %v1326 = vld [vmem:[%s1301 + $0xc0] sm:$0xff]
    %s1327 = scalar_lea.vmem [#allocation10], 4
    %v1328 = vld [vmem:[%s1327] sm:$0x3]
    %v1330 = vperm.slane %v1328, 0
    %v1331 = vperm.slane %v1328, 1
    %1335 = vrot.lane.b32.xlu0 %v831, 112
    %v1336 = vpop.permute.xlu0 %1335
    %1337 = vrot.lane.b32.xlu0 %v1300, 112
    %v1338 = vpop.permute.xlu0 %1337
    %vm1339 = vcmask 916480
    %v1340 = vsel %vm1339, %v1336, %v1338
    %v1367 = vunpack.c.l.b16 %v1302
    %v1368 = vunpack.c.h.b16 %v1302
    %v1369 = vunpack.c.l.b16 %v1303
    %v1370 = vunpack.c.h.b16 %v1303
    %v1371 = vunpack.c.l.b16 %v1304
    %v1372 = vunpack.c.h.b16 %v1304
    %v1373 = vunpack.c.l.b16 %v1305
    %v1374 = vunpack.c.h.b16 %v1305
    %v1375 = vunpack.c.l.b16 %v1306
    %v1376 = vunpack.c.h.b16 %v1306
    %v1377 = vunpack.c.l.b16 %v1307
    %v1378 = vunpack.c.h.b16 %v1307
    %v1379 = vunpack.c.l.b16 %v1308
    %v1380 = vunpack.c.h.b16 %v1308
    %v1381 = vunpack.c.l.b16 %v1309
    %v1382 = vunpack.c.h.b16 %v1309
    %v1383 = vunpack.c.l.b16 %v1310
    %v1384 = vunpack.c.h.b16 %v1310
    %v1385 = vunpack.c.l.b16 %v1311
    %v1386 = vunpack.c.h.b16 %v1311
    %v1387 = vunpack.c.l.b16 %v1312
    %v1388 = vunpack.c.h.b16 %v1312
    %v1389 = vunpack.c.l.b16 %v1313
    %v1390 = vunpack.c.h.b16 %v1313
    %v1391 = vunpack.c.l.b16 %v1314
    %v1392 = vunpack.c.h.b16 %v1314
    %v1393 = vunpack.c.l.b16 %v1315
    %v1394 = vunpack.c.h.b16 %v1315
    %v1395 = vunpack.c.l.b16 %v1316
    %v1396 = vunpack.c.h.b16 %v1316
    %v1397 = vunpack.c.l.b16 %v1317
    %v1398 = vunpack.c.h.b16 %v1317
    %v1399 = vunpack.c.l.b16 %v1318
    %v1400 = vunpack.c.h.b16 %v1318
    %v1401 = vunpack.c.l.b16 %v1319
    %v1402 = vunpack.c.h.b16 %v1319
    %v1403 = vunpack.c.l.b16 %v1320
    %v1404 = vunpack.c.h.b16 %v1320
    %v1405 = vunpack.c.l.b16 %v1321
    %v1406 = vunpack.c.h.b16 %v1321
    %v1407 = vunpack.c.l.b16 %v1322
    %v1408 = vunpack.c.h.b16 %v1322
    %v1409 = vunpack.c.l.b16 %v1323
    %v1410 = vunpack.c.h.b16 %v1323
    %v1411 = vunpack.c.l.b16 %v1324
    %v1412 = vunpack.c.h.b16 %v1324
    %v1413 = vunpack.c.l.b16 %v1325
    %v1414 = vunpack.c.h.b16 %v1325
    %v1415 = vunpack.c.l.b16 %v1326
    %v1416 = vunpack.c.h.b16 %v1326
    %v1417 = vpack.c.b16 %v1369, %v1367
    %v1418 = vpack.c.b16 %v1370, %v1368
    %v1419 = vpack.c.b16 %v1373, %v1371
    %v1420 = vpack.c.b16 %v1374, %v1372
    %v1421 = vpack.c.b16 %v1377, %v1375
    %v1422 = vpack.c.b16 %v1378, %v1376
    %v1423 = vpack.c.b16 %v1381, %v1379
    %v1424 = vpack.c.b16 %v1382, %v1380
    %v1425 = vpack.c.b16 %v1385, %v1383
    %v1426 = vpack.c.b16 %v1386, %v1384
    %v1427 = vpack.c.b16 %v1389, %v1387
    %v1428 = vpack.c.b16 %v1390, %v1388
    %v1429 = vpack.c.b16 %v1393, %v1391
    %v1430 = vpack.c.b16 %v1394, %v1392
    %v1431 = vpack.c.b16 %v1397, %v1395
    %v1432 = vpack.c.b16 %v1398, %v1396
    %v1433 = vpack.c.b16 %v1401, %v1399
    %v1434 = vpack.c.b16 %v1402, %v1400
    %v1435 = vpack.c.b16 %v1405, %v1403
    %v1436 = vpack.c.b16 %v1406, %v1404
    %v1437 = vpack.c.b16 %v1409, %v1407
    %v1438 = vpack.c.b16 %v1410, %v1408
    %v1439 = vpack.c.b16 %v1413, %v1411
    %v1440 = vpack.c.b16 %v1414, %v1412
    %v1441 = vpack.c.b16 %v1415, %v1415
    %v1442 = vpack.c.b16 %v1416, %v1416
    %v1468 = vsel %vm528, %v1338, 0
    %v1471 = vsel %vm532, %v1441, 0
    %v1474 = vsel %vm532, %v1442, 0
    %1476 = vmatpush.bf16.msra.mxu0 %v1431
    %1477 = vmatpush.bf16.msra.mxu0 %v1429
    %1478 = vmatpush.bf16.msra.mxu0 %v1427
    %1479 = vmatpush.bf16.msra.mxu0 %v1425
    %1480 = vmatpush.bf16.msra.mxu0 %v1423
    %1481 = vmatpush.bf16.msra.mxu0 %v1421
    %1482 = vmatpush.bf16.msra.mxu0 %v1419
    %1483 = vmatpush.bf16.msra.mxu0 %v1417
    %1484 = vmatmul.bf16.gmra.mxu0 %v1340
    %v1485 = vpop.f32.mrf.mxu0
    %v1486 = vadd.f32 %v1330, %v1485
    %v1487 = vpop.f32.mrf.mxu0
    %1488 = vdwg.mxu0
    %1489 = vmatpush.bf16.msra.mxu0 0
    %1490 = vmatpush.bf16.msra.mxu0 0
    %1491 = vmatpush.bf16.msra.mxu0 0
    %1492 = vmatpush.bf16.msra.mxu0 %v1471
    %1493 = vmatpush.bf16.msra.mxu0 %v1439
    %1494 = vmatpush.bf16.msra.mxu0 %v1437
    %1495 = vmatpush.bf16.msra.mxu0 %v1435
    %1496 = vmatpush.bf16.msra.mxu0 %v1433
    %1497 = vmatmul.bf16.gmra.mxu0 %v1468
    %v1498 = vpop.f32.mrf.mxu0
    %v1499 = vadd.f32 %v1486, %v1498
    %v1500 = vpop.f32.mrf.mxu0
    %1501 = vdwg.mxu0
    %1502 = vmatpush.bf16.msra.mxu0 %v1432
    %1503 = vmatpush.bf16.msra.mxu0 %v1430
    %1504 = vmatpush.bf16.msra.mxu0 %v1428
    %1505 = vmatpush.bf16.msra.mxu0 %v1426
    %1506 = vmatpush.bf16.msra.mxu0 %v1424
    %1507 = vmatpush.bf16.msra.mxu0 %v1422
    %1508 = vmatpush.bf16.msra.mxu0 %v1420
    %1509 = vmatpush.bf16.msra.mxu0 %v1418
    %1510 = vmatmul.bf16.gmra.mxu0 %v1340
    %v1511 = vpop.f32.mrf.mxu0
    %v1512 = vadd.f32 %v1331, %v1511
    %v1513 = vpop.f32.mrf.mxu0
    %1514 = vdwg.mxu0
    %1515 = vmatpush.bf16.msra.mxu0 0
    %1516 = vmatpush.bf16.msra.mxu0 0
    %1517 = vmatpush.bf16.msra.mxu0 0
    %1518 = vmatpush.bf16.msra.mxu0 %v1474
    %1519 = vmatpush.bf16.msra.mxu0 %v1440
    %1520 = vmatpush.bf16.msra.mxu0 %v1438
    %1521 = vmatpush.bf16.msra.mxu0 %v1436
    %1522 = vmatpush.bf16.msra.mxu0 %v1434
    %1523 = vmatmul.bf16.gmra.mxu0 %v1468
    %v1524 = vpop.f32.mrf.mxu0
    %v1525 = vadd.f32 %v1512, %v1524
    %v1526 = vpop.f32.mrf.mxu0
    %1527 = vdwg.mxu0
    %v1528 = vmax.f32 %v1499, 0.0
    %v1529 = vmax.f32 %v1525, 0.0
    %v1530 = vpack.c.bf16 %v1528, %v1528
    %v1531 = vpack.c.bf16 %v1529, %v1529
    %s1532 = scalar_lea.vmem [#allocation8], 1600
    %v1533 = vld [vmem:[%s1532] sm:$0xff]
    %v1534 = vld [vmem:[%s1532 + $0x8] sm:$0xff]
    %v1535 = vld [vmem:[%s1532 + $0x10] sm:$0xff]
    %v1536 = vld [vmem:[%s1532 + $0x18] sm:$0xff]
    %v1537 = vld [vmem:[%s1532 + $0x20] sm:$0xff]
    %v1538 = vld [vmem:[%s1532 + $0x28] sm:$0xff]
    %v1539 = vld [vmem:[%s1532 + $0x30] sm:$0xff]
    %v1540 = vld [vmem:[%s1532 + $0x38] sm:$0xff]
    %v1541 = vld [vmem:[%s1532 + $0x40] sm:$0xff]
    %v1542 = vld [vmem:[%s1532 + $0x48] sm:$0xff]
    %v1543 = vld [vmem:[%s1532 + $0x50] sm:$0xff]
    %v1544 = vld [vmem:[%s1532 + $0x58] sm:$0xff]
    %v1545 = vld [vmem:[%s1532 + $0x60] sm:$0xff]
    %v1546 = vld [vmem:[%s1532 + $0x68] sm:$0xff]
    %v1547 = vld [vmem:[%s1532 + $0x70] sm:$0xff]
    %v1548 = vld [vmem:[%s1532 + $0x78] sm:$0xff]
    %v1549 = vld [vmem:[%s1532 + $0x80] sm:$0xff]
    %v1550 = vld [vmem:[%s1532 + $0x88] sm:$0xff]
    %v1551 = vld [vmem:[%s1532 + $0x90] sm:$0xff]
    %v1552 = vld [vmem:[%s1532 + $0x98] sm:$0xff]
    %v1553 = vld [vmem:[%s1532 + $0xa0] sm:$0xff]
    %v1554 = vld [vmem:[%s1532 + $0xa8] sm:$0xff]
    %v1555 = vld [vmem:[%s1532 + $0xb0] sm:$0xff]
    %v1556 = vld [vmem:[%s1532 + $0xb8] sm:$0xff]
    %v1557 = vld [vmem:[%s1532 + $0xc0] sm:$0xff]
    %s1558 = scalar_lea.vmem [#allocation10], 16
    %v1559 = vld [vmem:[%s1558] sm:$0x3]
    %v1561 = vperm.slane %v1559, 0
    %v1562 = vperm.slane %v1559, 1
    %v1590 = vunpack.c.l.b16 %v1533
    %v1591 = vunpack.c.h.b16 %v1533
    %v1592 = vunpack.c.l.b16 %v1534
    %v1593 = vunpack.c.h.b16 %v1534
    %v1594 = vunpack.c.l.b16 %v1535
    %v1595 = vunpack.c.h.b16 %v1535
    %v1596 = vunpack.c.l.b16 %v1536
    %v1597 = vunpack.c.h.b16 %v1536
    %v1598 = vunpack.c.l.b16 %v1537
    %v1599 = vunpack.c.h.b16 %v1537
    %v1600 = vunpack.c.l.b16 %v1538
    %v1601 = vunpack.c.h.b16 %v1538
    %v1602 = vunpack.c.l.b16 %v1539
    %v1603 = vunpack.c.h.b16 %v1539
    %v1604 = vunpack.c.l.b16 %v1540
    %v1605 = vunpack.c.h.b16 %v1540
    %v1606 = vunpack.c.l.b16 %v1541
    %v1607 = vunpack.c.h.b16 %v1541
    %v1608 = vunpack.c.l.b16 %v1542
    %v1609 = vunpack.c.h.b16 %v1542
    %v1610 = vunpack.c.l.b16 %v1543
    %v1611 = vunpack.c.h.b16 %v1543
    %v1612 = vunpack.c.l.b16 %v1544
    %v1613 = vunpack.c.h.b16 %v1544
    %v1614 = vunpack.c.l.b16 %v1545
    %v1615 = vunpack.c.h.b16 %v1545
    %v1616 = vunpack.c.l.b16 %v1546
    %v1617 = vunpack.c.h.b16 %v1546
    %v1618 = vunpack.c.l.b16 %v1547
    %v1619 = vunpack.c.h.b16 %v1547
    %v1620 = vunpack.c.l.b16 %v1548
    %v1621 = vunpack.c.h.b16 %v1548
    %v1622 = vunpack.c.l.b16 %v1549
    %v1623 = vunpack.c.h.b16 %v1549
    %v1624 = vunpack.c.l.b16 %v1550
    %v1625 = vunpack.c.h.b16 %v1550
    %v1626 = vunpack.c.l.b16 %v1551
    %v1627 = vunpack.c.h.b16 %v1551
    %v1628 = vunpack.c.l.b16 %v1552
    %v1629 = vunpack.c.h.b16 %v1552
    %v1630 = vunpack.c.l.b16 %v1553
    %v1631 = vunpack.c.h.b16 %v1553
    %v1632 = vunpack.c.l.b16 %v1554
    %v1633 = vunpack.c.h.b16 %v1554
    %v1634 = vunpack.c.l.b16 %v1555
    %v1635 = vunpack.c.h.b16 %v1555
    %v1636 = vunpack.c.l.b16 %v1556
    %v1637 = vunpack.c.h.b16 %v1556
    %v1638 = vunpack.c.l.b16 %v1557
    %v1639 = vunpack.c.h.b16 %v1557
    %v1640 = vpack.c.b16 %v1592, %v1590
    %v1641 = vpack.c.b16 %v1593, %v1591
    %v1642 = vpack.c.b16 %v1596, %v1594
    %v1643 = vpack.c.b16 %v1597, %v1595
    %v1644 = vpack.c.b16 %v1600, %v1598
    %v1645 = vpack.c.b16 %v1601, %v1599
    %v1646 = vpack.c.b16 %v1604, %v1602
    %v1647 = vpack.c.b16 %v1605, %v1603
    %v1648 = vpack.c.b16 %v1608, %v1606
    %v1649 = vpack.c.b16 %v1609, %v1607
    %v1650 = vpack.c.b16 %v1612, %v1610
    %v1651 = vpack.c.b16 %v1613, %v1611
    %v1652 = vpack.c.b16 %v1616, %v1614
    %v1653 = vpack.c.b16 %v1617, %v1615
    %v1654 = vpack.c.b16 %v1620, %v1618
    %v1655 = vpack.c.b16 %v1621, %v1619
    %v1656 = vpack.c.b16 %v1624, %v1622
    %v1657 = vpack.c.b16 %v1625, %v1623
    %v1658 = vpack.c.b16 %v1628, %v1626
    %v1659 = vpack.c.b16 %v1629, %v1627
    %v1660 = vpack.c.b16 %v1632, %v1630
    %v1661 = vpack.c.b16 %v1633, %v1631
    %v1662 = vpack.c.b16 %v1636, %v1634
    %v1663 = vpack.c.b16 %v1637, %v1635
    %v1664 = vpack.c.b16 %v1638, %v1638
    %v1665 = vpack.c.b16 %v1639, %v1639
    %v1691 = vsel %vm528, %v1531, 0
    %v1694 = vsel %vm532, %v1664, 0
    %v1697 = vsel %vm532, %v1665, 0
    %1699 = vmatpush.bf16.msra.mxu0 %v1654
    %1700 = vmatpush.bf16.msra.mxu0 %v1652
    %1701 = vmatpush.bf16.msra.mxu0 %v1650
    %1702 = vmatpush.bf16.msra.mxu0 %v1648
    %1703 = vmatpush.bf16.msra.mxu0 %v1646
    %1704 = vmatpush.bf16.msra.mxu0 %v1644
    %1705 = vmatpush.bf16.msra.mxu0 %v1642
    %1706 = vmatpush.bf16.msra.mxu0 %v1640
    %1707 = vmatmul.bf16.gmra.mxu0 %v1530
    %v1708 = vpop.f32.mrf.mxu0
    %v1709 = vadd.f32 %v1561, %v1708
    %v1710 = vpop.f32.mrf.mxu0
    %1711 = vdwg.mxu0
    %1712 = vmatpush.bf16.msra.mxu0 0
    %1713 = vmatpush.bf16.msra.mxu0 0
    %1714 = vmatpush.bf16.msra.mxu0 0
    %1715 = vmatpush.bf16.msra.mxu0 %v1694
    %1716 = vmatpush.bf16.msra.mxu0 %v1662
    %1717 = vmatpush.bf16.msra.mxu0 %v1660
    %1718 = vmatpush.bf16.msra.mxu0 %v1658
    %1719 = vmatpush.bf16.msra.mxu0 %v1656
    %1720 = vmatmul.bf16.gmra.mxu0 %v1691
    %v1721 = vpop.f32.mrf.mxu0
    %v1722 = vadd.f32 %v1709, %v1721
    %v1723 = vpop.f32.mrf.mxu0
    %1724 = vdwg.mxu0
    %1725 = vmatpush.bf16.msra.mxu0 %v1655
    %1726 = vmatpush.bf16.msra.mxu0 %v1653
    %1727 = vmatpush.bf16.msra.mxu0 %v1651
    %1728 = vmatpush.bf16.msra.mxu0 %v1649
    %1729 = vmatpush.bf16.msra.mxu0 %v1647
    %1730 = vmatpush.bf16.msra.mxu0 %v1645
    %1731 = vmatpush.bf16.msra.mxu0 %v1643
    %1732 = vmatpush.bf16.msra.mxu0 %v1641
    %1733 = vmatmul.bf16.gmra.mxu0 %v1530
    %v1734 = vpop.f32.mrf.mxu0
    %v1735 = vadd.f32 %v1562, %v1734
    %v1736 = vpop.f32.mrf.mxu0
    %1737 = vdwg.mxu0
    %1738 = vmatpush.bf16.msra.mxu0 0
    %1739 = vmatpush.bf16.msra.mxu0 0
    %1740 = vmatpush.bf16.msra.mxu0 0
    %1741 = vmatpush.bf16.msra.mxu0 %v1697
    %1742 = vmatpush.bf16.msra.mxu0 %v1663
    %1743 = vmatpush.bf16.msra.mxu0 %v1661
    %1744 = vmatpush.bf16.msra.mxu0 %v1659
    %1745 = vmatpush.bf16.msra.mxu0 %v1657
    %1746 = vmatmul.bf16.gmra.mxu0 %v1691
    %v1747 = vpop.f32.mrf.mxu0
    %v1748 = vadd.f32 %v1735, %v1747
    %v1749 = vpop.f32.mrf.mxu0
    %1750 = vdwg.mxu0
    %v1751 = vmax.f32 %v1722, 0.0
    %v1752 = vmax.f32 %v1748, 0.0
    %v1753 = vld [vmem:[#allocation11] sm:$0x22]
    %v1754 = vunpack.c.l.bf16 %v1753
    %v1755 = vunpack.c.h.bf16 %v1753
    %v1756 = vperm.slane %v1754, 2
    %v1757 = vperm.slane %v1755, 2
    %v1758 = vmul.f32 %v1751, %v1756
    %v1759 = vmul.f32 %v1752, %v1757
    %v1760 = vsel %vm528, %v1759, 0.0
    %v1761 = vadd.f32 %v1758, %v1760
    %1762 = vadd.xlane.f32.xlu0 %v1761
    %v1763 = vpop.xlane.xlu0 %1762
    %v1764 = vld [vmem:[%s6 + $0x2] sm:$0x1]
    %v1765 = vperm.slane %v1764, 0
    %v1766 = vadd.f32 %v1763, %v1765
    %v1767 = vpack.c.bf16 %v365, %v365
    %v1768 = vpack.c.bf16 %v366, %v366
    %s1769 = scalar_lea.vmem [#allocation8], 600
    %v1770 = vld [vmem:[%s1769] sm:$0xff]
    %v1771 = vld [vmem:[%s1769 + $0x8] sm:$0xff]
    %v1772 = vld [vmem:[%s1769 + $0x10] sm:$0xff]
    %v1773 = vld [vmem:[%s1769 + $0x18] sm:$0xff]
    %v1774 = vld [vmem:[%s1769 + $0x20] sm:$0xff]
    %v1775 = vld [vmem:[%s1769 + $0x28] sm:$0xff]
    %v1776 = vld [vmem:[%s1769 + $0x30] sm:$0xff]
    %v1777 = vld [vmem:[%s1769 + $0x38] sm:$0xff]
    %v1778 = vld [vmem:[%s1769 + $0x40] sm:$0xff]
    %v1779 = vld [vmem:[%s1769 + $0x48] sm:$0xff]
    %v1780 = vld [vmem:[%s1769 + $0x50] sm:$0xff]
    %v1781 = vld [vmem:[%s1769 + $0x58] sm:$0xff]
    %v1782 = vld [vmem:[%s1769 + $0x60] sm:$0xff]
    %v1783 = vld [vmem:[%s1769 + $0x68] sm:$0xff]
    %v1784 = vld [vmem:[%s1769 + $0x70] sm:$0xff]
    %v1785 = vld [vmem:[%s1769 + $0x78] sm:$0xff]
    %v1786 = vld [vmem:[%s1769 + $0x80] sm:$0xff]
    %v1787 = vld [vmem:[%s1769 + $0x88] sm:$0xff]
    %v1788 = vld [vmem:[%s1769 + $0x90] sm:$0xff]
    %v1789 = vld [vmem:[%s1769 + $0x98] sm:$0xff]
    %v1790 = vld [vmem:[%s1769 + $0xa0] sm:$0xff]
    %v1791 = vld [vmem:[%s1769 + $0xa8] sm:$0xff]
    %v1792 = vld [vmem:[%s1769 + $0xb0] sm:$0xff]
    %v1793 = vld [vmem:[%s1769 + $0xb8] sm:$0xff]
    %v1794 = vld [vmem:[%s1769 + $0xc0] sm:$0xff]
    %s1795 = scalar_lea.vmem [#allocation10], 6
    %v1796 = vld [vmem:[%s1795] sm:$0x3]
    %v1798 = vperm.slane %v1796, 0
    %v1799 = vperm.slane %v1796, 1
    %1804 = vrot.lane.b32.xlu0 %v1300, 40
    %v1805 = vpop.permute.xlu0 %1804
    %1806 = vrot.lane.b32.xlu0 %v1767, 40
    %v1807 = vpop.permute.xlu0 %1806
    %1808 = vrot.lane.b32.xlu0 %v1768, 40
    %v1809 = vpop.permute.xlu0 %1808
    %vm1810 = vcmask 326656
    %v1811 = vsel %vm1810, %v1805, %v1807
    %v1812 = vsel %vm1810, %v1807, %v1809
    %v1839 = vunpack.c.l.b16 %v1770
    %v1840 = vunpack.c.h.b16 %v1770
    %v1841 = vunpack.c.l.b16 %v1771
    %v1842 = vunpack.c.h.b16 %v1771
    %v1843 = vunpack.c.l.b16 %v1772
    %v1844 = vunpack.c.h.b16 %v1772
    %v1845 = vunpack.c.l.b16 %v1773
    %v1846 = vunpack.c.h.b16 %v1773
    %v1847 = vunpack.c.l.b16 %v1774
    %v1848 = vunpack.c.h.b16 %v1774
    %v1849 = vunpack.c.l.b16 %v1775
    %v1850 = vunpack.c.h.b16 %v1775
    %v1851 = vunpack.c.l.b16 %v1776
    %v1852 = vunpack.c.h.b16 %v1776
    %v1853 = vunpack.c.l.b16 %v1777
    %v1854 = vunpack.c.h.b16 %v1777
    %v1855 = vunpack.c.l.b16 %v1778
    %v1856 = vunpack.c.h.b16 %v1778
    %v1857 = vunpack.c.l.b16 %v1779
    %v1858 = vunpack.c.h.b16 %v1779
    %v1859 = vunpack.c.l.b16 %v1780
    %v1860 = vunpack.c.h.b16 %v1780
    %v1861 = vunpack.c.l.b16 %v1781
    %v1862 = vunpack.c.h.b16 %v1781
    %v1863 = vunpack.c.l.b16 %v1782
    %v1864 = vunpack.c.h.b16 %v1782
    %v1865 = vunpack.c.l.b16 %v1783
    %v1866 = vunpack.c.h.b16 %v1783
    %v1867 = vunpack.c.l.b16 %v1784
    %v1868 = vunpack.c.h.b16 %v1784
    %v1869 = vunpack.c.l.b16 %v1785
    %v1870 = vunpack.c.h.b16 %v1785
    %v1871 = vunpack.c.l.b16 %v1786
    %v1872 = vunpack.c.h.b16 %v1786
    %v1873 = vunpack.c.l.b16 %v1787
    %v1874 = vunpack.c.h.b16 %v1787
    %v1875 = vunpack.c.l.b16 %v1788
    %v1876 = vunpack.c.h.b16 %v1788
    %v1877 = vunpack.c.l.b16 %v1789
    %v1878 = vunpack.c.h.b16 %v1789
    %v1879 = vunpack.c.l.b16 %v1790
    %v1880 = vunpack.c.h.b16 %v1790
    %v1881 = vunpack.c.l.b16 %v1791
    %v1882 = vunpack.c.h.b16 %v1791
    %v1883 = vunpack.c.l.b16 %v1792
    %v1884 = vunpack.c.h.b16 %v1792
    %v1885 = vunpack.c.l.b16 %v1793
    %v1886 = vunpack.c.h.b16 %v1793
    %v1887 = vunpack.c.l.b16 %v1794
    %v1888 = vunpack.c.h.b16 %v1794
    %v1889 = vpack.c.b16 %v1841, %v1839
    %v1890 = vpack.c.b16 %v1842, %v1840
    %v1891 = vpack.c.b16 %v1845, %v1843
    %v1892 = vpack.c.b16 %v1846, %v1844
    %v1893 = vpack.c.b16 %v1849, %v1847
    %v1894 = vpack.c.b16 %v1850, %v1848
    %v1895 = vpack.c.b16 %v1853, %v1851
    %v1896 = vpack.c.b16 %v1854, %v1852
    %v1897 = vpack.c.b16 %v1857, %v1855
    %v1898 = vpack.c.b16 %v1858, %v1856
    %v1899 = vpack.c.b16 %v1861, %v1859
    %v1900 = vpack.c.b16 %v1862, %v1860
    %v1901 = vpack.c.b16 %v1865, %v1863
    %v1902 = vpack.c.b16 %v1866, %v1864
    %v1903 = vpack.c.b16 %v1869, %v1867
    %v1904 = vpack.c.b16 %v1870, %v1868
    %v1905 = vpack.c.b16 %v1873, %v1871
    %v1906 = vpack.c.b16 %v1874, %v1872
    %v1907 = vpack.c.b16 %v1877, %v1875
    %v1908 = vpack.c.b16 %v1878, %v1876
    %v1909 = vpack.c.b16 %v1881, %v1879
    %v1910 = vpack.c.b16 %v1882, %v1880
    %v1911 = vpack.c.b16 %v1885, %v1883
    %v1912 = vpack.c.b16 %v1886, %v1884
    %v1913 = vpack.c.b16 %v1887, %v1887
    %v1914 = vpack.c.b16 %v1888, %v1888
    %v1940 = vsel %vm528, %v1812, 0
    %v1943 = vsel %vm532, %v1913, 0
    %v1946 = vsel %vm532, %v1914, 0
    %1948 = vmatpush.bf16.msra.mxu0 %v1903
    %1949 = vmatpush.bf16.msra.mxu0 %v1901
    %1950 = vmatpush.bf16.msra.mxu0 %v1899
    %1951 = vmatpush.bf16.msra.mxu0 %v1897
    %1952 = vmatpush.bf16.msra.mxu0 %v1895
    %1953 = vmatpush.bf16.msra.mxu0 %v1893
    %1954 = vmatpush.bf16.msra.mxu0 %v1891
    %1955 = vmatpush.bf16.msra.mxu0 %v1889
    %1956 = vmatmul.bf16.gmra.mxu0 %v1811
    %v1957 = vpop.f32.mrf.mxu0
    %v1958 = vadd.f32 %v1798, %v1957
    %v1959 = vpop.f32.mrf.mxu0
    %1960 = vdwg.mxu0
    %1961 = vmatpush.bf16.msra.mxu0 0
    %1962 = vmatpush.bf16.msra.mxu0 0
    %1963 = vmatpush.bf16.msra.mxu0 0
    %1964 = vmatpush.bf16.msra.mxu0 %v1943
    %1965 = vmatpush.bf16.msra.mxu0 %v1911
    %1966 = vmatpush.bf16.msra.mxu0 %v1909
    %1967 = vmatpush.bf16.msra.mxu0 %v1907
    %1968 = vmatpush.bf16.msra.mxu0 %v1905
    %1969 = vmatmul.bf16.gmra.mxu0 %v1940
    %v1970 = vpop.f32.mrf.mxu0
    %v1971 = vadd.f32 %v1958, %v1970
    %v1972 = vpop.f32.mrf.mxu0
    %1973 = vdwg.mxu0
    %1974 = vmatpush.bf16.msra.mxu0 %v1904
    %1975 = vmatpush.bf16.msra.mxu0 %v1902
    %1976 = vmatpush.bf16.msra.mxu0 %v1900
    %1977 = vmatpush.bf16.msra.mxu0 %v1898
    %1978 = vmatpush.bf16.msra.mxu0 %v1896
    %1979 = vmatpush.bf16.msra.mxu0 %v1894
    %1980 = vmatpush.bf16.msra.mxu0 %v1892
    %1981 = vmatpush.bf16.msra.mxu0 %v1890
    %1982 = vmatmul.bf16.gmra.mxu0 %v1811
    %v1983 = vpop.f32.mrf.mxu0
    %v1984 = vadd.f32 %v1799, %v1983
    %v1985 = vpop.f32.mrf.mxu0
    %1986 = vdwg.mxu0
    %1987 = vmatpush.bf16.msra.mxu0 0
    %1988 = vmatpush.bf16.msra.mxu0 0
    %1989 = vmatpush.bf16.msra.mxu0 0
    %1990 = vmatpush.bf16.msra.mxu0 %v1946
    %1991 = vmatpush.bf16.msra.mxu0 %v1912
    %1992 = vmatpush.bf16.msra.mxu0 %v1910
    %1993 = vmatpush.bf16.msra.mxu0 %v1908
    %1994 = vmatpush.bf16.msra.mxu0 %v1906
    %1995 = vmatmul.bf16.gmra.mxu0 %v1940
    %v1996 = vpop.f32.mrf.mxu0
    %v1997 = vadd.f32 %v1984, %v1996
    %v1998 = vpop.f32.mrf.mxu0
    %1999 = vdwg.mxu0
    %v2000 = vmax.f32 %v1971, 0.0
    %v2001 = vmax.f32 %v1997, 0.0
    %v2002 = vpack.c.bf16 %v2000, %v2000
    %v2003 = vpack.c.bf16 %v2001, %v2001
    %s2004 = scalar_lea.vmem [#allocation8], 1800
    %v2005 = vld [vmem:[%s2004] sm:$0xff]
    %v2006 = vld [vmem:[%s2004 + $0x8] sm:$0xff]
    %v2007 = vld [vmem:[%s2004 + $0x10] sm:$0xff]
    %v2008 = vld [vmem:[%s2004 + $0x18] sm:$0xff]
    %v2009 = vld [vmem:[%s2004 + $0x20] sm:$0xff]
    %v2010 = vld [vmem:[%s2004 + $0x28] sm:$0xff]
    %v2011 = vld [vmem:[%s2004 + $0x30] sm:$0xff]
    %v2012 = vld [vmem:[%s2004 + $0x38] sm:$0xff]
    %v2013 = vld [vmem:[%s2004 + $0x40] sm:$0xff]
    %v2014 = vld [vmem:[%s2004 + $0x48] sm:$0xff]
    %v2015 = vld [vmem:[%s2004 + $0x50] sm:$0xff]
    %v2016 = vld [vmem:[%s2004 + $0x58] sm:$0xff]
    %v2017 = vld [vmem:[%s2004 + $0x60] sm:$0xff]
    %v2018 = vld [vmem:[%s2004 + $0x68] sm:$0xff]
    %v2019 = vld [vmem:[%s2004 + $0x70] sm:$0xff]
    %v2020 = vld [vmem:[%s2004 + $0x78] sm:$0xff]
    %v2021 = vld [vmem:[%s2004 + $0x80] sm:$0xff]
    %v2022 = vld [vmem:[%s2004 + $0x88] sm:$0xff]
    %v2023 = vld [vmem:[%s2004 + $0x90] sm:$0xff]
    %v2024 = vld [vmem:[%s2004 + $0x98] sm:$0xff]
    %v2025 = vld [vmem:[%s2004 + $0xa0] sm:$0xff]
    %v2026 = vld [vmem:[%s2004 + $0xa8] sm:$0xff]
    %v2027 = vld [vmem:[%s2004 + $0xb0] sm:$0xff]
    %v2028 = vld [vmem:[%s2004 + $0xb8] sm:$0xff]
    %v2029 = vld [vmem:[%s2004 + $0xc0] sm:$0xff]
    %s2030 = scalar_lea.vmem [#allocation10], 18
    %v2031 = vld [vmem:[%s2030] sm:$0x3]
    %v2033 = vperm.slane %v2031, 0
    %v2034 = vperm.slane %v2031, 1
    %v2062 = vunpack.c.l.b16 %v2005
    %v2063 = vunpack.c.h.b16 %v2005
    %v2064 = vunpack.c.l.b16 %v2006
    %v2065 = vunpack.c.h.b16 %v2006
    %v2066 = vunpack.c.l.b16 %v2007
    %v2067 = vunpack.c.h.b16 %v2007
    %v2068 = vunpack.c.l.b16 %v2008
    %v2069 = vunpack.c.h.b16 %v2008
    %v2070 = vunpack.c.l.b16 %v2009
    %v2071 = vunpack.c.h.b16 %v2009
    %v2072 = vunpack.c.l.b16 %v2010
    %v2073 = vunpack.c.h.b16 %v2010
    %v2074 = vunpack.c.l.b16 %v2011
    %v2075 = vunpack.c.h.b16 %v2011
    %v2076 = vunpack.c.l.b16 %v2012
    %v2077 = vunpack.c.h.b16 %v2012
    %v2078 = vunpack.c.l.b16 %v2013
    %v2079 = vunpack.c.h.b16 %v2013
    %v2080 = vunpack.c.l.b16 %v2014
    %v2081 = vunpack.c.h.b16 %v2014
    %v2082 = vunpack.c.l.b16 %v2015
    %v2083 = vunpack.c.h.b16 %v2015
    %v2084 = vunpack.c.l.b16 %v2016
    %v2085 = vunpack.c.h.b16 %v2016
    %v2086 = vunpack.c.l.b16 %v2017
    %v2087 = vunpack.c.h.b16 %v2017
    %v2088 = vunpack.c.l.b16 %v2018
    %v2089 = vunpack.c.h.b16 %v2018
    %v2090 = vunpack.c.l.b16 %v2019
    %v2091 = vunpack.c.h.b16 %v2019
    %v2092 = vunpack.c.l.b16 %v2020
    %v2093 = vunpack.c.h.b16 %v2020
    %v2094 = vunpack.c.l.b16 %v2021
    %v2095 = vunpack.c.h.b16 %v2021
    %v2096 = vunpack.c.l.b16 %v2022
    %v2097 = vunpack.c.h.b16 %v2022
    %v2098 = vunpack.c.l.b16 %v2023
    %v2099 = vunpack.c.h.b16 %v2023
    %v2100 = vunpack.c.l.b16 %v2024
    %v2101 = vunpack.c.h.b16 %v2024
    %v2102 = vunpack.c.l.b16 %v2025
    %v2103 = vunpack.c.h.b16 %v2025
    %v2104 = vunpack.c.l.b16 %v2026
    %v2105 = vunpack.c.h.b16 %v2026
    %v2106 = vunpack.c.l.b16 %v2027
    %v2107 = vunpack.c.h.b16 %v2027
    %v2108 = vunpack.c.l.b16 %v2028
    %v2109 = vunpack.c.h.b16 %v2028
    %v2110 = vunpack.c.l.b16 %v2029
    %v2111 = vunpack.c.h.b16 %v2029
    %v2112 = vpack.c.b16 %v2064, %v2062
    %v2113 = vpack.c.b16 %v2065, %v2063
    %v2114 = vpack.c.b16 %v2068, %v2066
    %v2115 = vpack.c.b16 %v2069, %v2067
    %v2116 = vpack.c.b16 %v2072, %v2070
    %v2117 = vpack.c.b16 %v2073, %v2071
    %v2118 = vpack.c.b16 %v2076, %v2074
    %v2119 = vpack.c.b16 %v2077, %v2075
    %v2120 = vpack.c.b16 %v2080, %v2078
    %v2121 = vpack.c.b16 %v2081, %v2079
    %v2122 = vpack.c.b16 %v2084, %v2082
    %v2123 = vpack.c.b16 %v2085, %v2083
    %v2124 = vpack.c.b16 %v2088, %v2086
    %v2125 = vpack.c.b16 %v2089, %v2087
    %v2126 = vpack.c.b16 %v2092, %v2090
    %v2127 = vpack.c.b16 %v2093, %v2091
    %v2128 = vpack.c.b16 %v2096, %v2094
    %v2129 = vpack.c.b16 %v2097, %v2095
    %v2130 = vpack.c.b16 %v2100, %v2098
    %v2131 = vpack.c.b16 %v2101, %v2099
    %v2132 = vpack.c.b16 %v2104, %v2102
    %v2133 = vpack.c.b16 %v2105, %v2103
    %v2134 = vpack.c.b16 %v2108, %v2106
    %v2135 = vpack.c.b16 %v2109, %v2107
    %v2136 = vpack.c.b16 %v2110, %v2110
    %v2137 = vpack.c.b16 %v2111, %v2111
    %v2163 = vsel %vm528, %v2003, 0
    %v2166 = vsel %vm532, %v2136, 0
    %v2169 = vsel %vm532, %v2137, 0
    %2171 = vmatpush.bf16.msra.mxu0 %v2126
    %2172 = vmatpush.bf16.msra.mxu0 %v2124
    %2173 = vmatpush.bf16.msra.mxu0 %v2122
    %2174 = vmatpush.bf16.msra.mxu0 %v2120
    %2175 = vmatpush.bf16.msra.mxu0 %v2118
    %2176 = vmatpush.bf16.msra.mxu0 %v2116
    %2177 = vmatpush.bf16.msra.mxu0 %v2114
    %2178 = vmatpush.bf16.msra.mxu0 %v2112
    %2179 = vmatmul.bf16.gmra.mxu0 %v2002
    %v2180 = vpop.f32.mrf.mxu0
    %v2181 = vadd.f32 %v2033, %v2180
    %v2182 = vpop.f32.mrf.mxu0
    %2183 = vdwg.mxu0
    %2184 = vmatpush.bf16.msra.mxu0 0
    %2185 = vmatpush.bf16.msra.mxu0 0
    %2186 = vmatpush.bf16.msra.mxu0 0
    %2187 = vmatpush.bf16.msra.mxu0 %v2166
    %2188 = vmatpush.bf16.msra.mxu0 %v2134
    %2189 = vmatpush.bf16.msra.mxu0 %v2132
    %2190 = vmatpush.bf16.msra.mxu0 %v2130
    %2191 = vmatpush.bf16.msra.mxu0 %v2128
    %2192 = vmatmul.bf16.gmra.mxu0 %v2163
    %v2193 = vpop.f32.mrf.mxu0
    %v2194 = vadd.f32 %v2181, %v2193
    %v2195 = vpop.f32.mrf.mxu0
    %2196 = vdwg.mxu0
    %2197 = vmatpush.bf16.msra.mxu0 %v2127
    %2198 = vmatpush.bf16.msra.mxu0 %v2125
    %2199 = vmatpush.bf16.msra.mxu0 %v2123
    %2200 = vmatpush.bf16.msra.mxu0 %v2121
    %2201 = vmatpush.bf16.msra.mxu0 %v2119
    %2202 = vmatpush.bf16.msra.mxu0 %v2117
    %2203 = vmatpush.bf16.msra.mxu0 %v2115
    %2204 = vmatpush.bf16.msra.mxu0 %v2113
    %2205 = vmatmul.bf16.gmra.mxu0 %v2002
    %v2206 = vpop.f32.mrf.mxu0
    %v2207 = vadd.f32 %v2034, %v2206
    %v2208 = vpop.f32.mrf.mxu0
    %2209 = vdwg.mxu0
    %2210 = vmatpush.bf16.msra.mxu0 0
    %2211 = vmatpush.bf16.msra.mxu0 0
    %2212 = vmatpush.bf16.msra.mxu0 0
    %2213 = vmatpush.bf16.msra.mxu0 %v2169
    %2214 = vmatpush.bf16.msra.mxu0 %v2135
    %2215 = vmatpush.bf16.msra.mxu0 %v2133
    %2216 = vmatpush.bf16.msra.mxu0 %v2131
    %2217 = vmatpush.bf16.msra.mxu0 %v2129
    %2218 = vmatmul.bf16.gmra.mxu0 %v2163
    %v2219 = vpop.f32.mrf.mxu0
    %v2220 = vadd.f32 %v2207, %v2219
    %v2221 = vpop.f32.mrf.mxu0
    %2222 = vdwg.mxu0
    %v2223 = vmax.f32 %v2194, 0.0
    %v2224 = vmax.f32 %v2220, 0.0
    %v2225 = vperm.slane %v1754, 3
    %v2226 = vperm.slane %v1755, 3
    %v2227 = vmul.f32 %v2223, %v2225
    %v2228 = vmul.f32 %v2224, %v2226
    %v2229 = vsel %vm528, %v2228, 0.0
    %v2230 = vadd.f32 %v2227, %v2229
    %2231 = vadd.xlane.f32.xlu0 %v2230
    %v2232 = vpop.xlane.xlu0 %2231
    %v2233 = vld [vmem:[%s6 + $0x3] sm:$0x1]
    %v2234 = vperm.slane %v2233, 0
    %v2235 = vadd.f32 %v2232, %v2234
    %v2236 = vpack.c.bf16 %v367, %v367
    %s2237 = scalar_lea.vmem [#allocation8], 800
    %v2238 = vld [vmem:[%s2237] sm:$0xff]
    %v2239 = vld [vmem:[%s2237 + $0x8] sm:$0xff]
    %v2240 = vld [vmem:[%s2237 + $0x10] sm:$0xff]
    %v2241 = vld [vmem:[%s2237 + $0x18] sm:$0xff]
    %v2242 = vld [vmem:[%s2237 + $0x20] sm:$0xff]
    %v2243 = vld [vmem:[%s2237 + $0x28] sm:$0xff]
    %v2244 = vld [vmem:[%s2237 + $0x30] sm:$0xff]
    %v2245 = vld [vmem:[%s2237 + $0x38] sm:$0xff]
    %v2246 = vld [vmem:[%s2237 + $0x40] sm:$0xff]
    %v2247 = vld [vmem:[%s2237 + $0x48] sm:$0xff]
    %v2248 = vld [vmem:[%s2237 + $0x50] sm:$0xff]
    %v2249 = vld [vmem:[%s2237 + $0x58] sm:$0xff]
    %v2250 = vld [vmem:[%s2237 + $0x60] sm:$0xff]
    %v2251 = vld [vmem:[%s2237 + $0x68] sm:$0xff]
    %v2252 = vld [vmem:[%s2237 + $0x70] sm:$0xff]
    %v2253 = vld [vmem:[%s2237 + $0x78] sm:$0xff]
    %v2254 = vld [vmem:[%s2237 + $0x80] sm:$0xff]
    %v2255 = vld [vmem:[%s2237 + $0x88] sm:$0xff]
    %v2256 = vld [vmem:[%s2237 + $0x90] sm:$0xff]
    %v2257 = vld [vmem:[%s2237 + $0x98] sm:$0xff]
    %v2258 = vld [vmem:[%s2237 + $0xa0] sm:$0xff]
    %v2259 = vld [vmem:[%s2237 + $0xa8] sm:$0xff]
    %v2260 = vld [vmem:[%s2237 + $0xb0] sm:$0xff]
    %v2261 = vld [vmem:[%s2237 + $0xb8] sm:$0xff]
    %v2262 = vld [vmem:[%s2237 + $0xc0] sm:$0xff]
    %s2263 = scalar_lea.vmem [#allocation10], 8
    %v2264 = vld [vmem:[%s2263] sm:$0x3]
    %v2266 = vperm.slane %v2264, 0
    %v2267 = vperm.slane %v2264, 1
    %2271 = vrot.lane.b32.xlu0 %v1768, 96
    %v2272 = vpop.permute.xlu0 %2271
    %2273 = vrot.lane.b32.xlu0 %v2236, 96
    %v2274 = vpop.permute.xlu0 %2273
    %vm2275 = vcmask 785408
    %v2276 = vsel %vm2275, %v2272, %v2274
    %v2303 = vunpack.c.l.b16 %v2238
    %v2304 = vunpack.c.h.b16 %v2238
    %v2305 = vunpack.c.l.b16 %v2239
    %v2306 = vunpack.c.h.b16 %v2239
    %v2307 = vunpack.c.l.b16 %v2240
    %v2308 = vunpack.c.h.b16 %v2240
    %v2309 = vunpack.c.l.b16 %v2241
    %v2310 = vunpack.c.h.b16 %v2241
    %v2311 = vunpack.c.l.b16 %v2242
    %v2312 = vunpack.c.h.b16 %v2242
    %v2313 = vunpack.c.l.b16 %v2243
    %v2314 = vunpack.c.h.b16 %v2243
    %v2315 = vunpack.c.l.b16 %v2244
    %v2316 = vunpack.c.h.b16 %v2244
    %v2317 = vunpack.c.l.b16 %v2245
    %v2318 = vunpack.c.h.b16 %v2245
    %v2319 = vunpack.c.l.b16 %v2246
    %v2320 = vunpack.c.h.b16 %v2246
    %v2321 = vunpack.c.l.b16 %v2247
    %v2322 = vunpack.c.h.b16 %v2247
    %v2323 = vunpack.c.l.b16 %v2248
    %v2324 = vunpack.c.h.b16 %v2248
    %v2325 = vunpack.c.l.b16 %v2249
    %v2326 = vunpack.c.h.b16 %v2249
    %v2327 = vunpack.c.l.b16 %v2250
    %v2328 = vunpack.c.h.b16 %v2250
    %v2329 = vunpack.c.l.b16 %v2251
    %v2330 = vunpack.c.h.b16 %v2251
    %v2331 = vunpack.c.l.b16 %v2252
    %v2332 = vunpack.c.h.b16 %v2252
    %v2333 = vunpack.c.l.b16 %v2253
    %v2334 = vunpack.c.h.b16 %v2253
    %v2335 = vunpack.c.l.b16 %v2254
    %v2336 = vunpack.c.h.b16 %v2254
    %v2337 = vunpack.c.l.b16 %v2255
    %v2338 = vunpack.c.h.b16 %v2255
    %v2339 = vunpack.c.l.b16 %v2256
    %v2340 = vunpack.c.h.b16 %v2256
    %v2341 = vunpack.c.l.b16 %v2257
    %v2342 = vunpack.c.h.b16 %v2257
    %v2343 = vunpack.c.l.b16 %v2258
    %v2344 = vunpack.c.h.b16 %v2258
    %v2345 = vunpack.c.l.b16 %v2259
    %v2346 = vunpack.c.h.b16 %v2259
    %v2347 = vunpack.c.l.b16 %v2260
    %v2348 = vunpack.c.h.b16 %v2260
    %v2349 = vunpack.c.l.b16 %v2261
    %v2350 = vunpack.c.h.b16 %v2261
    %v2351 = vunpack.c.l.b16 %v2262
    %v2352 = vunpack.c.h.b16 %v2262
    %v2353 = vpack.c.b16 %v2305, %v2303
    %v2354 = vpack.c.b16 %v2306, %v2304
    %v2355 = vpack.c.b16 %v2309, %v2307
    %v2356 = vpack.c.b16 %v2310, %v2308
    %v2357 = vpack.c.b16 %v2313, %v2311
    %v2358 = vpack.c.b16 %v2314, %v2312
    %v2359 = vpack.c.b16 %v2317, %v2315
    %v2360 = vpack.c.b16 %v2318, %v2316
    %v2361 = vpack.c.b16 %v2321, %v2319
    %v2362 = vpack.c.b16 %v2322, %v2320
    %v2363 = vpack.c.b16 %v2325, %v2323
    %v2364 = vpack.c.b16 %v2326, %v2324
    %v2365 = vpack.c.b16 %v2329, %v2327
    %v2366 = vpack.c.b16 %v2330, %v2328
    %v2367 = vpack.c.b16 %v2333, %v2331
    %v2368 = vpack.c.b16 %v2334, %v2332
    %v2369 = vpack.c.b16 %v2337, %v2335
    %v2370 = vpack.c.b16 %v2338, %v2336
    %v2371 = vpack.c.b16 %v2341, %v2339
    %v2372 = vpack.c.b16 %v2342, %v2340
    %v2373 = vpack.c.b16 %v2345, %v2343
    %v2374 = vpack.c.b16 %v2346, %v2344
    %v2375 = vpack.c.b16 %v2349, %v2347
    %v2376 = vpack.c.b16 %v2350, %v2348
    %v2377 = vpack.c.b16 %v2351, %v2351
    %v2378 = vpack.c.b16 %v2352, %v2352
    %v2404 = vsel %vm528, %v2274, 0
    %v2407 = vsel %vm532, %v2377, 0
    %v2410 = vsel %vm532, %v2378, 0
    %2412 = vmatpush.bf16.msra.mxu0 %v2367
    %2413 = vmatpush.bf16.msra.mxu0 %v2365
    %2414 = vmatpush.bf16.msra.mxu0 %v2363
    %2415 = vmatpush.bf16.msra.mxu0 %v2361
    %2416 = vmatpush.bf16.msra.mxu0 %v2359
    %2417 = vmatpush.bf16.msra.mxu0 %v2357
    %2418 = vmatpush.bf16.msra.mxu0 %v2355
    %2419 = vmatpush.bf16.msra.mxu0 %v2353
    %2420 = vmatmul.bf16.gmra.mxu0 %v2276
    %v2421 = vpop.f32.mrf.mxu0
    %v2422 = vadd.f32 %v2266, %v2421
    %v2423 = vpop.f32.mrf.mxu0
    %2424 = vdwg.mxu0
    %2425 = vmatpush.bf16.msra.mxu0 0
    %2426 = vmatpush.bf16.msra.mxu0 0
    %2427 = vmatpush.bf16.msra.mxu0 0
    %2428 = vmatpush.bf16.msra.mxu0 %v2407
    %2429 = vmatpush.bf16.msra.mxu0 %v2375
    %2430 = vmatpush.bf16.msra.mxu0 %v2373
    %2431 = vmatpush.bf16.msra.mxu0 %v2371
    %2432 = vmatpush.bf16.msra.mxu0 %v2369
    %2433 = vmatmul.bf16.gmra.mxu0 %v2404
    %v2434 = vpop.f32.mrf.mxu0
    %v2435 = vadd.f32 %v2422, %v2434
    %v2436 = vpop.f32.mrf.mxu0
    %2437 = vdwg.mxu0
    %2438 = vmatpush.bf16.msra.mxu0 %v2368
    %2439 = vmatpush.bf16.msra.mxu0 %v2366
    %2440 = vmatpush.bf16.msra.mxu0 %v2364
    %2441 = vmatpush.bf16.msra.mxu0 %v2362
    %2442 = vmatpush.bf16.msra.mxu0 %v2360
    %2443 = vmatpush.bf16.msra.mxu0 %v2358
    %2444 = vmatpush.bf16.msra.mxu0 %v2356
    %2445 = vmatpush.bf16.msra.mxu0 %v2354
    %2446 = vmatmul.bf16.gmra.mxu0 %v2276
    %v2447 = vpop.f32.mrf.mxu0
    %v2448 = vadd.f32 %v2267, %v2447
    %v2449 = vpop.f32.mrf.mxu0
    %2450 = vdwg.mxu0
    %2451 = vmatpush.bf16.msra.mxu0 0
    %2452 = vmatpush.bf16.msra.mxu0 0
    %2453 = vmatpush.bf16.msra.mxu0 0
    %2454 = vmatpush.bf16.msra.mxu0 %v2410
    %2455 = vmatpush.bf16.msra.mxu0 %v2376
    %2456 = vmatpush.bf16.msra.mxu0 %v2374
    %2457 = vmatpush.bf16.msra.mxu0 %v2372
    %2458 = vmatpush.bf16.msra.mxu0 %v2370
    %2459 = vmatmul.bf16.gmra.mxu0 %v2404
    %v2460 = vpop.f32.mrf.mxu0
    %v2461 = vadd.f32 %v2448, %v2460
    %v2462 = vpop.f32.mrf.mxu0
    %2463 = vdwg.mxu0
    %v2464 = vmax.f32 %v2435, 0.0
    %v2465 = vmax.f32 %v2461, 0.0
    %v2466 = vpack.c.bf16 %v2464, %v2464
    %v2467 = vpack.c.bf16 %v2465, %v2465
    %s2468 = scalar_lea.vmem [#allocation8], 2000
    %v2469 = vld [vmem:[%s2468] sm:$0xff]
    %v2470 = vld [vmem:[%s2468 + $0x8] sm:$0xff]
    %v2471 = vld [vmem:[%s2468 + $0x10] sm:$0xff]
    %v2472 = vld [vmem:[%s2468 + $0x18] sm:$0xff]
    %v2473 = vld [vmem:[%s2468 + $0x20] sm:$0xff]
    %v2474 = vld [vmem:[%s2468 + $0x28] sm:$0xff]
    %v2475 = vld [vmem:[%s2468 + $0x30] sm:$0xff]
    %v2476 = vld [vmem:[%s2468 + $0x38] sm:$0xff]
    %v2477 = vld [vmem:[%s2468 + $0x40] sm:$0xff]
    %v2478 = vld [vmem:[%s2468 + $0x48] sm:$0xff]
    %v2479 = vld [vmem:[%s2468 + $0x50] sm:$0xff]
    %v2480 = vld [vmem:[%s2468 + $0x58] sm:$0xff]
    %v2481 = vld [vmem:[%s2468 + $0x60] sm:$0xff]
    %v2482 = vld [vmem:[%s2468 + $0x68] sm:$0xff]
    %v2483 = vld [vmem:[%s2468 + $0x70] sm:$0xff]
    %v2484 = vld [vmem:[%s2468 + $0x78] sm:$0xff]
    %v2485 = vld [vmem:[%s2468 + $0x80] sm:$0xff]
    %v2486 = vld [vmem:[%s2468 + $0x88] sm:$0xff]
    %v2487 = vld [vmem:[%s2468 + $0x90] sm:$0xff]
    %v2488 = vld [vmem:[%s2468 + $0x98] sm:$0xff]
    %v2489 = vld [vmem:[%s2468 + $0xa0] sm:$0xff]
    %v2490 = vld [vmem:[%s2468 + $0xa8] sm:$0xff]
    %v2491 = vld [vmem:[%s2468 + $0xb0] sm:$0xff]
    %v2492 = vld [vmem:[%s2468 + $0xb8] sm:$0xff]
    %v2493 = vld [vmem:[%s2468 + $0xc0] sm:$0xff]
    %s2494 = scalar_lea.vmem [#allocation10], 20
    %v2495 = vld [vmem:[%s2494] sm:$0x3]
    %v2497 = vperm.slane %v2495, 0
    %v2498 = vperm.slane %v2495, 1
    %v2526 = vunpack.c.l.b16 %v2469
    %v2527 = vunpack.c.h.b16 %v2469
    %v2528 = vunpack.c.l.b16 %v2470
    %v2529 = vunpack.c.h.b16 %v2470
    %v2530 = vunpack.c.l.b16 %v2471
    %v2531 = vunpack.c.h.b16 %v2471
    %v2532 = vunpack.c.l.b16 %v2472
    %v2533 = vunpack.c.h.b16 %v2472
    %v2534 = vunpack.c.l.b16 %v2473
    %v2535 = vunpack.c.h.b16 %v2473
    %v2536 = vunpack.c.l.b16 %v2474
    %v2537 = vunpack.c.h.b16 %v2474
    %v2538 = vunpack.c.l.b16 %v2475
    %v2539 = vunpack.c.h.b16 %v2475
    %v2540 = vunpack.c.l.b16 %v2476
    %v2541 = vunpack.c.h.b16 %v2476
    %v2542 = vunpack.c.l.b16 %v2477
    %v2543 = vunpack.c.h.b16 %v2477
    %v2544 = vunpack.c.l.b16 %v2478
    %v2545 = vunpack.c.h.b16 %v2478
    %v2546 = vunpack.c.l.b16 %v2479
    %v2547 = vunpack.c.h.b16 %v2479
    %v2548 = vunpack.c.l.b16 %v2480
    %v2549 = vunpack.c.h.b16 %v2480
    %v2550 = vunpack.c.l.b16 %v2481
    %v2551 = vunpack.c.h.b16 %v2481
    %v2552 = vunpack.c.l.b16 %v2482
    %v2553 = vunpack.c.h.b16 %v2482
    %v2554 = vunpack.c.l.b16 %v2483
    %v2555 = vunpack.c.h.b16 %v2483
    %v2556 = vunpack.c.l.b16 %v2484
    %v2557 = vunpack.c.h.b16 %v2484
    %v2558 = vunpack.c.l.b16 %v2485
    %v2559 = vunpack.c.h.b16 %v2485
    %v2560 = vunpack.c.l.b16 %v2486
    %v2561 = vunpack.c.h.b16 %v2486
    %v2562 = vunpack.c.l.b16 %v2487
    %v2563 = vunpack.c.h.b16 %v2487
    %v2564 = vunpack.c.l.b16 %v2488
    %v2565 = vunpack.c.h.b16 %v2488
    %v2566 = vunpack.c.l.b16 %v2489
    %v2567 = vunpack.c.h.b16 %v2489
    %v2568 = vunpack.c.l.b16 %v2490
    %v2569 = vunpack.c.h.b16 %v2490
    %v2570 = vunpack.c.l.b16 %v2491
    %v2571 = vunpack.c.h.b16 %v2491
    %v2572 = vunpack.c.l.b16 %v2492
    %v2573 = vunpack.c.h.b16 %v2492
    %v2574 = vunpack.c.l.b16 %v2493
    %v2575 = vunpack.c.h.b16 %v2493
    %v2576 = vpack.c.b16 %v2528, %v2526
    %v2577 = vpack.c.b16 %v2529, %v2527
    %v2578 = vpack.c.b16 %v2532, %v2530
    %v2579 = vpack.c.b16 %v2533, %v2531
    %v2580 = vpack.c.b16 %v2536, %v2534
    %v2581 = vpack.c.b16 %v2537, %v2535
    %v2582 = vpack.c.b16 %v2540, %v2538
    %v2583 = vpack.c.b16 %v2541, %v2539
    %v2584 = vpack.c.b16 %v2544, %v2542
    %v2585 = vpack.c.b16 %v2545, %v2543
    %v2586 = vpack.c.b16 %v2548, %v2546
    %v2587 = vpack.c.b16 %v2549, %v2547
    %v2588 = vpack.c.b16 %v2552, %v2550
    %v2589 = vpack.c.b16 %v2553, %v2551
    %v2590 = vpack.c.b16 %v2556, %v2554
    %v2591 = vpack.c.b16 %v2557, %v2555
    %v2592 = vpack.c.b16 %v2560, %v2558
    %v2593 = vpack.c.b16 %v2561, %v2559
    %v2594 = vpack.c.b16 %v2564, %v2562
    %v2595 = vpack.c.b16 %v2565, %v2563
    %v2596 = vpack.c.b16 %v2568, %v2566
    %v2597 = vpack.c.b16 %v2569, %v2567
    %v2598 = vpack.c.b16 %v2572, %v2570
    %v2599 = vpack.c.b16 %v2573, %v2571
    %v2600 = vpack.c.b16 %v2574, %v2574
    %v2601 = vpack.c.b16 %v2575, %v2575
    %v2627 = vsel %vm528, %v2467, 0
    %v2630 = vsel %vm532, %v2600, 0
    %v2633 = vsel %vm532, %v2601, 0
    %2635 = vmatpush.bf16.msra.mxu0 %v2590
    %2636 = vmatpush.bf16.msra.mxu0 %v2588
    %2637 = vmatpush.bf16.msra.mxu0 %v2586
    %2638 = vmatpush.bf16.msra.mxu0 %v2584
    %2639 = vmatpush.bf16.msra.mxu0 %v2582
    %2640 = vmatpush.bf16.msra.mxu0 %v2580
    %2641 = vmatpush.bf16.msra.mxu0 %v2578
    %2642 = vmatpush.bf16.msra.mxu0 %v2576
    %2643 = vmatmul.bf16.gmra.mxu0 %v2466
    %v2644 = vpop.f32.mrf.mxu0
    %v2645 = vadd.f32 %v2497, %v2644
    %v2646 = vpop.f32.mrf.mxu0
    %2647 = vdwg.mxu0
    %2648 = vmatpush.bf16.msra.mxu0 0
    %2649 = vmatpush.bf16.msra.mxu0 0
    %2650 = vmatpush.bf16.msra.mxu0 0
    %2651 = vmatpush.bf16.msra.mxu0 %v2630
    %2652 = vmatpush.bf16.msra.mxu0 %v2598
    %2653 = vmatpush.bf16.msra.mxu0 %v2596
    %2654 = vmatpush.bf16.msra.mxu0 %v2594
    %2655 = vmatpush.bf16.msra.mxu0 %v2592
    %2656 = vmatmul.bf16.gmra.mxu0 %v2627
    %v2657 = vpop.f32.mrf.mxu0
    %v2658 = vadd.f32 %v2645, %v2657
    %v2659 = vpop.f32.mrf.mxu0
    %2660 = vdwg.mxu0
    %2661 = vmatpush.bf16.msra.mxu0 %v2591
    %2662 = vmatpush.bf16.msra.mxu0 %v2589
    %2663 = vmatpush.bf16.msra.mxu0 %v2587
    %2664 = vmatpush.bf16.msra.mxu0 %v2585
    %2665 = vmatpush.bf16.msra.mxu0 %v2583
    %2666 = vmatpush.bf16.msra.mxu0 %v2581
    %2667 = vmatpush.bf16.msra.mxu0 %v2579
    %2668 = vmatpush.bf16.msra.mxu0 %v2577
    %2669 = vmatmul.bf16.gmra.mxu0 %v2466
    %v2670 = vpop.f32.mrf.mxu0
    %v2671 = vadd.f32 %v2498, %v2670
    %v2672 = vpop.f32.mrf.mxu0
    %2673 = vdwg.mxu0
    %2674 = vmatpush.bf16.msra.mxu0 0
    %2675 = vmatpush.bf16.msra.mxu0 0
    %2676 = vmatpush.bf16.msra.mxu0 0
    %2677 = vmatpush.bf16.msra.mxu0 %v2633
    %2678 = vmatpush.bf16.msra.mxu0 %v2599
    %2679 = vmatpush.bf16.msra.mxu0 %v2597
    %2680 = vmatpush.bf16.msra.mxu0 %v2595
    %2681 = vmatpush.bf16.msra.mxu0 %v2593
    %2682 = vmatmul.bf16.gmra.mxu0 %v2627
    %v2683 = vpop.f32.mrf.mxu0
    %v2684 = vadd.f32 %v2671, %v2683
    %v2685 = vpop.f32.mrf.mxu0
    %2686 = vdwg.mxu0
    %v2687 = vmax.f32 %v2658, 0.0
    %v2688 = vmax.f32 %v2684, 0.0
    %v2689 = vld [vmem:[#allocation11] sm:$0x44]
    %v2690 = vunpack.c.l.bf16 %v2689
    %v2691 = vunpack.c.h.bf16 %v2689
    %v2692 = vperm.slane %v2690, 4
    %v2693 = vperm.slane %v2691, 4
    %v2694 = vmul.f32 %v2687, %v2692
    %v2695 = vmul.f32 %v2688, %v2693
    %v2696 = vsel %vm528, %v2695, 0.0
    %v2697 = vadd.f32 %v2694, %v2696
    %2698 = vadd.xlane.f32.xlu0 %v2697
    %v2699 = vpop.xlane.xlu0 %2698
    %v2700 = vld [vmem:[%s6 + $0x4] sm:$0x1]
    %v2701 = vperm.slane %v2700, 0
    %v2702 = vadd.f32 %v2699, %v2701
    %v2703 = vpack.c.bf16 %v368, %v368
    %v2704 = vpack.c.bf16 %v369, %v369
    %s2705 = scalar_lea.vmem [#allocation8], 1000
    %v2706 = vld [vmem:[%s2705] sm:$0xff]
    %v2707 = vld [vmem:[%s2705 + $0x8] sm:$0xff]
    %v2708 = vld [vmem:[%s2705 + $0x10] sm:$0xff]
    %v2709 = vld [vmem:[%s2705 + $0x18] sm:$0xff]
    %v2710 = vld [vmem:[%s2705 + $0x20] sm:$0xff]
    %v2711 = vld [vmem:[%s2705 + $0x28] sm:$0xff]
    %v2712 = vld [vmem:[%s2705 + $0x30] sm:$0xff]
    %v2713 = vld [vmem:[%s2705 + $0x38] sm:$0xff]
    %v2714 = vld [vmem:[%s2705 + $0x40] sm:$0xff]
    %v2715 = vld [vmem:[%s2705 + $0x48] sm:$0xff]
    %v2716 = vld [vmem:[%s2705 + $0x50] sm:$0xff]
    %v2717 = vld [vmem:[%s2705 + $0x58] sm:$0xff]
    %v2718 = vld [vmem:[%s2705 + $0x60] sm:$0xff]
    %v2719 = vld [vmem:[%s2705 + $0x68] sm:$0xff]
    %v2720 = vld [vmem:[%s2705 + $0x70] sm:$0xff]
    %v2721 = vld [vmem:[%s2705 + $0x78] sm:$0xff]
    %v2722 = vld [vmem:[%s2705 + $0x80] sm:$0xff]
    %v2723 = vld [vmem:[%s2705 + $0x88] sm:$0xff]
    %v2724 = vld [vmem:[%s2705 + $0x90] sm:$0xff]
    %v2725 = vld [vmem:[%s2705 + $0x98] sm:$0xff]
    %v2726 = vld [vmem:[%s2705 + $0xa0] sm:$0xff]
    %v2727 = vld [vmem:[%s2705 + $0xa8] sm:$0xff]
    %v2728 = vld [vmem:[%s2705 + $0xb0] sm:$0xff]
    %v2729 = vld [vmem:[%s2705 + $0xb8] sm:$0xff]
    %v2730 = vld [vmem:[%s2705 + $0xc0] sm:$0xff]
    %s2731 = scalar_lea.vmem [#allocation10], 10
    %v2732 = vld [vmem:[%s2731] sm:$0x3]
    %v2734 = vperm.slane %v2732, 0
    %v2735 = vperm.slane %v2732, 1
    %2740 = vrot.lane.b32.xlu0 %v2236, 24
    %v2741 = vpop.permute.xlu0 %2740
    %2742 = vrot.lane.b32.xlu0 %v2703, 24
    %v2743 = vpop.permute.xlu0 %2742
    %2744 = vrot.lane.b32.xlu0 %v2704, 24
    %v2745 = vpop.permute.xlu0 %2744
    %vm2746 = vcmask 195584
    %v2747 = vsel %vm2746, %v2741, %v2743
    %v2748 = vsel %vm2746, %v2743, %v2745
    %v2775 = vunpack.c.l.b16 %v2706
    %v2776 = vunpack.c.h.b16 %v2706
    %v2777 = vunpack.c.l.b16 %v2707
    %v2778 = vunpack.c.h.b16 %v2707
    %v2779 = vunpack.c.l.b16 %v2708
    %v2780 = vunpack.c.h.b16 %v2708
    %v2781 = vunpack.c.l.b16 %v2709
    %v2782 = vunpack.c.h.b16 %v2709
    %v2783 = vunpack.c.l.b16 %v2710
    %v2784 = vunpack.c.h.b16 %v2710
    %v2785 = vunpack.c.l.b16 %v2711
    %v2786 = vunpack.c.h.b16 %v2711
    %v2787 = vunpack.c.l.b16 %v2712
    %v2788 = vunpack.c.h.b16 %v2712
    %v2789 = vunpack.c.l.b16 %v2713
    %v2790 = vunpack.c.h.b16 %v2713
    %v2791 = vunpack.c.l.b16 %v2714
    %v2792 = vunpack.c.h.b16 %v2714
    %v2793 = vunpack.c.l.b16 %v2715
    %v2794 = vunpack.c.h.b16 %v2715
    %v2795 = vunpack.c.l.b16 %v2716
    %v2796 = vunpack.c.h.b16 %v2716
    %v2797 = vunpack.c.l.b16 %v2717
    %v2798 = vunpack.c.h.b16 %v2717
    %v2799 = vunpack.c.l.b16 %v2718
    %v2800 = vunpack.c.h.b16 %v2718
    %v2801 = vunpack.c.l.b16 %v2719
    %v2802 = vunpack.c.h.b16 %v2719
    %v2803 = vunpack.c.l.b16 %v2720
    %v2804 = vunpack.c.h.b16 %v2720
    %v2805 = vunpack.c.l.b16 %v2721
    %v2806 = vunpack.c.h.b16 %v2721
    %v2807 = vunpack.c.l.b16 %v2722
    %v2808 = vunpack.c.h.b16 %v2722
    %v2809 = vunpack.c.l.b16 %v2723
    %v2810 = vunpack.c.h.b16 %v2723
    %v2811 = vunpack.c.l.b16 %v2724
    %v2812 = vunpack.c.h.b16 %v2724
    %v2813 = vunpack.c.l.b16 %v2725
    %v2814 = vunpack.c.h.b16 %v2725
    %v2815 = vunpack.c.l.b16 %v2726
    %v2816 = vunpack.c.h.b16 %v2726
    %v2817 = vunpack.c.l.b16 %v2727
    %v2818 = vunpack.c.h.b16 %v2727
    %v2819 = vunpack.c.l.b16 %v2728
    %v2820 = vunpack.c.h.b16 %v2728
    %v2821 = vunpack.c.l.b16 %v2729
    %v2822 = vunpack.c.h.b16 %v2729
    %v2823 = vunpack.c.l.b16 %v2730
    %v2824 = vunpack.c.h.b16 %v2730
    %v2825 = vpack.c.b16 %v2777, %v2775
    %v2826 = vpack.c.b16 %v2778, %v2776
    %v2827 = vpack.c.b16 %v2781, %v2779
    %v2828 = vpack.c.b16 %v2782, %v2780
    %v2829 = vpack.c.b16 %v2785, %v2783
    %v2830 = vpack.c.b16 %v2786, %v2784
    %v2831 = vpack.c.b16 %v2789, %v2787
    %v2832 = vpack.c.b16 %v2790, %v2788
    %v2833 = vpack.c.b16 %v2793, %v2791
    %v2834 = vpack.c.b16 %v2794, %v2792
    %v2835 = vpack.c.b16 %v2797, %v2795
    %v2836 = vpack.c.b16 %v2798, %v2796
    %v2837 = vpack.c.b16 %v2801, %v2799
    %v2838 = vpack.c.b16 %v2802, %v2800
    %v2839 = vpack.c.b16 %v2805, %v2803
    %v2840 = vpack.c.b16 %v2806, %v2804
    %v2841 = vpack.c.b16 %v2809, %v2807
    %v2842 = vpack.c.b16 %v2810, %v2808
    %v2843 = vpack.c.b16 %v2813, %v2811
    %v2844 = vpack.c.b16 %v2814, %v2812
    %v2845 = vpack.c.b16 %v2817, %v2815
    %v2846 = vpack.c.b16 %v2818, %v2816
    %v2847 = vpack.c.b16 %v2821, %v2819
    %v2848 = vpack.c.b16 %v2822, %v2820
    %v2849 = vpack.c.b16 %v2823, %v2823
    %v2850 = vpack.c.b16 %v2824, %v2824
    %v2876 = vsel %vm528, %v2748, 0
    %v2879 = vsel %vm532, %v2849, 0
    %v2882 = vsel %vm532, %v2850, 0
    %2884 = vmatpush.bf16.msra.mxu0 %v2839
    %2885 = vmatpush.bf16.msra.mxu0 %v2837
    %2886 = vmatpush.bf16.msra.mxu0 %v2835
    %2887 = vmatpush.bf16.msra.mxu0 %v2833
    %2888 = vmatpush.bf16.msra.mxu0 %v2831
    %2889 = vmatpush.bf16.msra.mxu0 %v2829
    %2890 = vmatpush.bf16.msra.mxu0 %v2827
    %2891 = vmatpush.bf16.msra.mxu0 %v2825
    %2892 = vmatmul.bf16.gmra.mxu0 %v2747
    %v2893 = vpop.f32.mrf.mxu0
    %v2894 = vadd.f32 %v2734, %v2893
    %v2895 = vpop.f32.mrf.mxu0
    %2896 = vdwg.mxu0
    %2897 = vmatpush.bf16.msra.mxu0 0
    %2898 = vmatpush.bf16.msra.mxu0 0
    %2899 = vmatpush.bf16.msra.mxu0 0
    %2900 = vmatpush.bf16.msra.mxu0 %v2879
    %2901 = vmatpush.bf16.msra.mxu0 %v2847
    %2902 = vmatpush.bf16.msra.mxu0 %v2845
    %2903 = vmatpush.bf16.msra.mxu0 %v2843
    %2904 = vmatpush.bf16.msra.mxu0 %v2841
    %2905 = vmatmul.bf16.gmra.mxu0 %v2876
    %v2906 = vpop.f32.mrf.mxu0
    %v2907 = vadd.f32 %v2894, %v2906
    %v2908 = vpop.f32.mrf.mxu0
    %2909 = vdwg.mxu0
    %2910 = vmatpush.bf16.msra.mxu0 %v2840
    %2911 = vmatpush.bf16.msra.mxu0 %v2838
    %2912 = vmatpush.bf16.msra.mxu0 %v2836
    %2913 = vmatpush.bf16.msra.mxu0 %v2834
    %2914 = vmatpush.bf16.msra.mxu0 %v2832
    %2915 = vmatpush.bf16.msra.mxu0 %v2830
    %2916 = vmatpush.bf16.msra.mxu0 %v2828
    %2917 = vmatpush.bf16.msra.mxu0 %v2826
    %2918 = vmatmul.bf16.gmra.mxu0 %v2747
    %v2919 = vpop.f32.mrf.mxu0
    %v2920 = vadd.f32 %v2735, %v2919
    %v2921 = vpop.f32.mrf.mxu0
    %2922 = vdwg.mxu0
    %2923 = vmatpush.bf16.msra.mxu0 0
    %2924 = vmatpush.bf16.msra.mxu0 0
    %2925 = vmatpush.bf16.msra.mxu0 0
    %2926 = vmatpush.bf16.msra.mxu0 %v2882
    %2927 = vmatpush.bf16.msra.mxu0 %v2848
    %2928 = vmatpush.bf16.msra.mxu0 %v2846
    %2929 = vmatpush.bf16.msra.mxu0 %v2844
    %2930 = vmatpush.bf16.msra.mxu0 %v2842
    %2931 = vmatmul.bf16.gmra.mxu0 %v2876
    %v2932 = vpop.f32.mrf.mxu0
    %v2933 = vadd.f32 %v2920, %v2932
    %v2934 = vpop.f32.mrf.mxu0
    %2935 = vdwg.mxu0
    %v2936 = vmax.f32 %v2907, 0.0
    %v2937 = vmax.f32 %v2933, 0.0
    %v2938 = vpack.c.bf16 %v2936, %v2936
    %v2939 = vpack.c.bf16 %v2937, %v2937
    %s2940 = scalar_lea.vmem [#allocation8], 2200
    %v2941 = vld [vmem:[%s2940] sm:$0xff]
    %v2942 = vld [vmem:[%s2940 + $0x8] sm:$0xff]
    %v2943 = vld [vmem:[%s2940 + $0x10] sm:$0xff]
    %v2944 = vld [vmem:[%s2940 + $0x18] sm:$0xff]
    %v2945 = vld [vmem:[%s2940 + $0x20] sm:$0xff]
    %v2946 = vld [vmem:[%s2940 + $0x28] sm:$0xff]
    %v2947 = vld [vmem:[%s2940 + $0x30] sm:$0xff]
    %v2948 = vld [vmem:[%s2940 + $0x38] sm:$0xff]
    %v2949 = vld [vmem:[%s2940 + $0x40] sm:$0xff]
    %v2950 = vld [vmem:[%s2940 + $0x48] sm:$0xff]
    %v2951 = vld [vmem:[%s2940 + $0x50] sm:$0xff]
    %v2952 = vld [vmem:[%s2940 + $0x58] sm:$0xff]
    %v2953 = vld [vmem:[%s2940 + $0x60] sm:$0xff]
    %v2954 = vld [vmem:[%s2940 + $0x68] sm:$0xff]
    %v2955 = vld [vmem:[%s2940 + $0x70] sm:$0xff]
    %v2956 = vld [vmem:[%s2940 + $0x78] sm:$0xff]
    %v2957 = vld [vmem:[%s2940 + $0x80] sm:$0xff]
    %v2958 = vld [vmem:[%s2940 + $0x88] sm:$0xff]
    %v2959 = vld [vmem:[%s2940 + $0x90] sm:$0xff]
    %v2960 = vld [vmem:[%s2940 + $0x98] sm:$0xff]
    %v2961 = vld [vmem:[%s2940 + $0xa0] sm:$0xff]
    %v2962 = vld [vmem:[%s2940 + $0xa8] sm:$0xff]
    %v2963 = vld [vmem:[%s2940 + $0xb0] sm:$0xff]
    %v2964 = vld [vmem:[%s2940 + $0xb8] sm:$0xff]
    %v2965 = vld [vmem:[%s2940 + $0xc0] sm:$0xff]
    %s2966 = scalar_lea.vmem [#allocation10], 22
    %v2967 = vld [vmem:[%s2966] sm:$0x3]
    %v2969 = vperm.slane %v2967, 0
    %v2970 = vperm.slane %v2967, 1
    %v2998 = vunpack.c.l.b16 %v2941
    %v2999 = vunpack.c.h.b16 %v2941
    %v3000 = vunpack.c.l.b16 %v2942
    %v3001 = vunpack.c.h.b16 %v2942
    %v3002 = vunpack.c.l.b16 %v2943
    %v3003 = vunpack.c.h.b16 %v2943
    %v3004 = vunpack.c.l.b16 %v2944
    %v3005 = vunpack.c.h.b16 %v2944
    %v3006 = vunpack.c.l.b16 %v2945
    %v3007 = vunpack.c.h.b16 %v2945
    %v3008 = vunpack.c.l.b16 %v2946
    %v3009 = vunpack.c.h.b16 %v2946
    %v3010 = vunpack.c.l.b16 %v2947
    %v3011 = vunpack.c.h.b16 %v2947
    %v3012 = vunpack.c.l.b16 %v2948
    %v3013 = vunpack.c.h.b16 %v2948
    %v3014 = vunpack.c.l.b16 %v2949
    %v3015 = vunpack.c.h.b16 %v2949
    %v3016 = vunpack.c.l.b16 %v2950
    %v3017 = vunpack.c.h.b16 %v2950
    %v3018 = vunpack.c.l.b16 %v2951
    %v3019 = vunpack.c.h.b16 %v2951
    %v3020 = vunpack.c.l.b16 %v2952
    %v3021 = vunpack.c.h.b16 %v2952
    %v3022 = vunpack.c.l.b16 %v2953
    %v3023 = vunpack.c.h.b16 %v2953
    %v3024 = vunpack.c.l.b16 %v2954
    %v3025 = vunpack.c.h.b16 %v2954
    %v3026 = vunpack.c.l.b16 %v2955
    %v3027 = vunpack.c.h.b16 %v2955
    %v3028 = vunpack.c.l.b16 %v2956
    %v3029 = vunpack.c.h.b16 %v2956
    %v3030 = vunpack.c.l.b16 %v2957
    %v3031 = vunpack.c.h.b16 %v2957
    %v3032 = vunpack.c.l.b16 %v2958
    %v3033 = vunpack.c.h.b16 %v2958
    %v3034 = vunpack.c.l.b16 %v2959
    %v3035 = vunpack.c.h.b16 %v2959
    %v3036 = vunpack.c.l.b16 %v2960
    %v3037 = vunpack.c.h.b16 %v2960
    %v3038 = vunpack.c.l.b16 %v2961
    %v3039 = vunpack.c.h.b16 %v2961
    %v3040 = vunpack.c.l.b16 %v2962
    %v3041 = vunpack.c.h.b16 %v2962
    %v3042 = vunpack.c.l.b16 %v2963
    %v3043 = vunpack.c.h.b16 %v2963
    %v3044 = vunpack.c.l.b16 %v2964
    %v3045 = vunpack.c.h.b16 %v2964
    %v3046 = vunpack.c.l.b16 %v2965
    %v3047 = vunpack.c.h.b16 %v2965
    %v3048 = vpack.c.b16 %v3000, %v2998
    %v3049 = vpack.c.b16 %v3001, %v2999
    %v3050 = vpack.c.b16 %v3004, %v3002
    %v3051 = vpack.c.b16 %v3005, %v3003
    %v3052 = vpack.c.b16 %v3008, %v3006
    %v3053 = vpack.c.b16 %v3009, %v3007
    %v3054 = vpack.c.b16 %v3012, %v3010
    %v3055 = vpack.c.b16 %v3013, %v3011
    %v3056 = vpack.c.b16 %v3016, %v3014
    %v3057 = vpack.c.b16 %v3017, %v3015
    %v3058 = vpack.c.b16 %v3020, %v3018
    %v3059 = vpack.c.b16 %v3021, %v3019
    %v3060 = vpack.c.b16 %v3024, %v3022
    %v3061 = vpack.c.b16 %v3025, %v3023
    %v3062 = vpack.c.b16 %v3028, %v3026
    %v3063 = vpack.c.b16 %v3029, %v3027
    %v3064 = vpack.c.b16 %v3032, %v3030
    %v3065 = vpack.c.b16 %v3033, %v3031
    %v3066 = vpack.c.b16 %v3036, %v3034
    %v3067 = vpack.c.b16 %v3037, %v3035
    %v3068 = vpack.c.b16 %v3040, %v3038
    %v3069 = vpack.c.b16 %v3041, %v3039
    %v3070 = vpack.c.b16 %v3044, %v3042
    %v3071 = vpack.c.b16 %v3045, %v3043
    %v3072 = vpack.c.b16 %v3046, %v3046
    %v3073 = vpack.c.b16 %v3047, %v3047
    %v3099 = vsel %vm528, %v2939, 0
    %v3102 = vsel %vm532, %v3072, 0
    %v3105 = vsel %vm532, %v3073, 0
    %3107 = vmatpush.bf16.msra.mxu0 %v3062
    %3108 = vmatpush.bf16.msra.mxu0 %v3060
    %3109 = vmatpush.bf16.msra.mxu0 %v3058
    %3110 = vmatpush.bf16.msra.mxu0 %v3056
    %3111 = vmatpush.bf16.msra.mxu0 %v3054
    %3112 = vmatpush.bf16.msra.mxu0 %v3052
    %3113 = vmatpush.bf16.msra.mxu0 %v3050
    %3114 = vmatpush.bf16.msra.mxu0 %v3048
    %3115 = vmatmul.bf16.gmra.mxu0 %v2938
    %v3116 = vpop.f32.mrf.mxu0
    %v3117 = vadd.f32 %v2969, %v3116
    %v3118 = vpop.f32.mrf.mxu0
    %3119 = vdwg.mxu0
    %3120 = vmatpush.bf16.msra.mxu0 0
    %3121 = vmatpush.bf16.msra.mxu0 0
    %3122 = vmatpush.bf16.msra.mxu0 0
    %3123 = vmatpush.bf16.msra.mxu0 %v3102
    %3124 = vmatpush.bf16.msra.mxu0 %v3070
    %3125 = vmatpush.bf16.msra.mxu0 %v3068
    %3126 = vmatpush.bf16.msra.mxu0 %v3066
    %3127 = vmatpush.bf16.msra.mxu0 %v3064
    %3128 = vmatmul.bf16.gmra.mxu0 %v3099
    %v3129 = vpop.f32.mrf.mxu0
    %v3130 = vadd.f32 %v3117, %v3129
    %v3131 = vpop.f32.mrf.mxu0
    %3132 = vdwg.mxu0
    %3133 = vmatpush.bf16.msra.mxu0 %v3063
    %3134 = vmatpush.bf16.msra.mxu0 %v3061
    %3135 = vmatpush.bf16.msra.mxu0 %v3059
    %3136 = vmatpush.bf16.msra.mxu0 %v3057
    %3137 = vmatpush.bf16.msra.mxu0 %v3055
    %3138 = vmatpush.bf16.msra.mxu0 %v3053
    %3139 = vmatpush.bf16.msra.mxu0 %v3051
    %3140 = vmatpush.bf16.msra.mxu0 %v3049
    %3141 = vmatmul.bf16.gmra.mxu0 %v2938
    %v3142 = vpop.f32.mrf.mxu0
    %v3143 = vadd.f32 %v2970, %v3142
    %v3144 = vpop.f32.mrf.mxu0
    %3145 = vdwg.mxu0
    %3146 = vmatpush.bf16.msra.mxu0 0
    %3147 = vmatpush.bf16.msra.mxu0 0
    %3148 = vmatpush.bf16.msra.mxu0 0
    %3149 = vmatpush.bf16.msra.mxu0 %v3105
    %3150 = vmatpush.bf16.msra.mxu0 %v3071
    %3151 = vmatpush.bf16.msra.mxu0 %v3069
    %3152 = vmatpush.bf16.msra.mxu0 %v3067
    %3153 = vmatpush.bf16.msra.mxu0 %v3065
    %3154 = vmatmul.bf16.gmra.mxu0 %v3099
    %v3155 = vpop.f32.mrf.mxu0
    %v3156 = vadd.f32 %v3143, %v3155
    %v3157 = vpop.f32.mrf.mxu0
    %3158 = vdwg.mxu0
    %v3159 = vmax.f32 %v3130, 0.0
    %v3160 = vmax.f32 %v3156, 0.0
    %v3161 = vperm.slane %v2690, 5
    %v3162 = vperm.slane %v2691, 5
    %v3163 = vmul.f32 %v3159, %v3161
    %v3164 = vmul.f32 %v3160, %v3162
    %v3165 = vsel %vm528, %v3164, 0.0
    %v3166 = vadd.f32 %v3163, %v3165
    %3167 = vadd.xlane.f32.xlu0 %v3166
    %v3168 = vpop.xlane.xlu0 %3167
    %v3169 = vld [vmem:[%s6 + $0x5] sm:$0x1]
    %v3170 = vperm.slane %v3169, 0
    %v3171 = vadd.f32 %v3168, %v3170
    %3173 = vrot.lane.b32.xlu0 %v1299, 1
    %v3174 = vpop.permute.xlu0 %3173
    %3177 = vrot.lane.b32.xlu0 %v1766, 2
    %v3178 = vpop.permute.xlu0 %3177
    %3181 = vrot.lane.b32.xlu0 %v2235, 3
    %v3182 = vpop.permute.xlu0 %3181
    %3185 = vrot.lane.b32.xlu0 %v2702, 4
    %v3186 = vpop.permute.xlu0 %3185
    %3189 = vrot.lane.b32.xlu0 %v3171, 5
    %v3190 = vpop.permute.xlu0 %3189
    %vm3192 = vcmask 7168
    %v3193 = vsel %vm3192, %v829, %v3174
    %vm3194 = vcmask 15360
    %v3195 = vsel %vm3194, %v3193, %v3178
    %vm3196 = vcmask 23552
    %v3197 = vsel %vm3196, %v3195, %v3182
    %vm3198 = vcmask 31744
    %v3199 = vsel %vm3198, %v3197, %v3186
    %vm3200 = vcmask 39936
    %v3201 = vsel %vm3200, %v3199, %v3190
    %vm3202 = vcmask 48128
    %3203 = vst.msk [vmem:[#allocation13] sm:$0xff] %vm3202, %v3201
    // Predicated region
    $region54: #{tpu_custom_call.1} parent=1 // pred_check
      _
    $region55: #{tpu_custom_call.1} parent=1 // pred_check_branch
      %3205 = sbr.rel (0) target = $region57
    $region56: #{tpu_custom_call.1} parent=1 // pred_region
      %3207 = vsyncadd [#allocation4], 0
      %s3209 = sshll.u32 [#allocation13], 4
      %s3210 = int_to_ptr.vmem [resolvable:$true] %s3209
      %s3211 = sshll.u32 %s7, 4
      %s3212 = int_to_ptr.hbm [resolvable:$true] %s3211
      %3214 = dma.vmem_to_hbm [thread:$0]  %s3210, 128, %s3212, [#allocation4]
    $region57: #{tpu_custom_call.1} parent=1 // pred_fallthru
      _
    // Predicated region
    $region58: #{tpu_custom_call.1} parent=1 // pred_check
      _
    $region59: #{tpu_custom_call.1} parent=1 // pred_check_branch
      %3216 = sbr.rel (0) target = $region61
    $region60: #{tpu_custom_call.1} parent=1 // pred_region
      %3218 = dma.done [#allocation4], 128
    $region61: #{tpu_custom_call.1} parent=1 // pred_fallthru
      _
    %3219 = vsyncpa [#allocation3], 1
    %3220 = vsyncpa [#allocation6], 1
    %3221 = vsyncpa [#allocation9], 1
    %3222 = vsyncpa [#allocation12], 1
    %3223 = vsyncpa [#allocation4], 1

</llo_original>
